<compile_context>
chip_gen: v7x
topology: tpu7x:2x2x1
jax: 0.10.0
libtpu: 0.0.40
codegen_flags: <defaults>
</compile_context>

<pallas_src>
import functools

import jax
import jax.numpy as jnp
from jax import lax
from jax.experimental import pallas as pl
from jax.experimental.pallas import tpu as pltpu

NODE_NUM = 80
SELU_SCALE = 1.0507009873554804934193349852946
SELU_ALPHA = 1.6732632423543772848170429916717
BN_EPS = 1e-5


def _selu(x):
    return SELU_SCALE * jnp.where(x > 0, x, SELU_ALPHA * (jnp.exp(x) - 1.0))


# ---------------------------------------------------------------------------
# Fused kernel: per-view GraphConvolution -> folded BatchNorm1d(Node_num) ->
# SELU -> AvgPool2d(2,2) -> folded BatchNorm1d(f1) -> fc1 -> SELU ->
# concat(mw) -> fc2 -> (sigmoid).  Single program, everything in VMEM.
#
#   xT_ref     : (2, B, D, N)  bf16   per-view features, transposed (nodes on lanes)
#   adjT_ref   : (2, B, N, N)  bf16   per-view diagonal adj blocks, transposed,
#                                     node-BN scale folded into the output-node axis
#   wT_ref     : (2, B, H, D)  bf16   gc weights, transposed, pre-broadcast over B
#   shiftT_ref : (2, H, N)     f32    folded gc bias + node-BN shift
#   pooln_ref  : (N, N//2)     f32    node-pair summing matrix (lane-dim pooling)
#   ssel_ref   : (H//2, B, B*H)f32    hidden-pair row-sum selectors
#   wfold_ref  : (2*(H//2), N//2, 128) f32  fc1 weights with flat-BN scale and the
#                                     0.25 AvgPool factor folded in, regrouped per
#                                     (view, hidden-pair)
#   b1/w2a/w2b/b2 : fc1 bias (flat-BN folded) and fc2 split weights/bias
#   mw_ref     : (B, 1)        f32
#   o_ref      : (B, out)      f32
# ---------------------------------------------------------------------------
def fused_gcn_kernel(xT_ref, adjT_ref, wT_ref, shiftT_ref, pooln_ref, ssel_ref,
                     wfold_ref, b1_ref, w2a_ref, w2b_ref, b2_ref, mw_ref, o_ref,
                     *, apply_sigmoid):
    B = xT_ref.shape[1]
    H = wT_ref.shape[2]
    N = adjT_ref.shape[3]
    Q = H // 2

    acc = jnp.zeros((B, w2a_ref.shape[0]), jnp.float32)     # fc1 pre-activation (bias added later)

    for v in range(2):                                        # unrolled over the two graph views
        # support^T = Wv^T @ Xv^T, batched over B (bf16 MXU inputs, f32 accumulate)
        supportT = jnp.einsum("bhd,bdn->bhn", wT_ref[v], xT_ref[v],
                              preferred_element_type=jnp.float32)          # (B, H, N)
        # (A_v @ support)^T; node-BN scale is already folded into adjT
        hT = jnp.einsum("bhm,bmn->bhn", supportT.astype(jnp.bfloat16), adjT_ref[v],
                        preferred_element_type=jnp.float32)                # (B, H, N)
        yT = _selu(hT + shiftT_ref[v][None])                               # (B, H, N)  f32

        y2d = yT.reshape(B * H, N)                                         # leading-dim merge only
        # sum adjacent node pairs along the lane dim via a small matmul
        p2 = jnp.dot(y2d, pooln_ref[...], preferred_element_type=jnp.float32)   # (B*H, N//2)

        for q in range(Q):
            # sum the two rows of each hidden pair per batch (selector matmul),
            # then contract node pairs against the pool/BN-folded fc1 slab.
            slab = jnp.dot(ssel_ref[q], p2, preferred_element_type=jnp.float32)      # (B, N//2)
            acc = acc + jnp.dot(slab, wfold_ref[v * Q + q],
                                preferred_element_type=jnp.float32)                   # (B, 128)

    l2 = _selu(acc + b1_ref[...])                                           # fc1 (+flat-BN) -> SELU
    # dropout: eval mode -> identity; fc2(concat([l2, mw])) split into two terms
    logits = (jnp.dot(l2, w2a_ref[...], preferred_element_type=jnp.float32)
              + mw_ref[...] * w2b_ref[...] + b2_ref[...])                   # (B, out)
    if apply_sigmoid:
        logits = 1.0 / (1.0 + jnp.exp(-logits))                             # exact sigmoid
    o_ref[...] = logits


# ---------------------------------------------------------------------------
# Parameter init (deterministic, synthetic)
# ---------------------------------------------------------------------------
def init_params(key, input_dim, hidden_dim, output_dim):
    f1 = NODE_NUM * hidden_dim // 2
    ks = jax.random.split(key, 16)
    p = {}
    p["gc1_w"] = jax.random.normal(ks[0], (input_dim, hidden_dim), jnp.float32) * 0.1
    p["gc1_b"] = jax.random.normal(ks[1], (hidden_dim,), jnp.float32) * 0.1
    p["gc2_w"] = jax.random.normal(ks[2], (input_dim, hidden_dim), jnp.float32) * 0.1
    p["gc2_b"] = jax.random.normal(ks[3], (hidden_dim,), jnp.float32) * 0.1
    # batch_gcn = BatchNorm1d(Node_num), eval-mode running stats
    p["bn_gcn_gamma"] = 1.0 + 0.1 * jax.random.normal(ks[4], (NODE_NUM,), jnp.float32)
    p["bn_gcn_beta"] = 0.1 * jax.random.normal(ks[5], (NODE_NUM,), jnp.float32)
    p["bn_gcn_mean"] = 0.1 * jax.random.normal(ks[6], (NODE_NUM,), jnp.float32)
    p["bn_gcn_var"] = 0.5 + jnp.abs(jax.random.normal(ks[7], (NODE_NUM,), jnp.float32))
    # batch = BatchNorm1d(Node_num * hidden // 2), eval-mode running stats
    p["bn_fc_gamma"] = 1.0 + 0.1 * jax.random.normal(ks[8], (f1,), jnp.float32)
    p["bn_fc_beta"] = 0.1 * jax.random.normal(ks[9], (f1,), jnp.float32)
    p["bn_fc_mean"] = 0.1 * jax.random.normal(ks[10], (f1,), jnp.float32)
    p["bn_fc_var"] = 0.5 + jnp.abs(jax.random.normal(ks[11], (f1,), jnp.float32))
    # fc1: Linear(f1 -> 128); fc2: Linear(128 + 1 -> output_dim)
    p["fc1_w"] = jax.random.normal(ks[12], (f1, 128), jnp.float32) * 0.05
    p["fc1_b"] = jax.random.normal(ks[13], (128,), jnp.float32) * 0.1
    p["fc2_w"] = jax.random.normal(ks[14], (128 + 1, output_dim), jnp.float32) * 0.1
    p["fc2_b"] = jax.random.normal(ks[15], (output_dim,), jnp.float32) * 0.1
    return p


# ---------------------------------------------------------------------------
# Forward wrapper: fold all eval-mode BatchNorms, the gc biases, and the
# AvgPool2d(2,2) into constant operands (pure XLA, done once per jit), then
# call the single fused Pallas kernel.
# ---------------------------------------------------------------------------
@functools.partial(jax.jit, static_argnames=("task",))
def gcn_mv_gcn_forward(params, feature, adj, mw, task="sex_predict"):
    B = feature.shape[0]
    D, H = params["gc1_w"].shape
    N = NODE_NUM
    Q = H // 2
    out_dim = params["fc2_w"].shape[1]

    # ---- fold per-node BatchNorm (eval) + gc bias ----
    scale_n = params["bn_gcn_gamma"] * lax.rsqrt(params["bn_gcn_var"] + BN_EPS)   # (N,)
    shift_n = params["bn_gcn_beta"] - params["bn_gcn_mean"] * scale_n             # (N,)
    gc_b = jnp.stack([params["gc1_b"], params["gc2_b"]], axis=0)                  # (2, H)
    shiftT = gc_b[:, :, None] * scale_n[None, None, :] + shift_n[None, None, :]   # (2, H, N)

    # ---- transposed per-view inputs (bf16 for the MXU) ----
    x_views = jnp.stack([feature[:, :N, :], feature[:, N:, :]], axis=0)           # (2, B, N, D)
    xT = x_views.transpose(0, 1, 3, 2).astype(jnp.bfloat16)                       # (2, B, D, N)
    adj_diag = jnp.stack([adj[:, :N, :N], adj[:, N:, N:]], axis=0)                # (2, B, N, N)
    adjT = (adj_diag.transpose(0, 1, 3, 2)
            * scale_n[None, None, None, :]).astype(jnp.bfloat16)                  # (2, B, N, N)
    w_views = jnp.stack([params["gc1_w"], params["gc2_w"]], axis=0)               # (2, D, H)
    wT = jnp.broadcast_to(w_views.transpose(0, 2, 1)[:, None],
                          (2, B, H, D)).astype(jnp.bfloat16)                      # (2, B, H, D)

    # ---- fold flat BatchNorm (eval) + AvgPool2d(2,2) into fc1 ----
    scale_f = params["bn_fc_gamma"] * lax.rsqrt(params["bn_fc_var"] + BN_EPS)     # (f1,)
    shift_f = params["bn_fc_beta"] - params["bn_fc_mean"] * scale_f               # (f1,)
    w1_eff = scale_f[:, None] * params["fc1_w"]                                   # (f1, 128)
    b1_eff = (params["fc1_b"] + shift_f @ params["fc1_w"]).reshape(1, -1)         # (1, 128)
    # fc1 rows are ordered j = view*(N//2)*(H//2) + node_pair*(H//2) + hidden_pair;
    # regroup to (view, hidden_pair, node_pair, 128) and fold the 0.25 pool factor.
    wfold = (0.25 * w1_eff).reshape(2, N // 2, Q, 128) \
                           .transpose(0, 2, 1, 3).reshape(2 * Q, N // 2, 128)     # (2Q, N//2, 128)

    # node-pair summing matrix (pooling over the lane/node dim as a matmul)
    n_idx = jnp.arange(N)[:, None]
    p_idx = jnp.arange(N // 2)[None, :]
    pooln = (n_idx // 2 == p_idx).astype(jnp.float32)                             # (N, N//2)
    # hidden-pair selectors: ssel[q] sums rows (b*H+2q, b*H+2q+1) of a (B*H, *) slab
    q_idx = jnp.arange(Q)[:, None, None]
    b_idx = jnp.arange(B)[None, :, None]
    r_idx = jnp.arange(B * H)[None, None, :]
    ssel = ((r_idx == b_idx * H + 2 * q_idx) |
            (r_idx == b_idx * H + 2 * q_idx + 1)).astype(jnp.float32)             # (Q, B, B*H)

    w2a = params["fc2_w"][:128, :]                                                # (128, out)
    w2b = params["fc2_w"][128:, :]                                                # (1, out)
    b2 = params["fc2_b"].reshape(1, -1)                                           # (1, out)

    vmem = pltpu.MemorySpace.VMEM
    pred = pl.pallas_call(
        functools.partial(fused_gcn_kernel, apply_sigmoid=(task == "sex_predict")),
        out_shape=jax.ShapeDtypeStruct((B, out_dim), jnp.float32),
        in_specs=[pl.BlockSpec(memory_space=vmem) for _ in range(12)],
        out_specs=pl.BlockSpec(memory_space=vmem),
    )(xT, adjT, wT, shiftT, pooln, ssel, wfold, b1_eff, w2a, w2b, b2, mw)

    # Matches reference `pred.reshape(pred.shape[0])` (requires output_dim == 1).
    return pred.reshape(B)


if __name__ == "__main__":
    key = jax.random.PRNGKey(0)
    B, D, H, OUT = 4, 16, 8, 1          # batch, input_dim, hidden_dim, output_dim
    k_param, k_feat, k_adj, k_mw = jax.random.split(key, 4)

    params = init_params(k_param, D, H, OUT)
    feature = jax.random.normal(k_feat, (B, 2 * NODE_NUM, D), jnp.float32)
    adj_raw = jax.random.uniform(k_adj, (B, 2 * NODE_NUM, 2 * NODE_NUM), jnp.float32)
    adj = adj_raw / adj_raw.sum(axis=-1, keepdims=True)     # row-normalized adjacency-like
    mw = jax.random.normal(k_mw, (B, 1), jnp.float32)

    pred = gcn_mv_gcn_forward(params, feature, adj, mw, task="sex_predict")
    jax.block_until_ready(pred)
    assert pred.shape == (B,)
    assert bool(jnp.all(jnp.isfinite(pred)))
    print("KERNEL_OK")
</pallas_src>

<mosaic_0001>
module attributes {stable_mosaic.version = 11 : i64} {
  func.func @fused_gcn_kernel(%arg0: memref<2x4x16x80xbf16, #tpu.memory_space<vmem>>, %arg1: memref<2x4x80x80xbf16, #tpu.memory_space<vmem>>, %arg2: memref<2x4x8x16xbf16, #tpu.memory_space<vmem>>, %arg3: memref<2x8x80xf32, #tpu.memory_space<vmem>>, %arg4: memref<80x40xf32, #tpu.memory_space<vmem>>, %arg5: memref<4x4x32xf32, #tpu.memory_space<vmem>>, %arg6: memref<8x40x128xf32, #tpu.memory_space<vmem>>, %arg7: memref<1x128xf32, #tpu.memory_space<vmem>>, %arg8: memref<128x1xf32, #tpu.memory_space<vmem>>, %arg9: memref<1x1xf32, #tpu.memory_space<vmem>>, %arg10: memref<1x1xf32, #tpu.memory_space<vmem>>, %arg11: memref<4x1xf32, #tpu.memory_space<vmem>>, %arg12: memref<4x1xf32, #tpu.memory_space<vmem>>) attributes {dimension_semantics = [], scalar_prefetch = 0 : i64, scratch_operands = 0 : i64, tpu.core_type = #tpu.core_type<tc>} {
    %cst = arith.constant 0.000000e+00 : f32
    %0 = vector.broadcast %cst : f32 to vector<4x128xf32>
    %c0 = arith.constant 0 : index
    %c0_0 = arith.constant 0 : index
    %c0_1 = arith.constant 0 : index
    %c0_2 = arith.constant 0 : index
    %1 = vector.load %arg2[%c0, %c0_0, %c0_1, %c0_2] : memref<2x4x8x16xbf16, #tpu.memory_space<vmem>>, vector<1x4x8x16xbf16>
    %2 = vector.shape_cast %1 : vector<1x4x8x16xbf16> to vector<4x8x16xbf16>
    %c0_3 = arith.constant 0 : index
    %c0_4 = arith.constant 0 : index
    %c0_5 = arith.constant 0 : index
    %c0_6 = arith.constant 0 : index
    %3 = vector.load %arg0[%c0_3, %c0_4, %c0_5, %c0_6] : memref<2x4x16x80xbf16, #tpu.memory_space<vmem>>, vector<1x4x16x80xbf16>
    %4 = vector.shape_cast %3 : vector<1x4x16x80xbf16> to vector<4x16x80xbf16>
    "tpu.trace_start"() <{level = 10 : i32, message = "bhd,bdn->bhn"}> : () -> ()
    %cst_7 = arith.constant dense<0.000000e+00> : vector<4x8x80xf32>
    %5 = tpu.matmul %2, %4, %cst_7 {dimension_numbers = #tpu.dot_dimension_numbers<[2], [1], [1], [2], [0, 0, 0, 1, 1, 2], [0], [0]>} : vector<4x8x16xbf16>, vector<4x16x80xbf16>, vector<4x8x80xf32> -> vector<4x8x80xf32>
    "tpu.trace_stop"() : () -> ()
    %6 = arith.truncf %5 : vector<4x8x80xf32> to vector<4x8x80xbf16>
    %c0_8 = arith.constant 0 : index
    %c0_9 = arith.constant 0 : index
    %c0_10 = arith.constant 0 : index
    %c0_11 = arith.constant 0 : index
    %7 = vector.load %arg1[%c0_8, %c0_9, %c0_10, %c0_11] : memref<2x4x80x80xbf16, #tpu.memory_space<vmem>>, vector<1x4x80x80xbf16>
    %8 = vector.shape_cast %7 : vector<1x4x80x80xbf16> to vector<4x80x80xbf16>
    "tpu.trace_start"() <{level = 10 : i32, message = "bhm,bmn->bhn"}> : () -> ()
    %cst_12 = arith.constant dense<0.000000e+00> : vector<4x8x80xf32>
    %9 = tpu.matmul %6, %8, %cst_12 {dimension_numbers = #tpu.dot_dimension_numbers<[2], [1], [1], [2], [0, 0, 0, 1, 1, 2], [0], [0]>} : vector<4x8x80xbf16>, vector<4x80x80xbf16>, vector<4x8x80xf32> -> vector<4x8x80xf32>
    "tpu.trace_stop"() : () -> ()
    %c0_13 = arith.constant 0 : index
    %c0_14 = arith.constant 0 : index
    %c0_15 = arith.constant 0 : index
    %10 = vector.load %arg3[%c0_13, %c0_14, %c0_15] : memref<2x8x80xf32, #tpu.memory_space<vmem>>, vector<1x8x80xf32>
    %11 = vector.shape_cast %10 : vector<1x8x80xf32> to vector<8x80xf32>
    %12 = vector.shape_cast %11 : vector<8x80xf32> to vector<1x8x80xf32>
    %13 = vector.broadcast %12 : vector<1x8x80xf32> to vector<4x8x80xf32>
    %14 = arith.addf %9, %13 : vector<4x8x80xf32>
    %cst_16 = arith.constant 0.000000e+00 : f32
    %15 = vector.broadcast %cst_16 : f32 to vector<4x8x80xf32>
    %16 = arith.cmpf ogt, %14, %15 : vector<4x8x80xf32>
    %17 = math.exp %14 : vector<4x8x80xf32>
    %cst_17 = arith.constant 1.000000e+00 : f32
    %18 = vector.broadcast %cst_17 : f32 to vector<4x8x80xf32>
    %19 = arith.subf %17, %18 : vector<4x8x80xf32>
    %cst_18 = arith.constant 1.67326319 : f32
    %20 = vector.broadcast %cst_18 : f32 to vector<4x8x80xf32>
    %21 = arith.mulf %20, %19 : vector<4x8x80xf32>
    %22 = arith.select %16, %14, %21 : vector<4x8x80xi1>, vector<4x8x80xf32>
    %cst_19 = arith.constant 1.05070102 : f32
    %23 = vector.broadcast %cst_19 : f32 to vector<4x8x80xf32>
    %24 = arith.mulf %23, %22 : vector<4x8x80xf32>
    %25 = vector.shape_cast %24 : vector<4x8x80xf32> to vector<32x80xf32>
    %c0_20 = arith.constant 0 : index
    %c0_21 = arith.constant 0 : index
    %26 = vector.load %arg4[%c0_20, %c0_21] : memref<80x40xf32, #tpu.memory_space<vmem>>, vector<80x40xf32>
    %cst_22 = arith.constant dense<0.000000e+00> : vector<32x40xf32>
    %27 = tpu.matmul %25, %26, %cst_22 {dimension_numbers = #tpu.dot_dimension_numbers<[1], [0], [0], [1], [0, 0, 1, 1], [], []>} : vector<32x80xf32>, vector<80x40xf32>, vector<32x40xf32> -> vector<32x40xf32>
    %c0_23 = arith.constant 0 : index
    %c0_24 = arith.constant 0 : index
    %c0_25 = arith.constant 0 : index
    %28 = vector.load %arg5[%c0_23, %c0_24, %c0_25] : memref<4x4x32xf32, #tpu.memory_space<vmem>>, vector<1x4x32xf32>
    %29 = vector.shape_cast %28 : vector<1x4x32xf32> to vector<4x32xf32>
    %cst_26 = arith.constant dense<0.000000e+00> : vector<4x40xf32>
    %30 = tpu.matmul %29, %27, %cst_26 {dimension_numbers = #tpu.dot_dimension_numbers<[1], [0], [0], [1], [0, 0, 1, 1], [], []>} : vector<4x32xf32>, vector<32x40xf32>, vector<4x40xf32> -> vector<4x40xf32>
    %c0_27 = arith.constant 0 : index
    %c0_28 = arith.constant 0 : index
    %c0_29 = arith.constant 0 : index
    %31 = vector.load %arg6[%c0_27, %c0_28, %c0_29] : memref<8x40x128xf32, #tpu.memory_space<vmem>>, vector<1x40x128xf32>
    %32 = vector.shape_cast %31 : vector<1x40x128xf32> to vector<40x128xf32>
    %cst_30 = arith.constant dense<0.000000e+00> : vector<4x128xf32>
    %33 = tpu.matmul %30, %32, %cst_30 {dimension_numbers = #tpu.dot_dimension_numbers<[1], [0], [0], [1], [0, 0, 1, 1], [], []>} : vector<4x40xf32>, vector<40x128xf32>, vector<4x128xf32> -> vector<4x128xf32>
    %34 = arith.addf %0, %33 : vector<4x128xf32>
    %c1 = arith.constant 1 : index
    %c0_31 = arith.constant 0 : index
    %c0_32 = arith.constant 0 : index
    %35 = vector.load %arg5[%c1, %c0_31, %c0_32] : memref<4x4x32xf32, #tpu.memory_space<vmem>>, vector<1x4x32xf32>
    %36 = vector.shape_cast %35 : vector<1x4x32xf32> to vector<4x32xf32>
    %cst_33 = arith.constant dense<0.000000e+00> : vector<4x40xf32>
    %37 = tpu.matmul %36, %27, %cst_33 {dimension_numbers = #tpu.dot_dimension_numbers<[1], [0], [0], [1], [0, 0, 1, 1], [], []>} : vector<4x32xf32>, vector<32x40xf32>, vector<4x40xf32> -> vector<4x40xf32>
    %c1_34 = arith.constant 1 : index
    %c0_35 = arith.constant 0 : index
    %c0_36 = arith.constant 0 : index
    %38 = vector.load %arg6[%c1_34, %c0_35, %c0_36] : memref<8x40x128xf32, #tpu.memory_space<vmem>>, vector<1x40x128xf32>
    %39 = vector.shape_cast %38 : vector<1x40x128xf32> to vector<40x128xf32>
    %cst_37 = arith.constant dense<0.000000e+00> : vector<4x128xf32>
    %40 = tpu.matmul %37, %39, %cst_37 {dimension_numbers = #tpu.dot_dimension_numbers<[1], [0], [0], [1], [0, 0, 1, 1], [], []>} : vector<4x40xf32>, vector<40x128xf32>, vector<4x128xf32> -> vector<4x128xf32>
    %41 = arith.addf %34, %40 : vector<4x128xf32>
    %c2 = arith.constant 2 : index
    %c0_38 = arith.constant 0 : index
    %c0_39 = arith.constant 0 : index
    %42 = vector.load %arg5[%c2, %c0_38, %c0_39] : memref<4x4x32xf32, #tpu.memory_space<vmem>>, vector<1x4x32xf32>
    %43 = vector.shape_cast %42 : vector<1x4x32xf32> to vector<4x32xf32>
    %cst_40 = arith.constant dense<0.000000e+00> : vector<4x40xf32>
    %44 = tpu.matmul %43, %27, %cst_40 {dimension_numbers = #tpu.dot_dimension_numbers<[1], [0], [0], [1], [0, 0, 1, 1], [], []>} : vector<4x32xf32>, vector<32x40xf32>, vector<4x40xf32> -> vector<4x40xf32>
    %c2_41 = arith.constant 2 : index
    %c0_42 = arith.constant 0 : index
    %c0_43 = arith.constant 0 : index
    %45 = vector.load %arg6[%c2_41, %c0_42, %c0_43] : memref<8x40x128xf32, #tpu.memory_space<vmem>>, vector<1x40x128xf32>
    %46 = vector.shape_cast %45 : vector<1x40x128xf32> to vector<40x128xf32>
    %cst_44 = arith.constant dense<0.000000e+00> : vector<4x128xf32>
    %47 = tpu.matmul %44, %46, %cst_44 {dimension_numbers = #tpu.dot_dimension_numbers<[1], [0], [0], [1], [0, 0, 1, 1], [], []>} : vector<4x40xf32>, vector<40x128xf32>, vector<4x128xf32> -> vector<4x128xf32>
    %48 = arith.addf %41, %47 : vector<4x128xf32>
    %c3 = arith.constant 3 : index
    %c0_45 = arith.constant 0 : index
    %c0_46 = arith.constant 0 : index
    %49 = vector.load %arg5[%c3, %c0_45, %c0_46] : memref<4x4x32xf32, #tpu.memory_space<vmem>>, vector<1x4x32xf32>
    %50 = vector.shape_cast %49 : vector<1x4x32xf32> to vector<4x32xf32>
    %cst_47 = arith.constant dense<0.000000e+00> : vector<4x40xf32>
    %51 = tpu.matmul %50, %27, %cst_47 {dimension_numbers = #tpu.dot_dimension_numbers<[1], [0], [0], [1], [0, 0, 1, 1], [], []>} : vector<4x32xf32>, vector<32x40xf32>, vector<4x40xf32> -> vector<4x40xf32>
    %c3_48 = arith.constant 3 : index
    %c0_49 = arith.constant 0 : index
    %c0_50 = arith.constant 0 : index
    %52 = vector.load %arg6[%c3_48, %c0_49, %c0_50] : memref<8x40x128xf32, #tpu.memory_space<vmem>>, vector<1x40x128xf32>
    %53 = vector.shape_cast %52 : vector<1x40x128xf32> to vector<40x128xf32>
    %cst_51 = arith.constant dense<0.000000e+00> : vector<4x128xf32>
    %54 = tpu.matmul %51, %53, %cst_51 {dimension_numbers = #tpu.dot_dimension_numbers<[1], [0], [0], [1], [0, 0, 1, 1], [], []>} : vector<4x40xf32>, vector<40x128xf32>, vector<4x128xf32> -> vector<4x128xf32>
    %55 = arith.addf %48, %54 : vector<4x128xf32>
    %c1_52 = arith.constant 1 : index
    %c0_53 = arith.constant 0 : index
    %c0_54 = arith.constant 0 : index
    %c0_55 = arith.constant 0 : index
    %56 = vector.load %arg2[%c1_52, %c0_53, %c0_54, %c0_55] : memref<2x4x8x16xbf16, #tpu.memory_space<vmem>>, vector<1x4x8x16xbf16>
    %57 = vector.shape_cast %56 : vector<1x4x8x16xbf16> to vector<4x8x16xbf16>
    %c1_56 = arith.constant 1 : index
    %c0_57 = arith.constant 0 : index
    %c0_58 = arith.constant 0 : index
    %c0_59 = arith.constant 0 : index
    %58 = vector.load %arg0[%c1_56, %c0_57, %c0_58, %c0_59] : memref<2x4x16x80xbf16, #tpu.memory_space<vmem>>, vector<1x4x16x80xbf16>
    %59 = vector.shape_cast %58 : vector<1x4x16x80xbf16> to vector<4x16x80xbf16>
    "tpu.trace_start"() <{level = 10 : i32, message = "bhd,bdn->bhn"}> : () -> ()
    %cst_60 = arith.constant dense<0.000000e+00> : vector<4x8x80xf32>
    %60 = tpu.matmul %57, %59, %cst_60 {dimension_numbers = #tpu.dot_dimension_numbers<[2], [1], [1], [2], [0, 0, 0, 1, 1, 2], [0], [0]>} : vector<4x8x16xbf16>, vector<4x16x80xbf16>, vector<4x8x80xf32> -> vector<4x8x80xf32>
    "tpu.trace_stop"() : () -> ()
    %61 = arith.truncf %60 : vector<4x8x80xf32> to vector<4x8x80xbf16>
    %c1_61 = arith.constant 1 : index
    %c0_62 = arith.constant 0 : index
    %c0_63 = arith.constant 0 : index
    %c0_64 = arith.constant 0 : index
    %62 = vector.load %arg1[%c1_61, %c0_62, %c0_63, %c0_64] : memref<2x4x80x80xbf16, #tpu.memory_space<vmem>>, vector<1x4x80x80xbf16>
    %63 = vector.shape_cast %62 : vector<1x4x80x80xbf16> to vector<4x80x80xbf16>
    "tpu.trace_start"() <{level = 10 : i32, message = "bhm,bmn->bhn"}> : () -> ()
    %cst_65 = arith.constant dense<0.000000e+00> : vector<4x8x80xf32>
    %64 = tpu.matmul %61, %63, %cst_65 {dimension_numbers = #tpu.dot_dimension_numbers<[2], [1], [1], [2], [0, 0, 0, 1, 1, 2], [0], [0]>} : vector<4x8x80xbf16>, vector<4x80x80xbf16>, vector<4x8x80xf32> -> vector<4x8x80xf32>
    "tpu.trace_stop"() : () -> ()
    %c1_66 = arith.constant 1 : index
    %c0_67 = arith.constant 0 : index
    %c0_68 = arith.constant 0 : index
    %65 = vector.load %arg3[%c1_66, %c0_67, %c0_68] : memref<2x8x80xf32, #tpu.memory_space<vmem>>, vector<1x8x80xf32>
    %66 = vector.shape_cast %65 : vector<1x8x80xf32> to vector<8x80xf32>
    %67 = vector.shape_cast %66 : vector<8x80xf32> to vector<1x8x80xf32>
    %68 = vector.broadcast %67 : vector<1x8x80xf32> to vector<4x8x80xf32>
    %69 = arith.addf %64, %68 : vector<4x8x80xf32>
    %cst_69 = arith.constant 0.000000e+00 : f32
    %70 = vector.broadcast %cst_69 : f32 to vector<4x8x80xf32>
    %71 = arith.cmpf ogt, %69, %70 : vector<4x8x80xf32>
    %72 = math.exp %69 : vector<4x8x80xf32>
    %cst_70 = arith.constant 1.000000e+00 : f32
    %73 = vector.broadcast %cst_70 : f32 to vector<4x8x80xf32>
    %74 = arith.subf %72, %73 : vector<4x8x80xf32>
    %cst_71 = arith.constant 1.67326319 : f32
    %75 = vector.broadcast %cst_71 : f32 to vector<4x8x80xf32>
    %76 = arith.mulf %75, %74 : vector<4x8x80xf32>
    %77 = arith.select %71, %69, %76 : vector<4x8x80xi1>, vector<4x8x80xf32>
    %cst_72 = arith.constant 1.05070102 : f32
    %78 = vector.broadcast %cst_72 : f32 to vector<4x8x80xf32>
    %79 = arith.mulf %78, %77 : vector<4x8x80xf32>
    %80 = vector.shape_cast %79 : vector<4x8x80xf32> to vector<32x80xf32>
    %c0_73 = arith.constant 0 : index
    %c0_74 = arith.constant 0 : index
    %81 = vector.load %arg4[%c0_73, %c0_74] : memref<80x40xf32, #tpu.memory_space<vmem>>, vector<80x40xf32>
    %cst_75 = arith.constant dense<0.000000e+00> : vector<32x40xf32>
    %82 = tpu.matmul %80, %81, %cst_75 {dimension_numbers = #tpu.dot_dimension_numbers<[1], [0], [0], [1], [0, 0, 1, 1], [], []>} : vector<32x80xf32>, vector<80x40xf32>, vector<32x40xf32> -> vector<32x40xf32>
    %c0_76 = arith.constant 0 : index
    %c0_77 = arith.constant 0 : index
    %c0_78 = arith.constant 0 : index
    %83 = vector.load %arg5[%c0_76, %c0_77, %c0_78] : memref<4x4x32xf32, #tpu.memory_space<vmem>>, vector<1x4x32xf32>
    %84 = vector.shape_cast %83 : vector<1x4x32xf32> to vector<4x32xf32>
    %cst_79 = arith.constant dense<0.000000e+00> : vector<4x40xf32>
    %85 = tpu.matmul %84, %82, %cst_79 {dimension_numbers = #tpu.dot_dimension_numbers<[1], [0], [0], [1], [0, 0, 1, 1], [], []>} : vector<4x32xf32>, vector<32x40xf32>, vector<4x40xf32> -> vector<4x40xf32>
    %c4 = arith.constant 4 : index
    %c0_80 = arith.constant 0 : index
    %c0_81 = arith.constant 0 : index
    %86 = vector.load %arg6[%c4, %c0_80, %c0_81] : memref<8x40x128xf32, #tpu.memory_space<vmem>>, vector<1x40x128xf32>
    %87 = vector.shape_cast %86 : vector<1x40x128xf32> to vector<40x128xf32>
    %cst_82 = arith.constant dense<0.000000e+00> : vector<4x128xf32>
    %88 = tpu.matmul %85, %87, %cst_82 {dimension_numbers = #tpu.dot_dimension_numbers<[1], [0], [0], [1], [0, 0, 1, 1], [], []>} : vector<4x40xf32>, vector<40x128xf32>, vector<4x128xf32> -> vector<4x128xf32>
    %89 = arith.addf %55, %88 : vector<4x128xf32>
    %c1_83 = arith.constant 1 : index
    %c0_84 = arith.constant 0 : index
    %c0_85 = arith.constant 0 : index
    %90 = vector.load %arg5[%c1_83, %c0_84, %c0_85] : memref<4x4x32xf32, #tpu.memory_space<vmem>>, vector<1x4x32xf32>
    %91 = vector.shape_cast %90 : vector<1x4x32xf32> to vector<4x32xf32>
    %cst_86 = arith.constant dense<0.000000e+00> : vector<4x40xf32>
    %92 = tpu.matmul %91, %82, %cst_86 {dimension_numbers = #tpu.dot_dimension_numbers<[1], [0], [0], [1], [0, 0, 1, 1], [], []>} : vector<4x32xf32>, vector<32x40xf32>, vector<4x40xf32> -> vector<4x40xf32>
    %c5 = arith.constant 5 : index
    %c0_87 = arith.constant 0 : index
    %c0_88 = arith.constant 0 : index
    %93 = vector.load %arg6[%c5, %c0_87, %c0_88] : memref<8x40x128xf32, #tpu.memory_space<vmem>>, vector<1x40x128xf32>
    %94 = vector.shape_cast %93 : vector<1x40x128xf32> to vector<40x128xf32>
    %cst_89 = arith.constant dense<0.000000e+00> : vector<4x128xf32>
    %95 = tpu.matmul %92, %94, %cst_89 {dimension_numbers = #tpu.dot_dimension_numbers<[1], [0], [0], [1], [0, 0, 1, 1], [], []>} : vector<4x40xf32>, vector<40x128xf32>, vector<4x128xf32> -> vector<4x128xf32>
    %96 = arith.addf %89, %95 : vector<4x128xf32>
    %c2_90 = arith.constant 2 : index
    %c0_91 = arith.constant 0 : index
    %c0_92 = arith.constant 0 : index
    %97 = vector.load %arg5[%c2_90, %c0_91, %c0_92] : memref<4x4x32xf32, #tpu.memory_space<vmem>>, vector<1x4x32xf32>
    %98 = vector.shape_cast %97 : vector<1x4x32xf32> to vector<4x32xf32>
    %cst_93 = arith.constant dense<0.000000e+00> : vector<4x40xf32>
    %99 = tpu.matmul %98, %82, %cst_93 {dimension_numbers = #tpu.dot_dimension_numbers<[1], [0], [0], [1], [0, 0, 1, 1], [], []>} : vector<4x32xf32>, vector<32x40xf32>, vector<4x40xf32> -> vector<4x40xf32>
    %c6 = arith.constant 6 : index
    %c0_94 = arith.constant 0 : index
    %c0_95 = arith.constant 0 : index
    %100 = vector.load %arg6[%c6, %c0_94, %c0_95] : memref<8x40x128xf32, #tpu.memory_space<vmem>>, vector<1x40x128xf32>
    %101 = vector.shape_cast %100 : vector<1x40x128xf32> to vector<40x128xf32>
    %cst_96 = arith.constant dense<0.000000e+00> : vector<4x128xf32>
    %102 = tpu.matmul %99, %101, %cst_96 {dimension_numbers = #tpu.dot_dimension_numbers<[1], [0], [0], [1], [0, 0, 1, 1], [], []>} : vector<4x40xf32>, vector<40x128xf32>, vector<4x128xf32> -> vector<4x128xf32>
    %103 = arith.addf %96, %102 : vector<4x128xf32>
    %c3_97 = arith.constant 3 : index
    %c0_98 = arith.constant 0 : index
    %c0_99 = arith.constant 0 : index
    %104 = vector.load %arg5[%c3_97, %c0_98, %c0_99] : memref<4x4x32xf32, #tpu.memory_space<vmem>>, vector<1x4x32xf32>
    %105 = vector.shape_cast %104 : vector<1x4x32xf32> to vector<4x32xf32>
    %cst_100 = arith.constant dense<0.000000e+00> : vector<4x40xf32>
    %106 = tpu.matmul %105, %82, %cst_100 {dimension_numbers = #tpu.dot_dimension_numbers<[1], [0], [0], [1], [0, 0, 1, 1], [], []>} : vector<4x32xf32>, vector<32x40xf32>, vector<4x40xf32> -> vector<4x40xf32>
    %c7 = arith.constant 7 : index
    %c0_101 = arith.constant 0 : index
    %c0_102 = arith.constant 0 : index
    %107 = vector.load %arg6[%c7, %c0_101, %c0_102] : memref<8x40x128xf32, #tpu.memory_space<vmem>>, vector<1x40x128xf32>
    %108 = vector.shape_cast %107 : vector<1x40x128xf32> to vector<40x128xf32>
    %cst_103 = arith.constant dense<0.000000e+00> : vector<4x128xf32>
    %109 = tpu.matmul %106, %108, %cst_103 {dimension_numbers = #tpu.dot_dimension_numbers<[1], [0], [0], [1], [0, 0, 1, 1], [], []>} : vector<4x40xf32>, vector<40x128xf32>, vector<4x128xf32> -> vector<4x128xf32>
    %110 = arith.addf %103, %109 : vector<4x128xf32>
    %c0_104 = arith.constant 0 : index
    %c0_105 = arith.constant 0 : index
    %111 = vector.load %arg7[%c0_104, %c0_105] : memref<1x128xf32, #tpu.memory_space<vmem>>, vector<1x128xf32>
    %112 = vector.broadcast %111 : vector<1x128xf32> to vector<4x128xf32>
    %113 = arith.addf %110, %112 : vector<4x128xf32>
    %cst_106 = arith.constant 0.000000e+00 : f32
    %114 = vector.broadcast %cst_106 : f32 to vector<4x128xf32>
    %115 = arith.cmpf ogt, %113, %114 : vector<4x128xf32>
    %116 = math.exp %113 : vector<4x128xf32>
    %cst_107 = arith.constant 1.000000e+00 : f32
    %117 = vector.broadcast %cst_107 : f32 to vector<4x128xf32>
    %118 = arith.subf %116, %117 : vector<4x128xf32>
    %cst_108 = arith.constant 1.67326319 : f32
    %119 = vector.broadcast %cst_108 : f32 to vector<4x128xf32>
    %120 = arith.mulf %119, %118 : vector<4x128xf32>
    %121 = arith.select %115, %113, %120 : vector<4x128xi1>, vector<4x128xf32>
    %cst_109 = arith.constant 1.05070102 : f32
    %122 = vector.broadcast %cst_109 : f32 to vector<4x128xf32>
    %123 = arith.mulf %122, %121 : vector<4x128xf32>
    %c0_110 = arith.constant 0 : index
    %c0_111 = arith.constant 0 : index
    %124 = vector.load %arg8[%c0_110, %c0_111] : memref<128x1xf32, #tpu.memory_space<vmem>>, vector<128x1xf32>
    %cst_112 = arith.constant dense<0.000000e+00> : vector<4x1xf32>
    %125 = tpu.matmul %123, %124, %cst_112 {dimension_numbers = #tpu.dot_dimension_numbers<[1], [0], [0], [1], [0, 0, 1, 1], [], []>} : vector<4x128xf32>, vector<128x1xf32>, vector<4x1xf32> -> vector<4x1xf32>
    %c0_113 = arith.constant 0 : index
    %c0_114 = arith.constant 0 : index
    %126 = vector.load %arg11[%c0_113, %c0_114] : memref<4x1xf32, #tpu.memory_space<vmem>>, vector<4x1xf32>
    %c0_115 = arith.constant 0 : index
    %c0_116 = arith.constant 0 : index
    %127 = vector.load %arg9[%c0_115, %c0_116] : memref<1x1xf32, #tpu.memory_space<vmem>>, vector<1x1xf32>
    %128 = vector.broadcast %127 : vector<1x1xf32> to vector<4x1xf32>
    %129 = arith.mulf %126, %128 : vector<4x1xf32>
    %130 = arith.addf %125, %129 : vector<4x1xf32>
    %c0_117 = arith.constant 0 : index
    %c0_118 = arith.constant 0 : index
    %131 = vector.load %arg10[%c0_117, %c0_118] : memref<1x1xf32, #tpu.memory_space<vmem>>, vector<1x1xf32>
    %132 = vector.broadcast %131 : vector<1x1xf32> to vector<4x1xf32>
    %133 = arith.addf %130, %132 : vector<4x1xf32>
    %cst_119 = arith.constant 0.000000e+00 : f32
    %134 = vector.broadcast %cst_119 : f32 to vector<4x1xf32>
    %135 = arith.subf %134, %133 : vector<4x1xf32>
    %136 = math.exp %135 : vector<4x1xf32>
    %cst_120 = arith.constant 1.000000e+00 : f32
    %137 = vector.broadcast %cst_120 : f32 to vector<4x1xf32>
    %138 = arith.addf %137, %136 : vector<4x1xf32>
    %cst_121 = arith.constant 1.000000e+00 : f32
    %139 = vector.broadcast %cst_121 : f32 to vector<4x1xf32>
    %140 = arith.divf %139, %138 : vector<4x1xf32>
    %c0_122 = arith.constant 0 : index
    %c0_123 = arith.constant 0 : index
    %141 = vector.load %arg12[%c0_122, %c0_123] : memref<4x1xf32, #tpu.memory_space<vmem>>, vector<4x1xf32>
    tpu.vector_store %arg12[%c0_122, %c0_123], %140 {strides = array<i32>} : memref<4x1xf32, #tpu.memory_space<vmem>>, vector<4x1xf32>,
    return
  }
}

</mosaic_0001>

<llo_original>
// kernel: gcn_mv_gcn_forward.1
$region0: #{gcn_mv_gcn_forward.1}
  #allocation0 [shape = 'u32[]', space=smem, size = 0x4, offset = 0x4, fixed_abs, tag = 'smem constant byte address 0x4 - core index']
  #allocation1 [shape = 'u32[144,128]{1,0:T(1,128)}', space=vmem, size = 0x12000, scoped, tag = 'internal scratch']
  #allocation2 [shape = 'f32[1,1]{1,0:T(1,128)S(1)}', space=vmem, size = 0x200, scoped, tag = 'scoped memory for gcn_mv_gcn_forward.1']
  #allocation3 [shape = 'f32[1,1]{1,0:T(1,128)S(1)}', space=vmem, size = 0x200, scoped, tag = 'scoped memory for gcn_mv_gcn_forward.1']
  %s0 = inlined_call_operand.vmem [shape: bf16[2,4,16,80], index: 0, kind: input, shape index: {}]
  %s1 = inlined_call_operand.vmem [shape: bf16[2,4,80,80], index: 1, kind: input, shape index: {}]
  %s2 = inlined_call_operand.vmem [shape: bf16[2,4,8,16], index: 2, kind: input, shape index: {}]
  %s3 = inlined_call_operand.vmem [shape: f32[2,8,80], index: 3, kind: input, shape index: {}]
  %s4 = inlined_call_operand.vmem [shape: f32[80,40], index: 4, kind: input, shape index: {}]
  %s5 = inlined_call_operand.vmem [shape: f32[4,4,32], index: 5, kind: input, shape index: {}]
  %s6 = inlined_call_operand.vmem [shape: f32[8,40,128], index: 6, kind: input, shape index: {}]
  %s7 = inlined_call_operand.vmem [shape: f32[1,128], index: 7, kind: input, shape index: {}]
  %s8 = inlined_call_operand.vmem [shape: f32[128,1], index: 8, kind: input, shape index: {}]
  %s9 = inlined_call_operand.<no memory space> [shape: f32[1,1], index: 9, kind: input, shape index: {}]
  %s10 = inlined_call_operand.<no memory space> [shape: f32[1,1], index: 10, kind: input, shape index: {}]
  %s11 = inlined_call_operand.vmem [shape: f32[4,1], index: 11, kind: input, shape index: {}]
  %s12 = inlined_call_operand.vmem [shape: f32[4,1], index: 12, kind: output, shape index: {}]
  %s13 = sld [smem:[#allocation0]]
  $region58: #{gcn_mv_gcn_forward.1} parent=0
    _
  %s15 = ssub.s32 1, %s13
  %s16 = scalar_select 0, %s15, %s13
  %v17 = vstv %s9
  %18 = vst [vmem:[#allocation2] sm:$0x1] %v17
  %v19 = vstv %s10
  %20 = vst [vmem:[#allocation3] sm:$0x1] %v19
  // Predicated region
  $region2: #{gcn_mv_gcn_forward.1} parent=0 // pred_check
    _
  $region3: #{gcn_mv_gcn_forward.1} parent=0 // pred_check_branch
    %22 = sbr.rel (0) target = $region5
  $region4: #{gcn_mv_gcn_forward.1} parent=0 // pred_region
    _
  $region5: #{gcn_mv_gcn_forward.1} parent=0 // pred_fallthru
    _
  // Predicated region
  $region6: #{gcn_mv_gcn_forward.1} parent=0 // pred_check
    _
  $region7: #{gcn_mv_gcn_forward.1} parent=0 // pred_check_branch
    %24 = sbr.rel (0) target = $region9
  $region8: #{gcn_mv_gcn_forward.1} parent=0 // pred_region
    _
  $region9: #{gcn_mv_gcn_forward.1} parent=0 // pred_fallthru
    _
  // Predicated region
  $region10: #{gcn_mv_gcn_forward.1} parent=0 // pred_check
    _
  $region11: #{gcn_mv_gcn_forward.1} parent=0 // pred_check_branch
    %26 = sbr.rel (0) target = $region13
  $region12: #{gcn_mv_gcn_forward.1} parent=0 // pred_region
    _
  $region13: #{gcn_mv_gcn_forward.1} parent=0 // pred_fallthru
    _
  // Predicated region
  $region14: #{gcn_mv_gcn_forward.1} parent=0 // pred_check
    _
  $region15: #{gcn_mv_gcn_forward.1} parent=0 // pred_check_branch
    %28 = sbr.rel (0) target = $region17
  $region16: #{gcn_mv_gcn_forward.1} parent=0 // pred_region
    _
  $region17: #{gcn_mv_gcn_forward.1} parent=0 // pred_fallthru
    _
  // Predicated region
  $region18: #{gcn_mv_gcn_forward.1} parent=0 // pred_check
    _
  $region19: #{gcn_mv_gcn_forward.1} parent=0 // pred_check_branch
    %30 = sbr.rel (0) target = $region21
  $region20: #{gcn_mv_gcn_forward.1} parent=0 // pred_region
    _
  $region21: #{gcn_mv_gcn_forward.1} parent=0 // pred_fallthru
    _
  // Predicated region
  $region22: #{gcn_mv_gcn_forward.1} parent=0 // pred_check
    _
  $region23: #{gcn_mv_gcn_forward.1} parent=0 // pred_check_branch
    %32 = sbr.rel (0) target = $region25
  $region24: #{gcn_mv_gcn_forward.1} parent=0 // pred_region
    _
  $region25: #{gcn_mv_gcn_forward.1} parent=0 // pred_fallthru
    _
  // Predicated region
  $region26: #{gcn_mv_gcn_forward.1} parent=0 // pred_check
    _
  $region27: #{gcn_mv_gcn_forward.1} parent=0 // pred_check_branch
    %34 = sbr.rel (0) target = $region29
  $region28: #{gcn_mv_gcn_forward.1} parent=0 // pred_region
    _
  $region29: #{gcn_mv_gcn_forward.1} parent=0 // pred_fallthru
    _
  // Predicated region
  $region30: #{gcn_mv_gcn_forward.1} parent=0 // pred_check
    _
  $region31: #{gcn_mv_gcn_forward.1} parent=0 // pred_check_branch
    %36 = sbr.rel (0) target = $region33
  $region32: #{gcn_mv_gcn_forward.1} parent=0 // pred_region
    _
  $region33: #{gcn_mv_gcn_forward.1} parent=0 // pred_fallthru
    _
  // Predicated region
  $region34: #{gcn_mv_gcn_forward.1} parent=0 // pred_check
    _
  $region35: #{gcn_mv_gcn_forward.1} parent=0 // pred_check_branch
    %38 = sbr.rel (0) target = $region37
  $region36: #{gcn_mv_gcn_forward.1} parent=0 // pred_region
    _
  $region37: #{gcn_mv_gcn_forward.1} parent=0 // pred_fallthru
    _
  // Predicated region
  $region38: #{gcn_mv_gcn_forward.1} parent=0 // pred_check
    _
  $region39: #{gcn_mv_gcn_forward.1} parent=0 // pred_check_branch
    %40 = sbr.rel (0) target = $region41
  $region40: #{gcn_mv_gcn_forward.1} parent=0 // pred_region
    _
  $region41: #{gcn_mv_gcn_forward.1} parent=0 // pred_fallthru
    _
  // Predicated region
  $region42: #{gcn_mv_gcn_forward.1} parent=0 // pred_check
    _
  $region43: #{gcn_mv_gcn_forward.1} parent=0 // pred_check_branch
    %42 = sbr.rel (0) target = $region45
  $region44: #{gcn_mv_gcn_forward.1} parent=0 // pred_region
    _
  $region45: #{gcn_mv_gcn_forward.1} parent=0 // pred_fallthru
    _
  // Predicated region
  $region46: #{gcn_mv_gcn_forward.1} parent=0 // pred_check
    _
  $region47: #{gcn_mv_gcn_forward.1} parent=0 // pred_check_branch
    %44 = sbr.rel (0) target = $region49
  $region48: #{gcn_mv_gcn_forward.1} parent=0 // pred_region
    _
  $region49: #{gcn_mv_gcn_forward.1} parent=0 // pred_fallthru
    _
  %v46 = vld [vmem:[%s2] sm:$0xf]
  %v47 = vld [vmem:[%s2 + $0x4] sm:$0xf]
  %v48 = vld [vmem:[%s2 + $0x8] sm:$0xf]
  %v49 = vld [vmem:[%s2 + $0xc] sm:$0xf]
  %v50 = vld [vmem:[%s0] sm:$0xf]
  %v51 = vld [vmem:[%s0 + $0x4] sm:$0xf]
  %v52 = vld [vmem:[%s0 + $0x8] sm:$0xf]
  %v53 = vld [vmem:[%s0 + $0xc] sm:$0xf]
  %v54 = vld [vmem:[%s0 + $0x10] sm:$0xf]
  %v55 = vld [vmem:[%s0 + $0x14] sm:$0xf]
  %v56 = vld [vmem:[%s0 + $0x18] sm:$0xf]
  %v57 = vld [vmem:[%s0 + $0x1c] sm:$0xf]
  %v60 = vunpack.c.l.b16 %v50
  %v61 = vunpack.c.l.b16 %v51
  %v62 = vpack.c.b16 %v61, %v60
  %vm64 = vcmask 130048
  %v66 = vsel %vm64, %v46, 0
  %68 = vmatprep.subr.bf16.mxu0 0
  %69 = vmatpush1.bf16.msra.mxu0 %v62
  %70 = vmatprep.subr.bf16.mxu0 0
  %71 = vmatpush1.bf16.msra.mxu0 0
  %72 = vmatprep.subr.bf16.mxu0 0
  %73 = vmatpush1.bf16.msra.mxu0 0
  %74 = vmatprep.subr.bf16.mxu0 0
  %75 = vmatpush1.bf16.msra.mxu0 0
  %76 = vmatprep.subr.bf16.mxu0 0
  %77 = vmatpush1.bf16.msra.mxu0 0
  %78 = vmatprep.subr.bf16.mxu0 0
  %79 = vmatpush1.bf16.msra.mxu0 0
  %80 = vmatprep.subr.bf16.mxu0 0
  %81 = vmatpush1.bf16.msra.mxu0 0
  %82 = vmatprep.subr.bf16.mxu0 0
  %83 = vmatpush1.bf16.msra.mxu0 0
  %84 = vmatprep.subr.bf16.mxu0 0
  %85 = vmatpush1.bf16.msra.mxu0 0
  %86 = vmatprep.subr.bf16.mxu0 0
  %87 = vmatpush1.bf16.msra.mxu0 0
  %88 = vmatprep.subr.bf16.mxu0 0
  %89 = vmatpush1.bf16.msra.mxu0 0
  %90 = vmatprep.subr.bf16.mxu0 0
  %91 = vmatpush1.bf16.msra.mxu0 0
  %92 = vmatprep.subr.bf16.mxu0 0
  %93 = vmatpush1.bf16.msra.mxu0 0
  %94 = vmatprep.subr.bf16.mxu0 0
  %95 = vmatpush1.bf16.msra.mxu0 0
  %96 = vmatprep.subr.bf16.mxu0 0
  %97 = vmatpush1.bf16.msra.mxu0 0
  %98 = vmatprep.subr.bf16.mxu0 0
  %99 = vmatpush1.bf16.msra.mxu0 0
  %100 = vmatprep.mubr.bf16.mxu0 0
  %101 = vmatmul.mubr.bf16.gmra.mrb[0].mxu0 %v66
  %v102 = vpop.f32.mrb[0].mxu0
  %v103 = vadd.f32 0.0, %v102
  %v104 = vpop.f32.mrb[0].mxu0
  %v105 = vpop.f32.mrb[0].mxu0
  %v106 = vpop.f32.mrb[0].mxu0
  %107 = vdwg.mxu0
  %v110 = vunpack.c.l.b16 %v52
  %v111 = vunpack.c.l.b16 %v53
  %v112 = vpack.c.b16 %v111, %v110
  %v115 = vsel %vm64, %v47, 0
  %117 = vmatprep.subr.bf16.mxu0 0
  %118 = vmatpush1.bf16.msra.mxu0 %v112
  %119 = vmatprep.subr.bf16.mxu0 0
  %120 = vmatpush1.bf16.msra.mxu0 0
  %121 = vmatprep.subr.bf16.mxu0 0
  %122 = vmatpush1.bf16.msra.mxu0 0
  %123 = vmatprep.subr.bf16.mxu0 0
  %124 = vmatpush1.bf16.msra.mxu0 0
  %125 = vmatprep.subr.bf16.mxu0 0
  %126 = vmatpush1.bf16.msra.mxu0 0
  %127 = vmatprep.subr.bf16.mxu0 0
  %128 = vmatpush1.bf16.msra.mxu0 0
  %129 = vmatprep.subr.bf16.mxu0 0
  %130 = vmatpush1.bf16.msra.mxu0 0
  %131 = vmatprep.subr.bf16.mxu0 0
  %132 = vmatpush1.bf16.msra.mxu0 0
  %133 = vmatprep.subr.bf16.mxu0 0
  %134 = vmatpush1.bf16.msra.mxu0 0
  %135 = vmatprep.subr.bf16.mxu0 0
  %136 = vmatpush1.bf16.msra.mxu0 0
  %137 = vmatprep.subr.bf16.mxu0 0
  %138 = vmatpush1.bf16.msra.mxu0 0
  %139 = vmatprep.subr.bf16.mxu0 0
  %140 = vmatpush1.bf16.msra.mxu0 0
  %141 = vmatprep.subr.bf16.mxu0 0
  %142 = vmatpush1.bf16.msra.mxu0 0
  %143 = vmatprep.subr.bf16.mxu0 0
  %144 = vmatpush1.bf16.msra.mxu0 0
  %145 = vmatprep.subr.bf16.mxu0 0
  %146 = vmatpush1.bf16.msra.mxu0 0
  %147 = vmatprep.subr.bf16.mxu0 0
  %148 = vmatpush1.bf16.msra.mxu0 0
  %149 = vmatprep.mubr.bf16.mxu0 0
  %150 = vmatmul.mubr.bf16.gmra.mrb[0].mxu0 %v115
  %v151 = vpop.f32.mrb[0].mxu0
  %v152 = vadd.f32 0.0, %v151
  %v153 = vpop.f32.mrb[0].mxu0
  %v154 = vpop.f32.mrb[0].mxu0
  %v155 = vpop.f32.mrb[0].mxu0
  %156 = vdwg.mxu0
  %v159 = vunpack.c.l.b16 %v54
  %v160 = vunpack.c.l.b16 %v55
  %v161 = vpack.c.b16 %v160, %v159
  %v164 = vsel %vm64, %v48, 0
  %166 = vmatprep.subr.bf16.mxu0 0
  %167 = vmatpush1.bf16.msra.mxu0 %v161
  %168 = vmatprep.subr.bf16.mxu0 0
  %169 = vmatpush1.bf16.msra.mxu0 0
  %170 = vmatprep.subr.bf16.mxu0 0
  %171 = vmatpush1.bf16.msra.mxu0 0
  %172 = vmatprep.subr.bf16.mxu0 0
  %173 = vmatpush1.bf16.msra.mxu0 0
  %174 = vmatprep.subr.bf16.mxu0 0
  %175 = vmatpush1.bf16.msra.mxu0 0
  %176 = vmatprep.subr.bf16.mxu0 0
  %177 = vmatpush1.bf16.msra.mxu0 0
  %178 = vmatprep.subr.bf16.mxu0 0
  %179 = vmatpush1.bf16.msra.mxu0 0
  %180 = vmatprep.subr.bf16.mxu0 0
  %181 = vmatpush1.bf16.msra.mxu0 0
  %182 = vmatprep.subr.bf16.mxu0 0
  %183 = vmatpush1.bf16.msra.mxu0 0
  %184 = vmatprep.subr.bf16.mxu0 0
  %185 = vmatpush1.bf16.msra.mxu0 0
  %186 = vmatprep.subr.bf16.mxu0 0
  %187 = vmatpush1.bf16.msra.mxu0 0
  %188 = vmatprep.subr.bf16.mxu0 0
  %189 = vmatpush1.bf16.msra.mxu0 0
  %190 = vmatprep.subr.bf16.mxu0 0
  %191 = vmatpush1.bf16.msra.mxu0 0
  %192 = vmatprep.subr.bf16.mxu0 0
  %193 = vmatpush1.bf16.msra.mxu0 0
  %194 = vmatprep.subr.bf16.mxu0 0
  %195 = vmatpush1.bf16.msra.mxu0 0
  %196 = vmatprep.subr.bf16.mxu0 0
  %197 = vmatpush1.bf16.msra.mxu0 0
  %198 = vmatprep.mubr.bf16.mxu0 0
  %199 = vmatmul.mubr.bf16.gmra.mrb[0].mxu0 %v164
  %v200 = vpop.f32.mrb[0].mxu0
  %v201 = vadd.f32 0.0, %v200
  %v202 = vpop.f32.mrb[0].mxu0
  %v203 = vpop.f32.mrb[0].mxu0
  %v204 = vpop.f32.mrb[0].mxu0
  %205 = vdwg.mxu0
  %v208 = vunpack.c.l.b16 %v56
  %v209 = vunpack.c.l.b16 %v57
  %v210 = vpack.c.b16 %v209, %v208
  %v213 = vsel %vm64, %v49, 0
  %215 = vmatprep.subr.bf16.mxu0 0
  %216 = vmatpush1.bf16.msra.mxu0 %v210
  %217 = vmatprep.subr.bf16.mxu0 0
  %218 = vmatpush1.bf16.msra.mxu0 0
  %219 = vmatprep.subr.bf16.mxu0 0
  %220 = vmatpush1.bf16.msra.mxu0 0
  %221 = vmatprep.subr.bf16.mxu0 0
  %222 = vmatpush1.bf16.msra.mxu0 0
  %223 = vmatprep.subr.bf16.mxu0 0
  %224 = vmatpush1.bf16.msra.mxu0 0
  %225 = vmatprep.subr.bf16.mxu0 0
  %226 = vmatpush1.bf16.msra.mxu0 0
  %227 = vmatprep.subr.bf16.mxu0 0
  %228 = vmatpush1.bf16.msra.mxu0 0
  %229 = vmatprep.subr.bf16.mxu0 0
  %230 = vmatpush1.bf16.msra.mxu0 0
  %231 = vmatprep.subr.bf16.mxu0 0
  %232 = vmatpush1.bf16.msra.mxu0 0
  %233 = vmatprep.subr.bf16.mxu0 0
  %234 = vmatpush1.bf16.msra.mxu0 0
  %235 = vmatprep.subr.bf16.mxu0 0
  %236 = vmatpush1.bf16.msra.mxu0 0
  %237 = vmatprep.subr.bf16.mxu0 0
  %238 = vmatpush1.bf16.msra.mxu0 0
  %239 = vmatprep.subr.bf16.mxu0 0
  %240 = vmatpush1.bf16.msra.mxu0 0
  %241 = vmatprep.subr.bf16.mxu0 0
  %242 = vmatpush1.bf16.msra.mxu0 0
  %243 = vmatprep.subr.bf16.mxu0 0
  %244 = vmatpush1.bf16.msra.mxu0 0
  %245 = vmatprep.subr.bf16.mxu0 0
  %246 = vmatpush1.bf16.msra.mxu0 0
  %247 = vmatprep.mubr.bf16.mxu0 0
  %248 = vmatmul.mubr.bf16.gmra.mrb[0].mxu0 %v213
  %v249 = vpop.f32.mrb[0].mxu0
  %v250 = vadd.f32 0.0, %v249
  %v251 = vpop.f32.mrb[0].mxu0
  %v252 = vpop.f32.mrb[0].mxu0
  %v253 = vpop.f32.mrb[0].mxu0
  %254 = vdwg.mxu0
  %v255 = vpack.c.bf16 %v103, %v103
  %v256 = vpack.c.bf16 %v152, %v152
  %v257 = vpack.c.bf16 %v201, %v201
  %v258 = vpack.c.bf16 %v250, %v250
  %v259 = vld [vmem:[%s1] sm:$0xf]
  %v260 = vld [vmem:[%s1 + $0x4] sm:$0xf]
  %v261 = vld [vmem:[%s1 + $0x8] sm:$0xf]
  %v262 = vld [vmem:[%s1 + $0xc] sm:$0xf]
  %v263 = vld [vmem:[%s1 + $0x10] sm:$0xf]
  %v264 = vld [vmem:[%s1 + $0x14] sm:$0xf]
  %v265 = vld [vmem:[%s1 + $0x18] sm:$0xf]
  %v266 = vld [vmem:[%s1 + $0x1c] sm:$0xf]
  %v267 = vld [vmem:[%s1 + $0x20] sm:$0xf]
  %v268 = vld [vmem:[%s1 + $0x24] sm:$0xf]
  %v269 = vld [vmem:[%s1 + $0x28] sm:$0xf]
  %v270 = vld [vmem:[%s1 + $0x2c] sm:$0xf]
  %v271 = vld [vmem:[%s1 + $0x30] sm:$0xf]
  %v272 = vld [vmem:[%s1 + $0x34] sm:$0xf]
  %v273 = vld [vmem:[%s1 + $0x38] sm:$0xf]
  %v274 = vld [vmem:[%s1 + $0x3c] sm:$0xf]
  %v275 = vld [vmem:[%s1 + $0x40] sm:$0xf]
  %v276 = vld [vmem:[%s1 + $0x44] sm:$0xf]
  %v277 = vld [vmem:[%s1 + $0x48] sm:$0xf]
  %v278 = vld [vmem:[%s1 + $0x4c] sm:$0xf]
  %v279 = vld [vmem:[%s1 + $0x50] sm:$0xf]
  %v280 = vld [vmem:[%s1 + $0x54] sm:$0xf]
  %v281 = vld [vmem:[%s1 + $0x58] sm:$0xf]
  %v282 = vld [vmem:[%s1 + $0x5c] sm:$0xf]
  %v283 = vld [vmem:[%s1 + $0x60] sm:$0xf]
  %v284 = vld [vmem:[%s1 + $0x64] sm:$0xf]
  %v285 = vld [vmem:[%s1 + $0x68] sm:$0xf]
  %v286 = vld [vmem:[%s1 + $0x6c] sm:$0xf]
  %v287 = vld [vmem:[%s1 + $0x70] sm:$0xf]
  %v288 = vld [vmem:[%s1 + $0x74] sm:$0xf]
  %v289 = vld [vmem:[%s1 + $0x78] sm:$0xf]
  %v290 = vld [vmem:[%s1 + $0x7c] sm:$0xf]
  %v291 = vld [vmem:[%s1 + $0x80] sm:$0xf]
  %v292 = vld [vmem:[%s1 + $0x84] sm:$0xf]
  %v293 = vld [vmem:[%s1 + $0x88] sm:$0xf]
  %v294 = vld [vmem:[%s1 + $0x8c] sm:$0xf]
  %v295 = vld [vmem:[%s1 + $0x90] sm:$0xf]
  %v296 = vld [vmem:[%s1 + $0x94] sm:$0xf]
  %v297 = vld [vmem:[%s1 + $0x98] sm:$0xf]
  %v298 = vld [vmem:[%s1 + $0x9c] sm:$0xf]
  %v299 = vld [vmem:[%s3] sm:$0xff]
  %v310 = vunpack.c.l.b16 %v259
  %v311 = vunpack.c.l.b16 %v260
  %v312 = vunpack.c.l.b16 %v261
  %v313 = vunpack.c.l.b16 %v262
  %v314 = vunpack.c.l.b16 %v263
  %v315 = vunpack.c.l.b16 %v264
  %v316 = vunpack.c.l.b16 %v265
  %v317 = vunpack.c.l.b16 %v266
  %v318 = vunpack.c.l.b16 %v267
  %v319 = vunpack.c.l.b16 %v268
  %v320 = vpack.c.b16 %v311, %v310
  %v321 = vpack.c.b16 %v313, %v312
  %v322 = vpack.c.b16 %v315, %v314
  %v323 = vpack.c.b16 %v317, %v316
  %v324 = vpack.c.b16 %v319, %v318
  %vm330 = vcmask 654336
  %v332 = vsel %vm330, %v255, 0
  %334 = vmatprep.subr.bf16.mxu0 0
  %335 = vmatpush1.bf16.msra.mxu0 %v320
  %336 = vmatprep.subr.bf16.mxu0 0
  %337 = vmatpush1.bf16.msra.mxu0 %v321
  %338 = vmatprep.subr.bf16.mxu0 0
  %339 = vmatpush1.bf16.msra.mxu0 %v322
  %340 = vmatprep.subr.bf16.mxu0 0
  %341 = vmatpush1.bf16.msra.mxu0 %v323
  %342 = vmatprep.subr.bf16.mxu0 0
  %343 = vmatpush1.bf16.msra.mxu0 %v324
  %344 = vmatprep.subr.bf16.mxu0 0
  %345 = vmatpush1.bf16.msra.mxu0 0
  %346 = vmatprep.subr.bf16.mxu0 0
  %347 = vmatpush1.bf16.msra.mxu0 0
  %348 = vmatprep.subr.bf16.mxu0 0
  %349 = vmatpush1.bf16.msra.mxu0 0
  %350 = vmatprep.subr.bf16.mxu0 0
  %351 = vmatpush1.bf16.msra.mxu0 0
  %352 = vmatprep.subr.bf16.mxu0 0
  %353 = vmatpush1.bf16.msra.mxu0 0
  %354 = vmatprep.subr.bf16.mxu0 0
  %355 = vmatpush1.bf16.msra.mxu0 0
  %356 = vmatprep.subr.bf16.mxu0 0
  %357 = vmatpush1.bf16.msra.mxu0 0
  %358 = vmatprep.subr.bf16.mxu0 0
  %359 = vmatpush1.bf16.msra.mxu0 0
  %360 = vmatprep.subr.bf16.mxu0 0
  %361 = vmatpush1.bf16.msra.mxu0 0
  %362 = vmatprep.subr.bf16.mxu0 0
  %363 = vmatpush1.bf16.msra.mxu0 0
  %364 = vmatprep.subr.bf16.mxu0 0
  %365 = vmatpush1.bf16.msra.mxu0 0
  %366 = vmatprep.mubr.bf16.mxu0 0
  %367 = vmatmul.mubr.bf16.gmra.mrb[0].mxu0 %v332
  %v368 = vpop.f32.mrb[0].mxu0
  %v369 = vadd.f32 %v299, %v368
  %v370 = vpop.f32.mrb[0].mxu0
  %v371 = vpop.f32.mrb[0].mxu0
  %v372 = vpop.f32.mrb[0].mxu0
  %373 = vdwg.mxu0
  %v384 = vunpack.c.l.b16 %v269
  %v385 = vunpack.c.l.b16 %v270
  %v386 = vunpack.c.l.b16 %v271
  %v387 = vunpack.c.l.b16 %v272
  %v388 = vunpack.c.l.b16 %v273
  %v389 = vunpack.c.l.b16 %v274
  %v390 = vunpack.c.l.b16 %v275
  %v391 = vunpack.c.l.b16 %v276
  %v392 = vunpack.c.l.b16 %v277
  %v393 = vunpack.c.l.b16 %v278
  %v394 = vpack.c.b16 %v385, %v384
  %v395 = vpack.c.b16 %v387, %v386
  %v396 = vpack.c.b16 %v389, %v388
  %v397 = vpack.c.b16 %v391, %v390
  %v398 = vpack.c.b16 %v393, %v392
  %v405 = vsel %vm330, %v256, 0
  %407 = vmatprep.subr.bf16.mxu0 0
  %408 = vmatpush1.bf16.msra.mxu0 %v394
  %409 = vmatprep.subr.bf16.mxu0 0
  %410 = vmatpush1.bf16.msra.mxu0 %v395
  %411 = vmatprep.subr.bf16.mxu0 0
  %412 = vmatpush1.bf16.msra.mxu0 %v396
  %413 = vmatprep.subr.bf16.mxu0 0
  %414 = vmatpush1.bf16.msra.mxu0 %v397
  %415 = vmatprep.subr.bf16.mxu0 0
  %416 = vmatpush1.bf16.msra.mxu0 %v398
  %417 = vmatprep.subr.bf16.mxu0 0
  %418 = vmatpush1.bf16.msra.mxu0 0
  %419 = vmatprep.subr.bf16.mxu0 0
  %420 = vmatpush1.bf16.msra.mxu0 0
  %421 = vmatprep.subr.bf16.mxu0 0
  %422 = vmatpush1.bf16.msra.mxu0 0
  %423 = vmatprep.subr.bf16.mxu0 0
  %424 = vmatpush1.bf16.msra.mxu0 0
  %425 = vmatprep.subr.bf16.mxu0 0
  %426 = vmatpush1.bf16.msra.mxu0 0
  %427 = vmatprep.subr.bf16.mxu0 0
  %428 = vmatpush1.bf16.msra.mxu0 0
  %429 = vmatprep.subr.bf16.mxu0 0
  %430 = vmatpush1.bf16.msra.mxu0 0
  %431 = vmatprep.subr.bf16.mxu0 0
  %432 = vmatpush1.bf16.msra.mxu0 0
  %433 = vmatprep.subr.bf16.mxu0 0
  %434 = vmatpush1.bf16.msra.mxu0 0
  %435 = vmatprep.subr.bf16.mxu0 0
  %436 = vmatpush1.bf16.msra.mxu0 0
  %437 = vmatprep.subr.bf16.mxu0 0
  %438 = vmatpush1.bf16.msra.mxu0 0
  %439 = vmatprep.mubr.bf16.mxu0 0
  %440 = vmatmul.mubr.bf16.gmra.mrb[0].mxu0 %v405
  %v441 = vpop.f32.mrb[0].mxu0
  %v442 = vadd.f32 %v299, %v441
  %v443 = vpop.f32.mrb[0].mxu0
  %v444 = vpop.f32.mrb[0].mxu0
  %v445 = vpop.f32.mrb[0].mxu0
  %446 = vdwg.mxu0
  %v457 = vunpack.c.l.b16 %v279
  %v458 = vunpack.c.l.b16 %v280
  %v459 = vunpack.c.l.b16 %v281
  %v460 = vunpack.c.l.b16 %v282
  %v461 = vunpack.c.l.b16 %v283
  %v462 = vunpack.c.l.b16 %v284
  %v463 = vunpack.c.l.b16 %v285
  %v464 = vunpack.c.l.b16 %v286
  %v465 = vunpack.c.l.b16 %v287
  %v466 = vunpack.c.l.b16 %v288
  %v467 = vpack.c.b16 %v458, %v457
  %v468 = vpack.c.b16 %v460, %v459
  %v469 = vpack.c.b16 %v462, %v461
  %v470 = vpack.c.b16 %v464, %v463
  %v471 = vpack.c.b16 %v466, %v465
  %v478 = vsel %vm330, %v257, 0
  %480 = vmatprep.subr.bf16.mxu0 0
  %481 = vmatpush1.bf16.msra.mxu0 %v467
  %482 = vmatprep.subr.bf16.mxu0 0
  %483 = vmatpush1.bf16.msra.mxu0 %v468
  %484 = vmatprep.subr.bf16.mxu0 0
  %485 = vmatpush1.bf16.msra.mxu0 %v469
  %486 = vmatprep.subr.bf16.mxu0 0
  %487 = vmatpush1.bf16.msra.mxu0 %v470
  %488 = vmatprep.subr.bf16.mxu0 0
  %489 = vmatpush1.bf16.msra.mxu0 %v471
  %490 = vmatprep.subr.bf16.mxu0 0
  %491 = vmatpush1.bf16.msra.mxu0 0
  %492 = vmatprep.subr.bf16.mxu0 0
  %493 = vmatpush1.bf16.msra.mxu0 0
  %494 = vmatprep.subr.bf16.mxu0 0
  %495 = vmatpush1.bf16.msra.mxu0 0
  %496 = vmatprep.subr.bf16.mxu0 0
  %497 = vmatpush1.bf16.msra.mxu0 0
  %498 = vmatprep.subr.bf16.mxu0 0
  %499 = vmatpush1.bf16.msra.mxu0 0
  %500 = vmatprep.subr.bf16.mxu0 0
  %501 = vmatpush1.bf16.msra.mxu0 0
  %502 = vmatprep.subr.bf16.mxu0 0
  %503 = vmatpush1.bf16.msra.mxu0 0
  %504 = vmatprep.subr.bf16.mxu0 0
  %505 = vmatpush1.bf16.msra.mxu0 0
  %506 = vmatprep.subr.bf16.mxu0 0
  %507 = vmatpush1.bf16.msra.mxu0 0
  %508 = vmatprep.subr.bf16.mxu0 0
  %509 = vmatpush1.bf16.msra.mxu0 0
  %510 = vmatprep.subr.bf16.mxu0 0
  %511 = vmatpush1.bf16.msra.mxu0 0
  %512 = vmatprep.mubr.bf16.mxu0 0
  %513 = vmatmul.mubr.bf16.gmra.mrb[0].mxu0 %v478
  %v514 = vpop.f32.mrb[0].mxu0
  %v515 = vadd.f32 %v299, %v514
  %v516 = vpop.f32.mrb[0].mxu0
  %v517 = vpop.f32.mrb[0].mxu0
  %v518 = vpop.f32.mrb[0].mxu0
  %519 = vdwg.mxu0
  %v530 = vunpack.c.l.b16 %v289
  %v531 = vunpack.c.l.b16 %v290
  %v532 = vunpack.c.l.b16 %v291
  %v533 = vunpack.c.l.b16 %v292
  %v534 = vunpack.c.l.b16 %v293
  %v535 = vunpack.c.l.b16 %v294
  %v536 = vunpack.c.l.b16 %v295
  %v537 = vunpack.c.l.b16 %v296
  %v538 = vunpack.c.l.b16 %v297
  %v539 = vunpack.c.l.b16 %v298
  %v540 = vpack.c.b16 %v531, %v530
  %v541 = vpack.c.b16 %v533, %v532
  %v542 = vpack.c.b16 %v535, %v534
  %v543 = vpack.c.b16 %v537, %v536
  %v544 = vpack.c.b16 %v539, %v538
  %v551 = vsel %vm330, %v258, 0
  %553 = vmatprep.subr.bf16.mxu0 0
  %554 = vmatpush1.bf16.msra.mxu0 %v540
  %555 = vmatprep.subr.bf16.mxu0 0
  %556 = vmatpush1.bf16.msra.mxu0 %v541
  %557 = vmatprep.subr.bf16.mxu0 0
  %558 = vmatpush1.bf16.msra.mxu0 %v542
  %559 = vmatprep.subr.bf16.mxu0 0
  %560 = vmatpush1.bf16.msra.mxu0 %v543
  %561 = vmatprep.subr.bf16.mxu0 0
  %562 = vmatpush1.bf16.msra.mxu0 %v544
  %563 = vmatprep.subr.bf16.mxu0 0
  %564 = vmatpush1.bf16.msra.mxu0 0
  %565 = vmatprep.subr.bf16.mxu0 0
  %566 = vmatpush1.bf16.msra.mxu0 0
  %567 = vmatprep.subr.bf16.mxu0 0
  %568 = vmatpush1.bf16.msra.mxu0 0
  %569 = vmatprep.subr.bf16.mxu0 0
  %570 = vmatpush1.bf16.msra.mxu0 0
  %571 = vmatprep.subr.bf16.mxu0 0
  %572 = vmatpush1.bf16.msra.mxu0 0
  %573 = vmatprep.subr.bf16.mxu0 0
  %574 = vmatpush1.bf16.msra.mxu0 0
  %575 = vmatprep.subr.bf16.mxu0 0
  %576 = vmatpush1.bf16.msra.mxu0 0
  %577 = vmatprep.subr.bf16.mxu0 0
  %578 = vmatpush1.bf16.msra.mxu0 0
  %579 = vmatprep.subr.bf16.mxu0 0
  %580 = vmatpush1.bf16.msra.mxu0 0
  %581 = vmatprep.subr.bf16.mxu0 0
  %582 = vmatpush1.bf16.msra.mxu0 0
  %583 = vmatprep.subr.bf16.mxu0 0
  %584 = vmatpush1.bf16.msra.mxu0 0
  %585 = vmatprep.mubr.bf16.mxu0 0
  %586 = vmatmul.mubr.bf16.gmra.mrb[0].mxu0 %v551
  %v587 = vpop.f32.mrb[0].mxu0
  %v588 = vadd.f32 %v299, %v587
  %v589 = vpop.f32.mrb[0].mxu0
  %v590 = vpop.f32.mrb[0].mxu0
  %v591 = vpop.f32.mrb[0].mxu0
  %592 = vdwg.mxu0
  %vm593 = vcmp.gt.f32.partialorder %v369, 0.0
  %vm594 = vcmp.gt.f32.partialorder %v442, 0.0
  %vm595 = vcmp.gt.f32.partialorder %v515, 0.0
  %vm596 = vcmp.gt.f32.partialorder %v588, 0.0
  %v597 = vmul.f32 %v369, 1.442695
  %v598 = vpow.pop %v597
  %v599 = vmul.f32 %v442, 1.442695
  %v600 = vpow.pop %v599
  %v601 = vmul.f32 %v515, 1.442695
  %v602 = vpow.pop %v601
  %v603 = vmul.f32 %v588, 1.442695
  %v604 = vpow.pop %v603
  %v605 = vsub.f32 %v598, 1.0
  %v606 = vsub.f32 %v600, 1.0
  %v607 = vsub.f32 %v602, 1.0
  %v608 = vsub.f32 %v604, 1.0
  %v609 = vmul.f32 %v605, 1.6732632
  %v610 = vmul.f32 %v606, 1.6732632
  %v611 = vmul.f32 %v607, 1.6732632
  %v612 = vmul.f32 %v608, 1.6732632
  %v613 = vsel %vm593, %v369, %v609
  %v614 = vsel %vm594, %v442, %v610
  %v615 = vsel %vm595, %v515, %v611
  %v616 = vsel %vm596, %v588, %v612
  %v617 = vmul.f32 %v613, 1.050701
  %v618 = vmul.f32 %v614, 1.050701
  %v619 = vmul.f32 %v615, 1.050701
  %v620 = vmul.f32 %v616, 1.050701
  %v621 = vld [vmem:[%s4] sm:$0xff]
  %v622 = vld [vmem:[%s4 + $0x8] sm:$0xff]
  %v623 = vld [vmem:[%s4 + $0x10] sm:$0xff]
  %v624 = vld [vmem:[%s4 + $0x18] sm:$0xff]
  %v625 = vld [vmem:[%s4 + $0x20] sm:$0xff]
  %v626 = vld [vmem:[%s4 + $0x28] sm:$0xff]
  %v627 = vld [vmem:[%s4 + $0x30] sm:$0xff]
  %v628 = vld [vmem:[%s4 + $0x38] sm:$0xff]
  %v629 = vld [vmem:[%s4 + $0x40] sm:$0xff]
  %v630 = vld [vmem:[%s4 + $0x48] sm:$0xff]
  %v632 = vsel %vm330, %v617, 0
  %v635 = vsel %vm330, %v618, 0
  %v638 = vsel %vm330, %v619, 0
  %v641 = vsel %vm330, %v620, 0
  %643 = vmatprep.subr.mxu0 0.0
  %644 = vmatpush1.msra.mxu0 %v621
  %645 = vmatprep.subr.mxu0 0.0
  %646 = vmatpush1.msra.mxu0 %v622
  %647 = vmatprep.subr.mxu0 0.0
  %648 = vmatpush1.msra.mxu0 %v623
  %649 = vmatprep.subr.mxu0 0.0
  %650 = vmatpush1.msra.mxu0 %v624
  %651 = vmatprep.subr.mxu0 0.0
  %652 = vmatpush1.msra.mxu0 %v625
  %653 = vmatprep.subr.mxu0 0.0
  %654 = vmatpush1.msra.mxu0 %v626
  %655 = vmatprep.subr.mxu0 0.0
  %656 = vmatpush1.msra.mxu0 %v627
  %657 = vmatprep.subr.mxu0 0.0
  %658 = vmatpush1.msra.mxu0 %v628
  %659 = vmatprep.subr.mxu0 0.0
  %660 = vmatpush1.msra.mxu0 %v629
  %661 = vmatprep.subr.mxu0 0.0
  %662 = vmatpush1.msra.mxu0 %v630
  %663 = vmatprep.subr.mxu0 0.0
  %664 = vmatpush1.msra.mxu0 0.0
  %665 = vmatprep.subr.mxu0 0.0
  %666 = vmatpush1.msra.mxu0 0.0
  %667 = vmatprep.subr.mxu0 0.0
  %668 = vmatpush1.msra.mxu0 0.0
  %669 = vmatprep.subr.mxu0 0.0
  %670 = vmatpush1.msra.mxu0 0.0
  %671 = vmatprep.subr.mxu0 0.0
  %672 = vmatpush1.msra.mxu0 0.0
  %673 = vmatprep.subr.mxu0 0.0
  %674 = vmatpush1.msra.mxu0 0.0
  %675 = vmatprep.subr.mxu0 0.0
  %676 = vmatpush1.msra.mxu0 0.0
  %677 = vmatprep.subr.mxu0 0.0
  %678 = vmatpush1.msra.mxu0 0.0
  %679 = vmatprep.subr.mxu0 0.0
  %680 = vmatpush1.msra.mxu0 0.0
  %681 = vmatprep.subr.mxu0 0.0
  %682 = vmatpush1.msra.mxu0 0.0
  %683 = vmatprep.subr.mxu0 0.0
  %684 = vmatpush1.msra.mxu0 0.0
  %685 = vmatprep.subr.mxu0 0.0
  %686 = vmatpush1.msra.mxu0 0.0
  %687 = vmatprep.subr.mxu0 0.0
  %688 = vmatpush1.msra.mxu0 0.0
  %689 = vmatprep.subr.mxu0 0.0
  %690 = vmatpush1.msra.mxu0 0.0
  %691 = vmatprep.subr.mxu0 0.0
  %692 = vmatpush1.msra.mxu0 0.0
  %693 = vmatprep.subr.mxu0 0.0
  %694 = vmatpush1.msra.mxu0 0.0
  %695 = vmatprep.subr.mxu0 0.0
  %696 = vmatpush1.msra.mxu0 0.0
  %697 = vmatprep.subr.mxu0 0.0
  %698 = vmatpush1.msra.mxu0 0.0
  %699 = vmatprep.subr.mxu0 0.0
  %700 = vmatpush1.msra.mxu0 0.0
  %701 = vmatprep.subr.mxu0 0.0
  %702 = vmatpush1.msra.mxu0 0.0
  %703 = vmatprep.subr.mxu0 0.0
  %704 = vmatpush1.msra.mxu0 0.0
  %705 = vmatprep.subr.mxu0 0.0
  %706 = vmatpush1.msra.mxu0 0.0
  %707 = vmatprep.mubr.f32.mxu0 0.0
  %708 = vmatmul.mubr.f32.gmra.mrb[0].mxu0 %v632
  %v709 = vpop.f32.mrb[0].mxu0
  %v710 = vadd.f32 0.0, %v709
  %v711 = vpop.f32.mrb[0].mxu0
  %712 = vmatprep.mubr.f32.mxu0 0.0
  %713 = vmatmul.mubr.f32.gmra.mrb[0].mxu0 %v635
  %v714 = vpop.f32.mrb[0].mxu0
  %v715 = vadd.f32 0.0, %v714
  %v716 = vpop.f32.mrb[0].mxu0
  %717 = vmatprep.mubr.f32.mxu0 0.0
  %718 = vmatmul.mubr.f32.gmra.mrb[0].mxu0 %v638
  %v719 = vpop.f32.mrb[0].mxu0
  %v720 = vadd.f32 0.0, %v719
  %v721 = vpop.f32.mrb[0].mxu0
  %722 = vmatprep.mubr.f32.mxu0 0.0
  %723 = vmatmul.mubr.f32.gmra.mrb[0].mxu0 %v641
  %v724 = vpop.f32.mrb[0].mxu0
  %v725 = vadd.f32 0.0, %v724
  %v726 = vpop.f32.mrb[0].mxu0
  %727 = vdwg.mxu0
  %v728 = vld [vmem:[%s5] sm:$0xf]
  %vm729 = vcmask 261120
  %v731 = vsel %vm729, %v728, 0
  %733 = vmatprep.subr.mxu0 0.0
  %734 = vmatpush1.msra.mxu0 %v710
  %735 = vmatprep.subr.mxu0 0.0
  %736 = vmatpush1.msra.mxu0 %v715
  %737 = vmatprep.subr.mxu0 0.0
  %738 = vmatpush1.msra.mxu0 %v720
  %739 = vmatprep.subr.mxu0 0.0
  %740 = vmatpush1.msra.mxu0 %v725
  %741 = vmatprep.subr.mxu0 0.0
  %742 = vmatpush1.msra.mxu0 0.0
  %743 = vmatprep.subr.mxu0 0.0
  %744 = vmatpush1.msra.mxu0 0.0
  %745 = vmatprep.subr.mxu0 0.0
  %746 = vmatpush1.msra.mxu0 0.0
  %747 = vmatprep.subr.mxu0 0.0
  %748 = vmatpush1.msra.mxu0 0.0
  %749 = vmatprep.subr.mxu0 0.0
  %750 = vmatpush1.msra.mxu0 0.0
  %751 = vmatprep.subr.mxu0 0.0
  %752 = vmatpush1.msra.mxu0 0.0
  %753 = vmatprep.subr.mxu0 0.0
  %754 = vmatpush1.msra.mxu0 0.0
  %755 = vmatprep.subr.mxu0 0.0
  %756 = vmatpush1.msra.mxu0 0.0
  %757 = vmatprep.subr.mxu0 0.0
  %758 = vmatpush1.msra.mxu0 0.0
  %759 = vmatprep.subr.mxu0 0.0
  %760 = vmatpush1.msra.mxu0 0.0
  %761 = vmatprep.subr.mxu0 0.0
  %762 = vmatpush1.msra.mxu0 0.0
  %763 = vmatprep.subr.mxu0 0.0
  %764 = vmatpush1.msra.mxu0 0.0
  %765 = vmatprep.subr.mxu0 0.0
  %766 = vmatpush1.msra.mxu0 0.0
  %767 = vmatprep.subr.mxu0 0.0
  %768 = vmatpush1.msra.mxu0 0.0
  %769 = vmatprep.subr.mxu0 0.0
  %770 = vmatpush1.msra.mxu0 0.0
  %771 = vmatprep.subr.mxu0 0.0
  %772 = vmatpush1.msra.mxu0 0.0
  %773 = vmatprep.subr.mxu0 0.0
  %774 = vmatpush1.msra.mxu0 0.0
  %775 = vmatprep.subr.mxu0 0.0
  %776 = vmatpush1.msra.mxu0 0.0
  %777 = vmatprep.subr.mxu0 0.0
  %778 = vmatpush1.msra.mxu0 0.0
  %779 = vmatprep.subr.mxu0 0.0
  %780 = vmatpush1.msra.mxu0 0.0
  %781 = vmatprep.subr.mxu0 0.0
  %782 = vmatpush1.msra.mxu0 0.0
  %783 = vmatprep.subr.mxu0 0.0
  %784 = vmatpush1.msra.mxu0 0.0
  %785 = vmatprep.subr.mxu0 0.0
  %786 = vmatpush1.msra.mxu0 0.0
  %787 = vmatprep.subr.mxu0 0.0
  %788 = vmatpush1.msra.mxu0 0.0
  %789 = vmatprep.subr.mxu0 0.0
  %790 = vmatpush1.msra.mxu0 0.0
  %791 = vmatprep.subr.mxu0 0.0
  %792 = vmatpush1.msra.mxu0 0.0
  %793 = vmatprep.subr.mxu0 0.0
  %794 = vmatpush1.msra.mxu0 0.0
  %795 = vmatprep.subr.mxu0 0.0
  %796 = vmatpush1.msra.mxu0 0.0
  %797 = vmatprep.mubr.f32.mxu0 0.0
  %798 = vmatmul.mubr.f32.gmra.mrb[0].mxu0 %v731
  %v799 = vpop.f32.mrb[0].mxu0
  %v800 = vadd.f32 0.0, %v799
  %v801 = vpop.f32.mrb[0].mxu0
  %802 = vdwg.mxu0
  %v803 = vld [vmem:[%s6] sm:$0xff]
  %v804 = vld [vmem:[%s6 + $0x8] sm:$0xff]
  %v805 = vld [vmem:[%s6 + $0x10] sm:$0xff]
  %v806 = vld [vmem:[%s6 + $0x18] sm:$0xff]
  %v807 = vld [vmem:[%s6 + $0x20] sm:$0xff]
  %s808 = scalar_lea.vmem %s5, 4
  %v809 = vld [vmem:[%s808] sm:$0xf]
  %v811 = vsel %vm729, %v809, 0
  %813 = vmatprep.subr.mxu0 0.0
  %814 = vmatpush1.msra.mxu0 %v710
  %815 = vmatprep.subr.mxu0 0.0
  %816 = vmatpush1.msra.mxu0 %v715
  %817 = vmatprep.subr.mxu0 0.0
  %818 = vmatpush1.msra.mxu0 %v720
  %819 = vmatprep.subr.mxu0 0.0
  %820 = vmatpush1.msra.mxu0 %v725
  %821 = vmatprep.subr.mxu0 0.0
  %822 = vmatpush1.msra.mxu0 0.0
  %823 = vmatprep.subr.mxu0 0.0
  %824 = vmatpush1.msra.mxu0 0.0
  %825 = vmatprep.subr.mxu0 0.0
  %826 = vmatpush1.msra.mxu0 0.0
  %827 = vmatprep.subr.mxu0 0.0
  %828 = vmatpush1.msra.mxu0 0.0
  %829 = vmatprep.subr.mxu0 0.0
  %830 = vmatpush1.msra.mxu0 0.0
  %831 = vmatprep.subr.mxu0 0.0
  %832 = vmatpush1.msra.mxu0 0.0
  %833 = vmatprep.subr.mxu0 0.0
  %834 = vmatpush1.msra.mxu0 0.0
  %835 = vmatprep.subr.mxu0 0.0
  %836 = vmatpush1.msra.mxu0 0.0
  %837 = vmatprep.subr.mxu0 0.0
  %838 = vmatpush1.msra.mxu0 0.0
  %839 = vmatprep.subr.mxu0 0.0
  %840 = vmatpush1.msra.mxu0 0.0
  %841 = vmatprep.subr.mxu0 0.0
  %842 = vmatpush1.msra.mxu0 0.0
  %843 = vmatprep.subr.mxu0 0.0
  %844 = vmatpush1.msra.mxu0 0.0
  %845 = vmatprep.subr.mxu0 0.0
  %846 = vmatpush1.msra.mxu0 0.0
  %847 = vmatprep.subr.mxu0 0.0
  %848 = vmatpush1.msra.mxu0 0.0
  %849 = vmatprep.subr.mxu0 0.0
  %850 = vmatpush1.msra.mxu0 0.0
  %851 = vmatprep.subr.mxu0 0.0
  %852 = vmatpush1.msra.mxu0 0.0
  %853 = vmatprep.subr.mxu0 0.0
  %854 = vmatpush1.msra.mxu0 0.0
  %855 = vmatprep.subr.mxu0 0.0
  %856 = vmatpush1.msra.mxu0 0.0
  %857 = vmatprep.subr.mxu0 0.0
  %858 = vmatpush1.msra.mxu0 0.0
  %859 = vmatprep.subr.mxu0 0.0
  %860 = vmatpush1.msra.mxu0 0.0
  %861 = vmatprep.subr.mxu0 0.0
  %862 = vmatpush1.msra.mxu0 0.0
  %863 = vmatprep.subr.mxu0 0.0
  %864 = vmatpush1.msra.mxu0 0.0
  %865 = vmatprep.subr.mxu0 0.0
  %866 = vmatpush1.msra.mxu0 0.0
  %867 = vmatprep.subr.mxu0 0.0
  %868 = vmatpush1.msra.mxu0 0.0
  %869 = vmatprep.subr.mxu0 0.0
  %870 = vmatpush1.msra.mxu0 0.0
  %871 = vmatprep.subr.mxu0 0.0
  %872 = vmatpush1.msra.mxu0 0.0
  %873 = vmatprep.subr.mxu0 0.0
  %874 = vmatpush1.msra.mxu0 0.0
  %875 = vmatprep.subr.mxu0 0.0
  %876 = vmatpush1.msra.mxu0 0.0
  %877 = vmatprep.mubr.f32.mxu0 0.0
  %878 = vmatmul.mubr.f32.gmra.mrb[0].mxu0 %v811
  %v879 = vpop.f32.mrb[0].mxu0
  %v880 = vadd.f32 0.0, %v879
  %v881 = vpop.f32.mrb[0].mxu0
  %882 = vdwg.mxu0
  %s883 = scalar_lea.vmem %s6, 40
  %v884 = vld [vmem:[%s883] sm:$0xff]
  %v885 = vld [vmem:[%s883 + $0x8] sm:$0xff]
  %v886 = vld [vmem:[%s883 + $0x10] sm:$0xff]
  %v887 = vld [vmem:[%s883 + $0x18] sm:$0xff]
  %v888 = vld [vmem:[%s883 + $0x20] sm:$0xff]
  %vm889 = vcmask 326656
  %v891 = vsel %vm889, %v880, 0
  %893 = vmatprep.subr.mxu0 0.0
  %894 = vmatpush1.msra.mxu0 %v884
  %895 = vmatprep.subr.mxu0 0.0
  %896 = vmatpush1.msra.mxu0 %v885
  %897 = vmatprep.subr.mxu0 0.0
  %898 = vmatpush1.msra.mxu0 %v886
  %899 = vmatprep.subr.mxu0 0.0
  %900 = vmatpush1.msra.mxu0 %v887
  %901 = vmatprep.subr.mxu0 0.0
  %902 = vmatpush1.msra.mxu0 %v888
  %903 = vmatprep.subr.mxu0 0.0
  %904 = vmatpush1.msra.mxu0 0.0
  %905 = vmatprep.subr.mxu0 0.0
  %906 = vmatpush1.msra.mxu0 0.0
  %907 = vmatprep.subr.mxu0 0.0
  %908 = vmatpush1.msra.mxu0 0.0
  %909 = vmatprep.subr.mxu0 0.0
  %910 = vmatpush1.msra.mxu0 0.0
  %911 = vmatprep.subr.mxu0 0.0
  %912 = vmatpush1.msra.mxu0 0.0
  %913 = vmatprep.subr.mxu0 0.0
  %914 = vmatpush1.msra.mxu0 0.0
  %915 = vmatprep.subr.mxu0 0.0
  %916 = vmatpush1.msra.mxu0 0.0
  %917 = vmatprep.subr.mxu0 0.0
  %918 = vmatpush1.msra.mxu0 0.0
  %919 = vmatprep.subr.mxu0 0.0
  %920 = vmatpush1.msra.mxu0 0.0
  %921 = vmatprep.subr.mxu0 0.0
  %922 = vmatpush1.msra.mxu0 0.0
  %923 = vmatprep.subr.mxu0 0.0
  %924 = vmatpush1.msra.mxu0 0.0
  %925 = vmatprep.subr.mxu0 0.0
  %926 = vmatpush1.msra.mxu0 0.0
  %927 = vmatprep.subr.mxu0 0.0
  %928 = vmatpush1.msra.mxu0 0.0
  %929 = vmatprep.subr.mxu0 0.0
  %930 = vmatpush1.msra.mxu0 0.0
  %931 = vmatprep.subr.mxu0 0.0
  %932 = vmatpush1.msra.mxu0 0.0
  %933 = vmatprep.subr.mxu0 0.0
  %934 = vmatpush1.msra.mxu0 0.0
  %935 = vmatprep.subr.mxu0 0.0
  %936 = vmatpush1.msra.mxu0 0.0
  %937 = vmatprep.subr.mxu0 0.0
  %938 = vmatpush1.msra.mxu0 0.0
  %939 = vmatprep.subr.mxu0 0.0
  %940 = vmatpush1.msra.mxu0 0.0
  %941 = vmatprep.subr.mxu0 0.0
  %942 = vmatpush1.msra.mxu0 0.0
  %943 = vmatprep.subr.mxu0 0.0
  %944 = vmatpush1.msra.mxu0 0.0
  %945 = vmatprep.subr.mxu0 0.0
  %946 = vmatpush1.msra.mxu0 0.0
  %947 = vmatprep.subr.mxu0 0.0
  %948 = vmatpush1.msra.mxu0 0.0
  %949 = vmatprep.subr.mxu0 0.0
  %950 = vmatpush1.msra.mxu0 0.0
  %951 = vmatprep.subr.mxu0 0.0
  %952 = vmatpush1.msra.mxu0 0.0
  %953 = vmatprep.subr.mxu0 0.0
  %954 = vmatpush1.msra.mxu0 0.0
  %955 = vmatprep.subr.mxu0 0.0
  %956 = vmatpush1.msra.mxu0 0.0
  %957 = vmatprep.mubr.f32.mxu0 0.0
  %958 = vmatmul.mubr.f32.gmra.mrb[0].mxu0 %v891
  %v959 = vpop.f32.mrb[0].mxu0
  %v960 = vadd.f32 0.0, %v959
  %v961 = vpop.f32.mrb[0].mxu0
  %962 = vdwg.mxu0
  %v964 = vsel %vm889, %v800, 0
  %966 = vmatprep.subr.mxu0 0.0
  %967 = vmatpush1.msra.mxu0 %v803
  %968 = vmatprep.subr.mxu0 0.0
  %969 = vmatpush1.msra.mxu0 %v804
  %970 = vmatprep.subr.mxu0 0.0
  %971 = vmatpush1.msra.mxu0 %v805
  %972 = vmatprep.subr.mxu0 0.0
  %973 = vmatpush1.msra.mxu0 %v806
  %974 = vmatprep.subr.mxu0 0.0
  %975 = vmatpush1.msra.mxu0 %v807
  %976 = vmatprep.subr.mxu0 0.0
  %977 = vmatpush1.msra.mxu0 0.0
  %978 = vmatprep.subr.mxu0 0.0
  %979 = vmatpush1.msra.mxu0 0.0
  %980 = vmatprep.subr.mxu0 0.0
  %981 = vmatpush1.msra.mxu0 0.0
  %982 = vmatprep.subr.mxu0 0.0
  %983 = vmatpush1.msra.mxu0 0.0
  %984 = vmatprep.subr.mxu0 0.0
  %985 = vmatpush1.msra.mxu0 0.0
  %986 = vmatprep.subr.mxu0 0.0
  %987 = vmatpush1.msra.mxu0 0.0
  %988 = vmatprep.subr.mxu0 0.0
  %989 = vmatpush1.msra.mxu0 0.0
  %990 = vmatprep.subr.mxu0 0.0
  %991 = vmatpush1.msra.mxu0 0.0
  %992 = vmatprep.subr.mxu0 0.0
  %993 = vmatpush1.msra.mxu0 0.0
  %994 = vmatprep.subr.mxu0 0.0
  %995 = vmatpush1.msra.mxu0 0.0
  %996 = vmatprep.subr.mxu0 0.0
  %997 = vmatpush1.msra.mxu0 0.0
  %998 = vmatprep.subr.mxu0 0.0
  %999 = vmatpush1.msra.mxu0 0.0
  %1000 = vmatprep.subr.mxu0 0.0
  %1001 = vmatpush1.msra.mxu0 0.0
  %1002 = vmatprep.subr.mxu0 0.0
  %1003 = vmatpush1.msra.mxu0 0.0
  %1004 = vmatprep.subr.mxu0 0.0
  %1005 = vmatpush1.msra.mxu0 0.0
  %1006 = vmatprep.subr.mxu0 0.0
  %1007 = vmatpush1.msra.mxu0 0.0
  %1008 = vmatprep.subr.mxu0 0.0
  %1009 = vmatpush1.msra.mxu0 0.0
  %1010 = vmatprep.subr.mxu0 0.0
  %1011 = vmatpush1.msra.mxu0 0.0
  %1012 = vmatprep.subr.mxu0 0.0
  %1013 = vmatpush1.msra.mxu0 0.0
  %1014 = vmatprep.subr.mxu0 0.0
  %1015 = vmatpush1.msra.mxu0 0.0
  %1016 = vmatprep.subr.mxu0 0.0
  %1017 = vmatpush1.msra.mxu0 0.0
  %1018 = vmatprep.subr.mxu0 0.0
  %1019 = vmatpush1.msra.mxu0 0.0
  %1020 = vmatprep.subr.mxu0 0.0
  %1021 = vmatpush1.msra.mxu0 0.0
  %1022 = vmatprep.subr.mxu0 0.0
  %1023 = vmatpush1.msra.mxu0 0.0
  %1024 = vmatprep.subr.mxu0 0.0
  %1025 = vmatpush1.msra.mxu0 0.0
  %1026 = vmatprep.subr.mxu0 0.0
  %1027 = vmatpush1.msra.mxu0 0.0
  %1028 = vmatprep.subr.mxu0 0.0
  %1029 = vmatpush1.msra.mxu0 0.0
  %1030 = vmatprep.mubr.f32.mxu0 0.0
  %1031 = vmatmul.mubr.f32.gmra.mrb[0].mxu0 %v964
  %v1032 = vpop.f32.mrb[0].mxu0
  %v1033 = vadd.f32 %v960, %v1032
  %v1034 = vpop.f32.mrb[0].mxu0
  %1035 = vdwg.mxu0
  %s1036 = scalar_lea.vmem %s5, 8
  %v1037 = vld [vmem:[%s1036] sm:$0xf]
  %v1039 = vsel %vm729, %v1037, 0
  %1041 = vmatprep.subr.mxu0 0.0
  %1042 = vmatpush1.msra.mxu0 %v710
  %1043 = vmatprep.subr.mxu0 0.0
  %1044 = vmatpush1.msra.mxu0 %v715
  %1045 = vmatprep.subr.mxu0 0.0
  %1046 = vmatpush1.msra.mxu0 %v720
  %1047 = vmatprep.subr.mxu0 0.0
  %1048 = vmatpush1.msra.mxu0 %v725
  %1049 = vmatprep.subr.mxu0 0.0
  %1050 = vmatpush1.msra.mxu0 0.0
  %1051 = vmatprep.subr.mxu0 0.0
  %1052 = vmatpush1.msra.mxu0 0.0
  %1053 = vmatprep.subr.mxu0 0.0
  %1054 = vmatpush1.msra.mxu0 0.0
  %1055 = vmatprep.subr.mxu0 0.0
  %1056 = vmatpush1.msra.mxu0 0.0
  %1057 = vmatprep.subr.mxu0 0.0
  %1058 = vmatpush1.msra.mxu0 0.0
  %1059 = vmatprep.subr.mxu0 0.0
  %1060 = vmatpush1.msra.mxu0 0.0
  %1061 = vmatprep.subr.mxu0 0.0
  %1062 = vmatpush1.msra.mxu0 0.0
  %1063 = vmatprep.subr.mxu0 0.0
  %1064 = vmatpush1.msra.mxu0 0.0
  %1065 = vmatprep.subr.mxu0 0.0
  %1066 = vmatpush1.msra.mxu0 0.0
  %1067 = vmatprep.subr.mxu0 0.0
  %1068 = vmatpush1.msra.mxu0 0.0
  %1069 = vmatprep.subr.mxu0 0.0
  %1070 = vmatpush1.msra.mxu0 0.0
  %1071 = vmatprep.subr.mxu0 0.0
  %1072 = vmatpush1.msra.mxu0 0.0
  %1073 = vmatprep.subr.mxu0 0.0
  %1074 = vmatpush1.msra.mxu0 0.0
  %1075 = vmatprep.subr.mxu0 0.0
  %1076 = vmatpush1.msra.mxu0 0.0
  %1077 = vmatprep.subr.mxu0 0.0
  %1078 = vmatpush1.msra.mxu0 0.0
  %1079 = vmatprep.subr.mxu0 0.0
  %1080 = vmatpush1.msra.mxu0 0.0
  %1081 = vmatprep.subr.mxu0 0.0
  %1082 = vmatpush1.msra.mxu0 0.0
  %1083 = vmatprep.subr.mxu0 0.0
  %1084 = vmatpush1.msra.mxu0 0.0
  %1085 = vmatprep.subr.mxu0 0.0
  %1086 = vmatpush1.msra.mxu0 0.0
  %1087 = vmatprep.subr.mxu0 0.0
  %1088 = vmatpush1.msra.mxu0 0.0
  %1089 = vmatprep.subr.mxu0 0.0
  %1090 = vmatpush1.msra.mxu0 0.0
  %1091 = vmatprep.subr.mxu0 0.0
  %1092 = vmatpush1.msra.mxu0 0.0
  %1093 = vmatprep.subr.mxu0 0.0
  %1094 = vmatpush1.msra.mxu0 0.0
  %1095 = vmatprep.subr.mxu0 0.0
  %1096 = vmatpush1.msra.mxu0 0.0
  %1097 = vmatprep.subr.mxu0 0.0
  %1098 = vmatpush1.msra.mxu0 0.0
  %1099 = vmatprep.subr.mxu0 0.0
  %1100 = vmatpush1.msra.mxu0 0.0
  %1101 = vmatprep.subr.mxu0 0.0
  %1102 = vmatpush1.msra.mxu0 0.0
  %1103 = vmatprep.subr.mxu0 0.0
  %1104 = vmatpush1.msra.mxu0 0.0
  %1105 = vmatprep.mubr.f32.mxu0 0.0
  %1106 = vmatmul.mubr.f32.gmra.mrb[0].mxu0 %v1039
  %v1107 = vpop.f32.mrb[0].mxu0
  %v1108 = vadd.f32 0.0, %v1107
  %v1109 = vpop.f32.mrb[0].mxu0
  %1110 = vdwg.mxu0
  %s1111 = scalar_lea.vmem %s6, 80
  %v1112 = vld [vmem:[%s1111] sm:$0xff]
  %v1113 = vld [vmem:[%s1111 + $0x8] sm:$0xff]
  %v1114 = vld [vmem:[%s1111 + $0x10] sm:$0xff]
  %v1115 = vld [vmem:[%s1111 + $0x18] sm:$0xff]
  %v1116 = vld [vmem:[%s1111 + $0x20] sm:$0xff]
  %v1118 = vsel %vm889, %v1108, 0
  %1120 = vmatprep.subr.mxu0 0.0
  %1121 = vmatpush1.msra.mxu0 %v1112
  %1122 = vmatprep.subr.mxu0 0.0
  %1123 = vmatpush1.msra.mxu0 %v1113
  %1124 = vmatprep.subr.mxu0 0.0
  %1125 = vmatpush1.msra.mxu0 %v1114
  %1126 = vmatprep.subr.mxu0 0.0
  %1127 = vmatpush1.msra.mxu0 %v1115
  %1128 = vmatprep.subr.mxu0 0.0
  %1129 = vmatpush1.msra.mxu0 %v1116
  %1130 = vmatprep.subr.mxu0 0.0
  %1131 = vmatpush1.msra.mxu0 0.0
  %1132 = vmatprep.subr.mxu0 0.0
  %1133 = vmatpush1.msra.mxu0 0.0
  %1134 = vmatprep.subr.mxu0 0.0
  %1135 = vmatpush1.msra.mxu0 0.0
  %1136 = vmatprep.subr.mxu0 0.0
  %1137 = vmatpush1.msra.mxu0 0.0
  %1138 = vmatprep.subr.mxu0 0.0
  %1139 = vmatpush1.msra.mxu0 0.0
  %1140 = vmatprep.subr.mxu0 0.0
  %1141 = vmatpush1.msra.mxu0 0.0
  %1142 = vmatprep.subr.mxu0 0.0
  %1143 = vmatpush1.msra.mxu0 0.0
  %1144 = vmatprep.subr.mxu0 0.0
  %1145 = vmatpush1.msra.mxu0 0.0
  %1146 = vmatprep.subr.mxu0 0.0
  %1147 = vmatpush1.msra.mxu0 0.0
  %1148 = vmatprep.subr.mxu0 0.0
  %1149 = vmatpush1.msra.mxu0 0.0
  %1150 = vmatprep.subr.mxu0 0.0
  %1151 = vmatpush1.msra.mxu0 0.0
  %1152 = vmatprep.subr.mxu0 0.0
  %1153 = vmatpush1.msra.mxu0 0.0
  %1154 = vmatprep.subr.mxu0 0.0
  %1155 = vmatpush1.msra.mxu0 0.0
  %1156 = vmatprep.subr.mxu0 0.0
  %1157 = vmatpush1.msra.mxu0 0.0
  %1158 = vmatprep.subr.mxu0 0.0
  %1159 = vmatpush1.msra.mxu0 0.0
  %1160 = vmatprep.subr.mxu0 0.0
  %1161 = vmatpush1.msra.mxu0 0.0
  %1162 = vmatprep.subr.mxu0 0.0
  %1163 = vmatpush1.msra.mxu0 0.0
  %1164 = vmatprep.subr.mxu0 0.0
  %1165 = vmatpush1.msra.mxu0 0.0
  %1166 = vmatprep.subr.mxu0 0.0
  %1167 = vmatpush1.msra.mxu0 0.0
  %1168 = vmatprep.subr.mxu0 0.0
  %1169 = vmatpush1.msra.mxu0 0.0
  %1170 = vmatprep.subr.mxu0 0.0
  %1171 = vmatpush1.msra.mxu0 0.0
  %1172 = vmatprep.subr.mxu0 0.0
  %1173 = vmatpush1.msra.mxu0 0.0
  %1174 = vmatprep.subr.mxu0 0.0
  %1175 = vmatpush1.msra.mxu0 0.0
  %1176 = vmatprep.subr.mxu0 0.0
  %1177 = vmatpush1.msra.mxu0 0.0
  %1178 = vmatprep.subr.mxu0 0.0
  %1179 = vmatpush1.msra.mxu0 0.0
  %1180 = vmatprep.subr.mxu0 0.0
  %1181 = vmatpush1.msra.mxu0 0.0
  %1182 = vmatprep.subr.mxu0 0.0
  %1183 = vmatpush1.msra.mxu0 0.0
  %1184 = vmatprep.mubr.f32.mxu0 0.0
  %1185 = vmatmul.mubr.f32.gmra.mrb[0].mxu0 %v1118
  %v1186 = vpop.f32.mrb[0].mxu0
  %v1187 = vadd.f32 0.0, %v1186
  %v1188 = vpop.f32.mrb[0].mxu0
  %1189 = vdwg.mxu0
  %v1190 = vadd.f32 %v1033, %v1187
  %s1191 = scalar_lea.vmem %s5, 12
  %v1192 = vld [vmem:[%s1191] sm:$0xf]
  %v1194 = vsel %vm729, %v1192, 0
  %1196 = vmatprep.subr.mxu0 0.0
  %1197 = vmatpush1.msra.mxu0 %v710
  %1198 = vmatprep.subr.mxu0 0.0
  %1199 = vmatpush1.msra.mxu0 %v715
  %1200 = vmatprep.subr.mxu0 0.0
  %1201 = vmatpush1.msra.mxu0 %v720
  %1202 = vmatprep.subr.mxu0 0.0
  %1203 = vmatpush1.msra.mxu0 %v725
  %1204 = vmatprep.subr.mxu0 0.0
  %1205 = vmatpush1.msra.mxu0 0.0
  %1206 = vmatprep.subr.mxu0 0.0
  %1207 = vmatpush1.msra.mxu0 0.0
  %1208 = vmatprep.subr.mxu0 0.0
  %1209 = vmatpush1.msra.mxu0 0.0
  %1210 = vmatprep.subr.mxu0 0.0
  %1211 = vmatpush1.msra.mxu0 0.0
  %1212 = vmatprep.subr.mxu0 0.0
  %1213 = vmatpush1.msra.mxu0 0.0
  %1214 = vmatprep.subr.mxu0 0.0
  %1215 = vmatpush1.msra.mxu0 0.0
  %1216 = vmatprep.subr.mxu0 0.0
  %1217 = vmatpush1.msra.mxu0 0.0
  %1218 = vmatprep.subr.mxu0 0.0
  %1219 = vmatpush1.msra.mxu0 0.0
  %1220 = vmatprep.subr.mxu0 0.0
  %1221 = vmatpush1.msra.mxu0 0.0
  %1222 = vmatprep.subr.mxu0 0.0
  %1223 = vmatpush1.msra.mxu0 0.0
  %1224 = vmatprep.subr.mxu0 0.0
  %1225 = vmatpush1.msra.mxu0 0.0
  %1226 = vmatprep.subr.mxu0 0.0
  %1227 = vmatpush1.msra.mxu0 0.0
  %1228 = vmatprep.subr.mxu0 0.0
  %1229 = vmatpush1.msra.mxu0 0.0
  %1230 = vmatprep.subr.mxu0 0.0
  %1231 = vmatpush1.msra.mxu0 0.0
  %1232 = vmatprep.subr.mxu0 0.0
  %1233 = vmatpush1.msra.mxu0 0.0
  %1234 = vmatprep.subr.mxu0 0.0
  %1235 = vmatpush1.msra.mxu0 0.0
  %1236 = vmatprep.subr.mxu0 0.0
  %1237 = vmatpush1.msra.mxu0 0.0
  %1238 = vmatprep.subr.mxu0 0.0
  %1239 = vmatpush1.msra.mxu0 0.0
  %1240 = vmatprep.subr.mxu0 0.0
  %1241 = vmatpush1.msra.mxu0 0.0
  %1242 = vmatprep.subr.mxu0 0.0
  %1243 = vmatpush1.msra.mxu0 0.0
  %1244 = vmatprep.subr.mxu0 0.0
  %1245 = vmatpush1.msra.mxu0 0.0
  %1246 = vmatprep.subr.mxu0 0.0
  %1247 = vmatpush1.msra.mxu0 0.0
  %1248 = vmatprep.subr.mxu0 0.0
  %1249 = vmatpush1.msra.mxu0 0.0
  %1250 = vmatprep.subr.mxu0 0.0
  %1251 = vmatpush1.msra.mxu0 0.0
  %1252 = vmatprep.subr.mxu0 0.0
  %1253 = vmatpush1.msra.mxu0 0.0
  %1254 = vmatprep.subr.mxu0 0.0
  %1255 = vmatpush1.msra.mxu0 0.0
  %1256 = vmatprep.subr.mxu0 0.0
  %1257 = vmatpush1.msra.mxu0 0.0
  %1258 = vmatprep.subr.mxu0 0.0
  %1259 = vmatpush1.msra.mxu0 0.0
  %1260 = vmatprep.mubr.f32.mxu0 0.0
  %1261 = vmatmul.mubr.f32.gmra.mrb[0].mxu0 %v1194
  %v1262 = vpop.f32.mrb[0].mxu0
  %v1263 = vadd.f32 0.0, %v1262
  %v1264 = vpop.f32.mrb[0].mxu0
  %1265 = vdwg.mxu0
  %s1266 = scalar_lea.vmem %s6, 120
  %v1267 = vld [vmem:[%s1266] sm:$0xff]
  %v1268 = vld [vmem:[%s1266 + $0x8] sm:$0xff]
  %v1269 = vld [vmem:[%s1266 + $0x10] sm:$0xff]
  %v1270 = vld [vmem:[%s1266 + $0x18] sm:$0xff]
  %v1271 = vld [vmem:[%s1266 + $0x20] sm:$0xff]
  %v1273 = vsel %vm889, %v1263, 0
  %1275 = vmatprep.subr.mxu0 0.0
  %1276 = vmatpush1.msra.mxu0 %v1267
  %1277 = vmatprep.subr.mxu0 0.0
  %1278 = vmatpush1.msra.mxu0 %v1268
  %1279 = vmatprep.subr.mxu0 0.0
  %1280 = vmatpush1.msra.mxu0 %v1269
  %1281 = vmatprep.subr.mxu0 0.0
  %1282 = vmatpush1.msra.mxu0 %v1270
  %1283 = vmatprep.subr.mxu0 0.0
  %1284 = vmatpush1.msra.mxu0 %v1271
  %1285 = vmatprep.subr.mxu0 0.0
  %1286 = vmatpush1.msra.mxu0 0.0
  %1287 = vmatprep.subr.mxu0 0.0
  %1288 = vmatpush1.msra.mxu0 0.0
  %1289 = vmatprep.subr.mxu0 0.0
  %1290 = vmatpush1.msra.mxu0 0.0
  %1291 = vmatprep.subr.mxu0 0.0
  %1292 = vmatpush1.msra.mxu0 0.0
  %1293 = vmatprep.subr.mxu0 0.0
  %1294 = vmatpush1.msra.mxu0 0.0
  %1295 = vmatprep.subr.mxu0 0.0
  %1296 = vmatpush1.msra.mxu0 0.0
  %1297 = vmatprep.subr.mxu0 0.0
  %1298 = vmatpush1.msra.mxu0 0.0
  %1299 = vmatprep.subr.mxu0 0.0
  %1300 = vmatpush1.msra.mxu0 0.0
  %1301 = vmatprep.subr.mxu0 0.0
  %1302 = vmatpush1.msra.mxu0 0.0
  %1303 = vmatprep.subr.mxu0 0.0
  %1304 = vmatpush1.msra.mxu0 0.0
  %1305 = vmatprep.subr.mxu0 0.0
  %1306 = vmatpush1.msra.mxu0 0.0
  %1307 = vmatprep.subr.mxu0 0.0
  %1308 = vmatpush1.msra.mxu0 0.0
  %1309 = vmatprep.subr.mxu0 0.0
  %1310 = vmatpush1.msra.mxu0 0.0
  %1311 = vmatprep.subr.mxu0 0.0
  %1312 = vmatpush1.msra.mxu0 0.0
  %1313 = vmatprep.subr.mxu0 0.0
  %1314 = vmatpush1.msra.mxu0 0.0
  %1315 = vmatprep.subr.mxu0 0.0
  %1316 = vmatpush1.msra.mxu0 0.0
  %1317 = vmatprep.subr.mxu0 0.0
  %1318 = vmatpush1.msra.mxu0 0.0
  %1319 = vmatprep.subr.mxu0 0.0
  %1320 = vmatpush1.msra.mxu0 0.0
  %1321 = vmatprep.subr.mxu0 0.0
  %1322 = vmatpush1.msra.mxu0 0.0
  %1323 = vmatprep.subr.mxu0 0.0
  %1324 = vmatpush1.msra.mxu0 0.0
  %1325 = vmatprep.subr.mxu0 0.0
  %1326 = vmatpush1.msra.mxu0 0.0
  %1327 = vmatprep.subr.mxu0 0.0
  %1328 = vmatpush1.msra.mxu0 0.0
  %1329 = vmatprep.subr.mxu0 0.0
  %1330 = vmatpush1.msra.mxu0 0.0
  %1331 = vmatprep.subr.mxu0 0.0
  %1332 = vmatpush1.msra.mxu0 0.0
  %1333 = vmatprep.subr.mxu0 0.0
  %1334 = vmatpush1.msra.mxu0 0.0
  %1335 = vmatprep.subr.mxu0 0.0
  %1336 = vmatpush1.msra.mxu0 0.0
  %1337 = vmatprep.subr.mxu0 0.0
  %1338 = vmatpush1.msra.mxu0 0.0
  %1339 = vmatprep.mubr.f32.mxu0 0.0
  %1340 = vmatmul.mubr.f32.gmra.mrb[0].mxu0 %v1273
  %v1341 = vpop.f32.mrb[0].mxu0
  %v1342 = vadd.f32 0.0, %v1341
  %v1343 = vpop.f32.mrb[0].mxu0
  %1344 = vdwg.mxu0
  %v1345 = vadd.f32 %v1190, %v1342
  %s1346 = scalar_lea.vmem %s2, 16
  %v1347 = vld [vmem:[%s1346] sm:$0xf]
  %v1348 = vld [vmem:[%s1346 + $0x4] sm:$0xf]
  %v1349 = vld [vmem:[%s1346 + $0x8] sm:$0xf]
  %v1350 = vld [vmem:[%s1346 + $0xc] sm:$0xf]
  %s1351 = scalar_lea.vmem %s0, 32
  %v1352 = vld [vmem:[%s1351] sm:$0xf]
  %v1353 = vld [vmem:[%s1351 + $0x4] sm:$0xf]
  %v1354 = vld [vmem:[%s1351 + $0x8] sm:$0xf]
  %v1355 = vld [vmem:[%s1351 + $0xc] sm:$0xf]
  %v1356 = vld [vmem:[%s1351 + $0x10] sm:$0xf]
  %v1357 = vld [vmem:[%s1351 + $0x14] sm:$0xf]
  %v1358 = vld [vmem:[%s1351 + $0x18] sm:$0xf]
  %v1359 = vld [vmem:[%s1351 + $0x1c] sm:$0xf]
  %v1362 = vunpack.c.l.b16 %v1352
  %v1363 = vunpack.c.l.b16 %v1353
  %v1364 = vpack.c.b16 %v1363, %v1362
  %v1367 = vsel %vm64, %v1347, 0
  %1369 = vmatprep.subr.bf16.mxu0 0
  %1370 = vmatpush1.bf16.msra.mxu0 %v1364
  %1371 = vmatprep.subr.bf16.mxu0 0
  %1372 = vmatpush1.bf16.msra.mxu0 0
  %1373 = vmatprep.subr.bf16.mxu0 0
  %1374 = vmatpush1.bf16.msra.mxu0 0
  %1375 = vmatprep.subr.bf16.mxu0 0
  %1376 = vmatpush1.bf16.msra.mxu0 0
  %1377 = vmatprep.subr.bf16.mxu0 0
  %1378 = vmatpush1.bf16.msra.mxu0 0
  %1379 = vmatprep.subr.bf16.mxu0 0
  %1380 = vmatpush1.bf16.msra.mxu0 0
  %1381 = vmatprep.subr.bf16.mxu0 0
  %1382 = vmatpush1.bf16.msra.mxu0 0
  %1383 = vmatprep.subr.bf16.mxu0 0
  %1384 = vmatpush1.bf16.msra.mxu0 0
  %1385 = vmatprep.subr.bf16.mxu0 0
  %1386 = vmatpush1.bf16.msra.mxu0 0
  %1387 = vmatprep.subr.bf16.mxu0 0
  %1388 = vmatpush1.bf16.msra.mxu0 0
  %1389 = vmatprep.subr.bf16.mxu0 0
  %1390 = vmatpush1.bf16.msra.mxu0 0
  %1391 = vmatprep.subr.bf16.mxu0 0
  %1392 = vmatpush1.bf16.msra.mxu0 0
  %1393 = vmatprep.subr.bf16.mxu0 0
  %1394 = vmatpush1.bf16.msra.mxu0 0
  %1395 = vmatprep.subr.bf16.mxu0 0
  %1396 = vmatpush1.bf16.msra.mxu0 0
  %1397 = vmatprep.subr.bf16.mxu0 0
  %1398 = vmatpush1.bf16.msra.mxu0 0
  %1399 = vmatprep.subr.bf16.mxu0 0
  %1400 = vmatpush1.bf16.msra.mxu0 0
  %1401 = vmatprep.mubr.bf16.mxu0 0
  %1402 = vmatmul.mubr.bf16.gmra.mrb[0].mxu0 %v1367
  %v1403 = vpop.f32.mrb[0].mxu0
  %v1404 = vadd.f32 0.0, %v1403
  %v1405 = vpop.f32.mrb[0].mxu0
  %v1406 = vpop.f32.mrb[0].mxu0
  %v1407 = vpop.f32.mrb[0].mxu0
  %1408 = vdwg.mxu0
  %v1411 = vunpack.c.l.b16 %v1354
  %v1412 = vunpack.c.l.b16 %v1355
  %v1413 = vpack.c.b16 %v1412, %v1411
  %v1416 = vsel %vm64, %v1348, 0
  %1418 = vmatprep.subr.bf16.mxu0 0
  %1419 = vmatpush1.bf16.msra.mxu0 %v1413
  %1420 = vmatprep.subr.bf16.mxu0 0
  %1421 = vmatpush1.bf16.msra.mxu0 0
  %1422 = vmatprep.subr.bf16.mxu0 0
  %1423 = vmatpush1.bf16.msra.mxu0 0
  %1424 = vmatprep.subr.bf16.mxu0 0
  %1425 = vmatpush1.bf16.msra.mxu0 0
  %1426 = vmatprep.subr.bf16.mxu0 0
  %1427 = vmatpush1.bf16.msra.mxu0 0
  %1428 = vmatprep.subr.bf16.mxu0 0
  %1429 = vmatpush1.bf16.msra.mxu0 0
  %1430 = vmatprep.subr.bf16.mxu0 0
  %1431 = vmatpush1.bf16.msra.mxu0 0
  %1432 = vmatprep.subr.bf16.mxu0 0
  %1433 = vmatpush1.bf16.msra.mxu0 0
  %1434 = vmatprep.subr.bf16.mxu0 0
  %1435 = vmatpush1.bf16.msra.mxu0 0
  %1436 = vmatprep.subr.bf16.mxu0 0
  %1437 = vmatpush1.bf16.msra.mxu0 0
  %1438 = vmatprep.subr.bf16.mxu0 0
  %1439 = vmatpush1.bf16.msra.mxu0 0
  %1440 = vmatprep.subr.bf16.mxu0 0
  %1441 = vmatpush1.bf16.msra.mxu0 0
  %1442 = vmatprep.subr.bf16.mxu0 0
  %1443 = vmatpush1.bf16.msra.mxu0 0
  %1444 = vmatprep.subr.bf16.mxu0 0
  %1445 = vmatpush1.bf16.msra.mxu0 0
  %1446 = vmatprep.subr.bf16.mxu0 0
  %1447 = vmatpush1.bf16.msra.mxu0 0
  %1448 = vmatprep.subr.bf16.mxu0 0
  %1449 = vmatpush1.bf16.msra.mxu0 0
  %1450 = vmatprep.mubr.bf16.mxu0 0
  %1451 = vmatmul.mubr.bf16.gmra.mrb[0].mxu0 %v1416
  %v1452 = vpop.f32.mrb[0].mxu0
  %v1453 = vadd.f32 0.0, %v1452
  %v1454 = vpop.f32.mrb[0].mxu0
  %v1455 = vpop.f32.mrb[0].mxu0
  %v1456 = vpop.f32.mrb[0].mxu0
  %1457 = vdwg.mxu0
  %v1460 = vunpack.c.l.b16 %v1356
  %v1461 = vunpack.c.l.b16 %v1357
  %v1462 = vpack.c.b16 %v1461, %v1460
  %v1465 = vsel %vm64, %v1349, 0
  %1467 = vmatprep.subr.bf16.mxu0 0
  %1468 = vmatpush1.bf16.msra.mxu0 %v1462
  %1469 = vmatprep.subr.bf16.mxu0 0
  %1470 = vmatpush1.bf16.msra.mxu0 0
  %1471 = vmatprep.subr.bf16.mxu0 0
  %1472 = vmatpush1.bf16.msra.mxu0 0
  %1473 = vmatprep.subr.bf16.mxu0 0
  %1474 = vmatpush1.bf16.msra.mxu0 0
  %1475 = vmatprep.subr.bf16.mxu0 0
  %1476 = vmatpush1.bf16.msra.mxu0 0
  %1477 = vmatprep.subr.bf16.mxu0 0
  %1478 = vmatpush1.bf16.msra.mxu0 0
  %1479 = vmatprep.subr.bf16.mxu0 0
  %1480 = vmatpush1.bf16.msra.mxu0 0
  %1481 = vmatprep.subr.bf16.mxu0 0
  %1482 = vmatpush1.bf16.msra.mxu0 0
  %1483 = vmatprep.subr.bf16.mxu0 0
  %1484 = vmatpush1.bf16.msra.mxu0 0
  %1485 = vmatprep.subr.bf16.mxu0 0
  %1486 = vmatpush1.bf16.msra.mxu0 0
  %1487 = vmatprep.subr.bf16.mxu0 0
  %1488 = vmatpush1.bf16.msra.mxu0 0
  %1489 = vmatprep.subr.bf16.mxu0 0
  %1490 = vmatpush1.bf16.msra.mxu0 0
  %1491 = vmatprep.subr.bf16.mxu0 0
  %1492 = vmatpush1.bf16.msra.mxu0 0
  %1493 = vmatprep.subr.bf16.mxu0 0
  %1494 = vmatpush1.bf16.msra.mxu0 0
  %1495 = vmatprep.subr.bf16.mxu0 0
  %1496 = vmatpush1.bf16.msra.mxu0 0
  %1497 = vmatprep.subr.bf16.mxu0 0
  %1498 = vmatpush1.bf16.msra.mxu0 0
  %1499 = vmatprep.mubr.bf16.mxu0 0
  %1500 = vmatmul.mubr.bf16.gmra.mrb[0].mxu0 %v1465
  %v1501 = vpop.f32.mrb[0].mxu0
  %v1502 = vadd.f32 0.0, %v1501
  %v1503 = vpop.f32.mrb[0].mxu0
  %v1504 = vpop.f32.mrb[0].mxu0
  %v1505 = vpop.f32.mrb[0].mxu0
  %1506 = vdwg.mxu0
  %v1509 = vunpack.c.l.b16 %v1358
  %v1510 = vunpack.c.l.b16 %v1359
  %v1511 = vpack.c.b16 %v1510, %v1509
  %v1514 = vsel %vm64, %v1350, 0
  %1516 = vmatprep.subr.bf16.mxu0 0
  %1517 = vmatpush1.bf16.msra.mxu0 %v1511
  %1518 = vmatprep.subr.bf16.mxu0 0
  %1519 = vmatpush1.bf16.msra.mxu0 0
  %1520 = vmatprep.subr.bf16.mxu0 0
  %1521 = vmatpush1.bf16.msra.mxu0 0
  %1522 = vmatprep.subr.bf16.mxu0 0
  %1523 = vmatpush1.bf16.msra.mxu0 0
  %1524 = vmatprep.subr.bf16.mxu0 0
  %1525 = vmatpush1.bf16.msra.mxu0 0
  %1526 = vmatprep.subr.bf16.mxu0 0
  %1527 = vmatpush1.bf16.msra.mxu0 0
  %1528 = vmatprep.subr.bf16.mxu0 0
  %1529 = vmatpush1.bf16.msra.mxu0 0
  %1530 = vmatprep.subr.bf16.mxu0 0
  %1531 = vmatpush1.bf16.msra.mxu0 0
  %1532 = vmatprep.subr.bf16.mxu0 0
  %1533 = vmatpush1.bf16.msra.mxu0 0
  %1534 = vmatprep.subr.bf16.mxu0 0
  %1535 = vmatpush1.bf16.msra.mxu0 0
  %1536 = vmatprep.subr.bf16.mxu0 0
  %1537 = vmatpush1.bf16.msra.mxu0 0
  %1538 = vmatprep.subr.bf16.mxu0 0
  %1539 = vmatpush1.bf16.msra.mxu0 0
  %1540 = vmatprep.subr.bf16.mxu0 0
  %1541 = vmatpush1.bf16.msra.mxu0 0
  %1542 = vmatprep.subr.bf16.mxu0 0
  %1543 = vmatpush1.bf16.msra.mxu0 0
  %1544 = vmatprep.subr.bf16.mxu0 0
  %1545 = vmatpush1.bf16.msra.mxu0 0
  %1546 = vmatprep.subr.bf16.mxu0 0
  %1547 = vmatpush1.bf16.msra.mxu0 0
  %1548 = vmatprep.mubr.bf16.mxu0 0
  %1549 = vmatmul.mubr.bf16.gmra.mrb[0].mxu0 %v1514
  %v1550 = vpop.f32.mrb[0].mxu0
  %v1551 = vadd.f32 0.0, %v1550
  %v1552 = vpop.f32.mrb[0].mxu0
  %v1553 = vpop.f32.mrb[0].mxu0
  %v1554 = vpop.f32.mrb[0].mxu0
  %1555 = vdwg.mxu0
  %v1556 = vpack.c.bf16 %v1404, %v1404
  %v1557 = vpack.c.bf16 %v1453, %v1453
  %v1558 = vpack.c.bf16 %v1502, %v1502
  %v1559 = vpack.c.bf16 %v1551, %v1551
  %s1560 = scalar_lea.vmem %s1, 160
  %v1561 = vld [vmem:[%s1560] sm:$0xf]
  %v1562 = vld [vmem:[%s1560 + $0x4] sm:$0xf]
  %v1563 = vld [vmem:[%s1560 + $0x8] sm:$0xf]
  %v1564 = vld [vmem:[%s1560 + $0xc] sm:$0xf]
  %v1565 = vld [vmem:[%s1560 + $0x10] sm:$0xf]
  %v1566 = vld [vmem:[%s1560 + $0x14] sm:$0xf]
  %v1567 = vld [vmem:[%s1560 + $0x18] sm:$0xf]
  %v1568 = vld [vmem:[%s1560 + $0x1c] sm:$0xf]
  %v1569 = vld [vmem:[%s1560 + $0x20] sm:$0xf]
  %v1570 = vld [vmem:[%s1560 + $0x24] sm:$0xf]
  %v1571 = vld [vmem:[%s1560 + $0x28] sm:$0xf]
  %v1572 = vld [vmem:[%s1560 + $0x2c] sm:$0xf]
  %v1573 = vld [vmem:[%s1560 + $0x30] sm:$0xf]
  %v1574 = vld [vmem:[%s1560 + $0x34] sm:$0xf]
  %v1575 = vld [vmem:[%s1560 + $0x38] sm:$0xf]
  %v1576 = vld [vmem:[%s1560 + $0x3c] sm:$0xf]
  %v1577 = vld [vmem:[%s1560 + $0x40] sm:$0xf]
  %v1578 = vld [vmem:[%s1560 + $0x44] sm:$0xf]
  %v1579 = vld [vmem:[%s1560 + $0x48] sm:$0xf]
  %v1580 = vld [vmem:[%s1560 + $0x4c] sm:$0xf]
  %v1581 = vld [vmem:[%s1560 + $0x50] sm:$0xf]
  %v1582 = vld [vmem:[%s1560 + $0x54] sm:$0xf]
  %v1583 = vld [vmem:[%s1560 + $0x58] sm:$0xf]
  %v1584 = vld [vmem:[%s1560 + $0x5c] sm:$0xf]
  %v1585 = vld [vmem:[%s1560 + $0x60] sm:$0xf]
  %v1586 = vld [vmem:[%s1560 + $0x64] sm:$0xf]
  %v1587 = vld [vmem:[%s1560 + $0x68] sm:$0xf]
  %v1588 = vld [vmem:[%s1560 + $0x6c] sm:$0xf]
  %v1589 = vld [vmem:[%s1560 + $0x70] sm:$0xf]
  %v1590 = vld [vmem:[%s1560 + $0x74] sm:$0xf]
  %v1591 = vld [vmem:[%s1560 + $0x78] sm:$0xf]
  %v1592 = vld [vmem:[%s1560 + $0x7c] sm:$0xf]
  %v1593 = vld [vmem:[%s1560 + $0x80] sm:$0xf]
  %v1594 = vld [vmem:[%s1560 + $0x84] sm:$0xf]
  %v1595 = vld [vmem:[%s1560 + $0x88] sm:$0xf]
  %v1596 = vld [vmem:[%s1560 + $0x8c] sm:$0xf]
  %v1597 = vld [vmem:[%s1560 + $0x90] sm:$0xf]
  %v1598 = vld [vmem:[%s1560 + $0x94] sm:$0xf]
  %v1599 = vld [vmem:[%s1560 + $0x98] sm:$0xf]
  %v1600 = vld [vmem:[%s1560 + $0x9c] sm:$0xf]
  %s1601 = scalar_lea.vmem %s3, 8
  %v1602 = vld [vmem:[%s1601] sm:$0xff]
  %v1613 = vunpack.c.l.b16 %v1561
  %v1614 = vunpack.c.l.b16 %v1562
  %v1615 = vunpack.c.l.b16 %v1563
  %v1616 = vunpack.c.l.b16 %v1564
  %v1617 = vunpack.c.l.b16 %v1565
  %v1618 = vunpack.c.l.b16 %v1566
  %v1619 = vunpack.c.l.b16 %v1567
  %v1620 = vunpack.c.l.b16 %v1568
  %v1621 = vunpack.c.l.b16 %v1569
  %v1622 = vunpack.c.l.b16 %v1570
  %v1623 = vpack.c.b16 %v1614, %v1613
  %v1624 = vpack.c.b16 %v1616, %v1615
  %v1625 = vpack.c.b16 %v1618, %v1617
  %v1626 = vpack.c.b16 %v1620, %v1619
  %v1627 = vpack.c.b16 %v1622, %v1621
  %v1634 = vsel %vm330, %v1556, 0
  %1636 = vmatprep.subr.bf16.mxu0 0
  %1637 = vmatpush1.bf16.msra.mxu0 %v1623
  %1638 = vmatprep.subr.bf16.mxu0 0
  %1639 = vmatpush1.bf16.msra.mxu0 %v1624
  %1640 = vmatprep.subr.bf16.mxu0 0
  %1641 = vmatpush1.bf16.msra.mxu0 %v1625
  %1642 = vmatprep.subr.bf16.mxu0 0
  %1643 = vmatpush1.bf16.msra.mxu0 %v1626
  %1644 = vmatprep.subr.bf16.mxu0 0
  %1645 = vmatpush1.bf16.msra.mxu0 %v1627
  %1646 = vmatprep.subr.bf16.mxu0 0
  %1647 = vmatpush1.bf16.msra.mxu0 0
  %1648 = vmatprep.subr.bf16.mxu0 0
  %1649 = vmatpush1.bf16.msra.mxu0 0
  %1650 = vmatprep.subr.bf16.mxu0 0
  %1651 = vmatpush1.bf16.msra.mxu0 0
  %1652 = vmatprep.subr.bf16.mxu0 0
  %1653 = vmatpush1.bf16.msra.mxu0 0
  %1654 = vmatprep.subr.bf16.mxu0 0
  %1655 = vmatpush1.bf16.msra.mxu0 0
  %1656 = vmatprep.subr.bf16.mxu0 0
  %1657 = vmatpush1.bf16.msra.mxu0 0
  %1658 = vmatprep.subr.bf16.mxu0 0
  %1659 = vmatpush1.bf16.msra.mxu0 0
  %1660 = vmatprep.subr.bf16.mxu0 0
  %1661 = vmatpush1.bf16.msra.mxu0 0
  %1662 = vmatprep.subr.bf16.mxu0 0
  %1663 = vmatpush1.bf16.msra.mxu0 0
  %1664 = vmatprep.subr.bf16.mxu0 0
  %1665 = vmatpush1.bf16.msra.mxu0 0
  %1666 = vmatprep.subr.bf16.mxu0 0
  %1667 = vmatpush1.bf16.msra.mxu0 0
  %1668 = vmatprep.mubr.bf16.mxu0 0
  %1669 = vmatmul.mubr.bf16.gmra.mrb[0].mxu0 %v1634
  %v1670 = vpop.f32.mrb[0].mxu0
  %v1671 = vadd.f32 %v1602, %v1670
  %v1672 = vpop.f32.mrb[0].mxu0
  %v1673 = vpop.f32.mrb[0].mxu0
  %v1674 = vpop.f32.mrb[0].mxu0
  %1675 = vdwg.mxu0
  %v1686 = vunpack.c.l.b16 %v1571
  %v1687 = vunpack.c.l.b16 %v1572
  %v1688 = vunpack.c.l.b16 %v1573
  %v1689 = vunpack.c.l.b16 %v1574
  %v1690 = vunpack.c.l.b16 %v1575
  %v1691 = vunpack.c.l.b16 %v1576
  %v1692 = vunpack.c.l.b16 %v1577
  %v1693 = vunpack.c.l.b16 %v1578
  %v1694 = vunpack.c.l.b16 %v1579
  %v1695 = vunpack.c.l.b16 %v1580
  %v1696 = vpack.c.b16 %v1687, %v1686
  %v1697 = vpack.c.b16 %v1689, %v1688
  %v1698 = vpack.c.b16 %v1691, %v1690
  %v1699 = vpack.c.b16 %v1693, %v1692
  %v1700 = vpack.c.b16 %v1695, %v1694
  %v1707 = vsel %vm330, %v1557, 0
  %1709 = vmatprep.subr.bf16.mxu0 0
  %1710 = vmatpush1.bf16.msra.mxu0 %v1696
  %1711 = vmatprep.subr.bf16.mxu0 0
  %1712 = vmatpush1.bf16.msra.mxu0 %v1697
  %1713 = vmatprep.subr.bf16.mxu0 0
  %1714 = vmatpush1.bf16.msra.mxu0 %v1698
  %1715 = vmatprep.subr.bf16.mxu0 0
  %1716 = vmatpush1.bf16.msra.mxu0 %v1699
  %1717 = vmatprep.subr.bf16.mxu0 0
  %1718 = vmatpush1.bf16.msra.mxu0 %v1700
  %1719 = vmatprep.subr.bf16.mxu0 0
  %1720 = vmatpush1.bf16.msra.mxu0 0
  %1721 = vmatprep.subr.bf16.mxu0 0
  %1722 = vmatpush1.bf16.msra.mxu0 0
  %1723 = vmatprep.subr.bf16.mxu0 0
  %1724 = vmatpush1.bf16.msra.mxu0 0
  %1725 = vmatprep.subr.bf16.mxu0 0
  %1726 = vmatpush1.bf16.msra.mxu0 0
  %1727 = vmatprep.subr.bf16.mxu0 0
  %1728 = vmatpush1.bf16.msra.mxu0 0
  %1729 = vmatprep.subr.bf16.mxu0 0
  %1730 = vmatpush1.bf16.msra.mxu0 0
  %1731 = vmatprep.subr.bf16.mxu0 0
  %1732 = vmatpush1.bf16.msra.mxu0 0
  %1733 = vmatprep.subr.bf16.mxu0 0
  %1734 = vmatpush1.bf16.msra.mxu0 0
  %1735 = vmatprep.subr.bf16.mxu0 0
  %1736 = vmatpush1.bf16.msra.mxu0 0
  %1737 = vmatprep.subr.bf16.mxu0 0
  %1738 = vmatpush1.bf16.msra.mxu0 0
  %1739 = vmatprep.subr.bf16.mxu0 0
  %1740 = vmatpush1.bf16.msra.mxu0 0
  %1741 = vmatprep.mubr.bf16.mxu0 0
  %1742 = vmatmul.mubr.bf16.gmra.mrb[0].mxu0 %v1707
  %v1743 = vpop.f32.mrb[0].mxu0
  %v1744 = vadd.f32 %v1602, %v1743
  %v1745 = vpop.f32.mrb[0].mxu0
  %v1746 = vpop.f32.mrb[0].mxu0
  %v1747 = vpop.f32.mrb[0].mxu0
  %1748 = vdwg.mxu0
  %v1759 = vunpack.c.l.b16 %v1581
  %v1760 = vunpack.c.l.b16 %v1582
  %v1761 = vunpack.c.l.b16 %v1583
  %v1762 = vunpack.c.l.b16 %v1584
  %v1763 = vunpack.c.l.b16 %v1585
  %v1764 = vunpack.c.l.b16 %v1586
  %v1765 = vunpack.c.l.b16 %v1587
  %v1766 = vunpack.c.l.b16 %v1588
  %v1767 = vunpack.c.l.b16 %v1589
  %v1768 = vunpack.c.l.b16 %v1590
  %v1769 = vpack.c.b16 %v1760, %v1759
  %v1770 = vpack.c.b16 %v1762, %v1761
  %v1771 = vpack.c.b16 %v1764, %v1763
  %v1772 = vpack.c.b16 %v1766, %v1765
  %v1773 = vpack.c.b16 %v1768, %v1767
  %v1780 = vsel %vm330, %v1558, 0
  %1782 = vmatprep.subr.bf16.mxu0 0
  %1783 = vmatpush1.bf16.msra.mxu0 %v1769
  %1784 = vmatprep.subr.bf16.mxu0 0
  %1785 = vmatpush1.bf16.msra.mxu0 %v1770
  %1786 = vmatprep.subr.bf16.mxu0 0
  %1787 = vmatpush1.bf16.msra.mxu0 %v1771
  %1788 = vmatprep.subr.bf16.mxu0 0
  %1789 = vmatpush1.bf16.msra.mxu0 %v1772
  %1790 = vmatprep.subr.bf16.mxu0 0
  %1791 = vmatpush1.bf16.msra.mxu0 %v1773
  %1792 = vmatprep.subr.bf16.mxu0 0
  %1793 = vmatpush1.bf16.msra.mxu0 0
  %1794 = vmatprep.subr.bf16.mxu0 0
  %1795 = vmatpush1.bf16.msra.mxu0 0
  %1796 = vmatprep.subr.bf16.mxu0 0
  %1797 = vmatpush1.bf16.msra.mxu0 0
  %1798 = vmatprep.subr.bf16.mxu0 0
  %1799 = vmatpush1.bf16.msra.mxu0 0
  %1800 = vmatprep.subr.bf16.mxu0 0
  %1801 = vmatpush1.bf16.msra.mxu0 0
  %1802 = vmatprep.subr.bf16.mxu0 0
  %1803 = vmatpush1.bf16.msra.mxu0 0
  %1804 = vmatprep.subr.bf16.mxu0 0
  %1805 = vmatpush1.bf16.msra.mxu0 0
  %1806 = vmatprep.subr.bf16.mxu0 0
  %1807 = vmatpush1.bf16.msra.mxu0 0
  %1808 = vmatprep.subr.bf16.mxu0 0
  %1809 = vmatpush1.bf16.msra.mxu0 0
  %1810 = vmatprep.subr.bf16.mxu0 0
  %1811 = vmatpush1.bf16.msra.mxu0 0
  %1812 = vmatprep.subr.bf16.mxu0 0
  %1813 = vmatpush1.bf16.msra.mxu0 0
  %1814 = vmatprep.mubr.bf16.mxu0 0
  %1815 = vmatmul.mubr.bf16.gmra.mrb[0].mxu0 %v1780
  %v1816 = vpop.f32.mrb[0].mxu0
  %v1817 = vadd.f32 %v1602, %v1816
  %v1818 = vpop.f32.mrb[0].mxu0
  %v1819 = vpop.f32.mrb[0].mxu0
  %v1820 = vpop.f32.mrb[0].mxu0
  %1821 = vdwg.mxu0
  %v1832 = vunpack.c.l.b16 %v1591
  %v1833 = vunpack.c.l.b16 %v1592
  %v1834 = vunpack.c.l.b16 %v1593
  %v1835 = vunpack.c.l.b16 %v1594
  %v1836 = vunpack.c.l.b16 %v1595
  %v1837 = vunpack.c.l.b16 %v1596
  %v1838 = vunpack.c.l.b16 %v1597
  %v1839 = vunpack.c.l.b16 %v1598
  %v1840 = vunpack.c.l.b16 %v1599
  %v1841 = vunpack.c.l.b16 %v1600
  %v1842 = vpack.c.b16 %v1833, %v1832
  %v1843 = vpack.c.b16 %v1835, %v1834
  %v1844 = vpack.c.b16 %v1837, %v1836
  %v1845 = vpack.c.b16 %v1839, %v1838
  %v1846 = vpack.c.b16 %v1841, %v1840
  %v1853 = vsel %vm330, %v1559, 0
  %1855 = vmatprep.subr.bf16.mxu0 0
  %1856 = vmatpush1.bf16.msra.mxu0 %v1842
  %1857 = vmatprep.subr.bf16.mxu0 0
  %1858 = vmatpush1.bf16.msra.mxu0 %v1843
  %1859 = vmatprep.subr.bf16.mxu0 0
  %1860 = vmatpush1.bf16.msra.mxu0 %v1844
  %1861 = vmatprep.subr.bf16.mxu0 0
  %1862 = vmatpush1.bf16.msra.mxu0 %v1845
  %1863 = vmatprep.subr.bf16.mxu0 0
  %1864 = vmatpush1.bf16.msra.mxu0 %v1846
  %1865 = vmatprep.subr.bf16.mxu0 0
  %1866 = vmatpush1.bf16.msra.mxu0 0
  %1867 = vmatprep.subr.bf16.mxu0 0
  %1868 = vmatpush1.bf16.msra.mxu0 0
  %1869 = vmatprep.subr.bf16.mxu0 0
  %1870 = vmatpush1.bf16.msra.mxu0 0
  %1871 = vmatprep.subr.bf16.mxu0 0
  %1872 = vmatpush1.bf16.msra.mxu0 0
  %1873 = vmatprep.subr.bf16.mxu0 0
  %1874 = vmatpush1.bf16.msra.mxu0 0
  %1875 = vmatprep.subr.bf16.mxu0 0
  %1876 = vmatpush1.bf16.msra.mxu0 0
  %1877 = vmatprep.subr.bf16.mxu0 0
  %1878 = vmatpush1.bf16.msra.mxu0 0
  %1879 = vmatprep.subr.bf16.mxu0 0
  %1880 = vmatpush1.bf16.msra.mxu0 0
  %1881 = vmatprep.subr.bf16.mxu0 0
  %1882 = vmatpush1.bf16.msra.mxu0 0
  %1883 = vmatprep.subr.bf16.mxu0 0
  %1884 = vmatpush1.bf16.msra.mxu0 0
  %1885 = vmatprep.subr.bf16.mxu0 0
  %1886 = vmatpush1.bf16.msra.mxu0 0
  %1887 = vmatprep.mubr.bf16.mxu0 0
  %1888 = vmatmul.mubr.bf16.gmra.mrb[0].mxu0 %v1853
  %v1889 = vpop.f32.mrb[0].mxu0
  %v1890 = vadd.f32 %v1602, %v1889
  %v1891 = vpop.f32.mrb[0].mxu0
  %v1892 = vpop.f32.mrb[0].mxu0
  %v1893 = vpop.f32.mrb[0].mxu0
  %1894 = vdwg.mxu0
  %vm1895 = vcmp.gt.f32.partialorder %v1671, 0.0
  %vm1896 = vcmp.gt.f32.partialorder %v1744, 0.0
  %vm1897 = vcmp.gt.f32.partialorder %v1817, 0.0
  %vm1898 = vcmp.gt.f32.partialorder %v1890, 0.0
  %v1899 = vmul.f32 %v1671, 1.442695
  %v1900 = vpow.pop %v1899
  %v1901 = vmul.f32 %v1744, 1.442695
  %v1902 = vpow.pop %v1901
  %v1903 = vmul.f32 %v1817, 1.442695
  %v1904 = vpow.pop %v1903
  %v1905 = vmul.f32 %v1890, 1.442695
  %v1906 = vpow.pop %v1905
  %v1907 = vsub.f32 %v1900, 1.0
  %v1908 = vsub.f32 %v1902, 1.0
  %v1909 = vsub.f32 %v1904, 1.0
  %v1910 = vsub.f32 %v1906, 1.0
  %v1911 = vmul.f32 %v1907, 1.6732632
  %v1912 = vmul.f32 %v1908, 1.6732632
  %v1913 = vmul.f32 %v1909, 1.6732632
  %v1914 = vmul.f32 %v1910, 1.6732632
  %v1915 = vsel %vm1895, %v1671, %v1911
  %v1916 = vsel %vm1896, %v1744, %v1912
  %v1917 = vsel %vm1897, %v1817, %v1913
  %v1918 = vsel %vm1898, %v1890, %v1914
  %v1919 = vmul.f32 %v1915, 1.050701
  %v1920 = vmul.f32 %v1916, 1.050701
  %v1921 = vmul.f32 %v1917, 1.050701
  %v1922 = vmul.f32 %v1918, 1.050701
  %v1923 = vld [vmem:[%s4] sm:$0xff]
  %v1924 = vld [vmem:[%s4 + $0x8] sm:$0xff]
  %v1925 = vld [vmem:[%s4 + $0x10] sm:$0xff]
  %v1926 = vld [vmem:[%s4 + $0x18] sm:$0xff]
  %v1927 = vld [vmem:[%s4 + $0x20] sm:$0xff]
  %v1928 = vld [vmem:[%s4 + $0x28] sm:$0xff]
  %v1929 = vld [vmem:[%s4 + $0x30] sm:$0xff]
  %v1930 = vld [vmem:[%s4 + $0x38] sm:$0xff]
  %v1931 = vld [vmem:[%s4 + $0x40] sm:$0xff]
  %v1932 = vld [vmem:[%s4 + $0x48] sm:$0xff]
  %v1934 = vsel %vm330, %v1919, 0
  %v1937 = vsel %vm330, %v1920, 0
  %v1940 = vsel %vm330, %v1921, 0
  %v1943 = vsel %vm330, %v1922, 0
  %1945 = vmatprep.subr.mxu0 0.0
  %1946 = vmatpush1.msra.mxu0 %v1923
  %1947 = vmatprep.subr.mxu0 0.0
  %1948 = vmatpush1.msra.mxu0 %v1924
  %1949 = vmatprep.subr.mxu0 0.0
  %1950 = vmatpush1.msra.mxu0 %v1925
  %1951 = vmatprep.subr.mxu0 0.0
  %1952 = vmatpush1.msra.mxu0 %v1926
  %1953 = vmatprep.subr.mxu0 0.0
  %1954 = vmatpush1.msra.mxu0 %v1927
  %1955 = vmatprep.subr.mxu0 0.0
  %1956 = vmatpush1.msra.mxu0 %v1928
  %1957 = vmatprep.subr.mxu0 0.0
  %1958 = vmatpush1.msra.mxu0 %v1929
  %1959 = vmatprep.subr.mxu0 0.0
  %1960 = vmatpush1.msra.mxu0 %v1930
  %1961 = vmatprep.subr.mxu0 0.0
  %1962 = vmatpush1.msra.mxu0 %v1931
  %1963 = vmatprep.subr.mxu0 0.0
  %1964 = vmatpush1.msra.mxu0 %v1932
  %1965 = vmatprep.subr.mxu0 0.0
  %1966 = vmatpush1.msra.mxu0 0.0
  %1967 = vmatprep.subr.mxu0 0.0
  %1968 = vmatpush1.msra.mxu0 0.0
  %1969 = vmatprep.subr.mxu0 0.0
  %1970 = vmatpush1.msra.mxu0 0.0
  %1971 = vmatprep.subr.mxu0 0.0
  %1972 = vmatpush1.msra.mxu0 0.0
  %1973 = vmatprep.subr.mxu0 0.0
  %1974 = vmatpush1.msra.mxu0 0.0
  %1975 = vmatprep.subr.mxu0 0.0
  %1976 = vmatpush1.msra.mxu0 0.0
  %1977 = vmatprep.subr.mxu0 0.0
  %1978 = vmatpush1.msra.mxu0 0.0
  %1979 = vmatprep.subr.mxu0 0.0
  %1980 = vmatpush1.msra.mxu0 0.0
  %1981 = vmatprep.subr.mxu0 0.0
  %1982 = vmatpush1.msra.mxu0 0.0
  %1983 = vmatprep.subr.mxu0 0.0
  %1984 = vmatpush1.msra.mxu0 0.0
  %1985 = vmatprep.subr.mxu0 0.0
  %1986 = vmatpush1.msra.mxu0 0.0
  %1987 = vmatprep.subr.mxu0 0.0
  %1988 = vmatpush1.msra.mxu0 0.0
  %1989 = vmatprep.subr.mxu0 0.0
  %1990 = vmatpush1.msra.mxu0 0.0
  %1991 = vmatprep.subr.mxu0 0.0
  %1992 = vmatpush1.msra.mxu0 0.0
  %1993 = vmatprep.subr.mxu0 0.0
  %1994 = vmatpush1.msra.mxu0 0.0
  %1995 = vmatprep.subr.mxu0 0.0
  %1996 = vmatpush1.msra.mxu0 0.0
  %1997 = vmatprep.subr.mxu0 0.0
  %1998 = vmatpush1.msra.mxu0 0.0
  %1999 = vmatprep.subr.mxu0 0.0
  %2000 = vmatpush1.msra.mxu0 0.0
  %2001 = vmatprep.subr.mxu0 0.0
  %2002 = vmatpush1.msra.mxu0 0.0
  %2003 = vmatprep.subr.mxu0 0.0
  %2004 = vmatpush1.msra.mxu0 0.0
  %2005 = vmatprep.subr.mxu0 0.0
  %2006 = vmatpush1.msra.mxu0 0.0
  %2007 = vmatprep.subr.mxu0 0.0
  %2008 = vmatpush1.msra.mxu0 0.0
  %2009 = vmatprep.mubr.f32.mxu0 0.0
  %2010 = vmatmul.mubr.f32.gmra.mrb[0].mxu0 %v1934
  %v2011 = vpop.f32.mrb[0].mxu0
  %v2012 = vadd.f32 0.0, %v2011
  %v2013 = vpop.f32.mrb[0].mxu0
  %2014 = vmatprep.mubr.f32.mxu0 0.0
  %2015 = vmatmul.mubr.f32.gmra.mrb[0].mxu0 %v1937
  %v2016 = vpop.f32.mrb[0].mxu0
  %v2017 = vadd.f32 0.0, %v2016
  %v2018 = vpop.f32.mrb[0].mxu0
  %2019 = vmatprep.mubr.f32.mxu0 0.0
  %2020 = vmatmul.mubr.f32.gmra.mrb[0].mxu0 %v1940
  %v2021 = vpop.f32.mrb[0].mxu0
  %v2022 = vadd.f32 0.0, %v2021
  %v2023 = vpop.f32.mrb[0].mxu0
  %2024 = vmatprep.mubr.f32.mxu0 0.0
  %2025 = vmatmul.mubr.f32.gmra.mrb[0].mxu0 %v1943
  %v2026 = vpop.f32.mrb[0].mxu0
  %v2027 = vadd.f32 0.0, %v2026
  %v2028 = vpop.f32.mrb[0].mxu0
  %2029 = vdwg.mxu0
  %v2030 = vld [vmem:[%s5] sm:$0xf]
  %v2032 = vsel %vm729, %v2030, 0
  %2034 = vmatprep.subr.mxu0 0.0
  %2035 = vmatpush1.msra.mxu0 %v2012
  %2036 = vmatprep.subr.mxu0 0.0
  %2037 = vmatpush1.msra.mxu0 %v2017
  %2038 = vmatprep.subr.mxu0 0.0
  %2039 = vmatpush1.msra.mxu0 %v2022
  %2040 = vmatprep.subr.mxu0 0.0
  %2041 = vmatpush1.msra.mxu0 %v2027
  %2042 = vmatprep.subr.mxu0 0.0
  %2043 = vmatpush1.msra.mxu0 0.0
  %2044 = vmatprep.subr.mxu0 0.0
  %2045 = vmatpush1.msra.mxu0 0.0
  %2046 = vmatprep.subr.mxu0 0.0
  %2047 = vmatpush1.msra.mxu0 0.0
  %2048 = vmatprep.subr.mxu0 0.0
  %2049 = vmatpush1.msra.mxu0 0.0
  %2050 = vmatprep.subr.mxu0 0.0
  %2051 = vmatpush1.msra.mxu0 0.0
  %2052 = vmatprep.subr.mxu0 0.0
  %2053 = vmatpush1.msra.mxu0 0.0
  %2054 = vmatprep.subr.mxu0 0.0
  %2055 = vmatpush1.msra.mxu0 0.0
  %2056 = vmatprep.subr.mxu0 0.0
  %2057 = vmatpush1.msra.mxu0 0.0
  %2058 = vmatprep.subr.mxu0 0.0
  %2059 = vmatpush1.msra.mxu0 0.0
  %2060 = vmatprep.subr.mxu0 0.0
  %2061 = vmatpush1.msra.mxu0 0.0
  %2062 = vmatprep.subr.mxu0 0.0
  %2063 = vmatpush1.msra.mxu0 0.0
  %2064 = vmatprep.subr.mxu0 0.0
  %2065 = vmatpush1.msra.mxu0 0.0
  %2066 = vmatprep.subr.mxu0 0.0
  %2067 = vmatpush1.msra.mxu0 0.0
  %2068 = vmatprep.subr.mxu0 0.0
  %2069 = vmatpush1.msra.mxu0 0.0
  %2070 = vmatprep.subr.mxu0 0.0
  %2071 = vmatpush1.msra.mxu0 0.0
  %2072 = vmatprep.subr.mxu0 0.0
  %2073 = vmatpush1.msra.mxu0 0.0
  %2074 = vmatprep.subr.mxu0 0.0
  %2075 = vmatpush1.msra.mxu0 0.0
  %2076 = vmatprep.subr.mxu0 0.0
  %2077 = vmatpush1.msra.mxu0 0.0
  %2078 = vmatprep.subr.mxu0 0.0
  %2079 = vmatpush1.msra.mxu0 0.0
  %2080 = vmatprep.subr.mxu0 0.0
  %2081 = vmatpush1.msra.mxu0 0.0
  %2082 = vmatprep.subr.mxu0 0.0
  %2083 = vmatpush1.msra.mxu0 0.0
  %2084 = vmatprep.subr.mxu0 0.0
  %2085 = vmatpush1.msra.mxu0 0.0
  %2086 = vmatprep.subr.mxu0 0.0
  %2087 = vmatpush1.msra.mxu0 0.0
  %2088 = vmatprep.subr.mxu0 0.0
  %2089 = vmatpush1.msra.mxu0 0.0
  %2090 = vmatprep.subr.mxu0 0.0
  %2091 = vmatpush1.msra.mxu0 0.0
  %2092 = vmatprep.subr.mxu0 0.0
  %2093 = vmatpush1.msra.mxu0 0.0
  %2094 = vmatprep.subr.mxu0 0.0
  %2095 = vmatpush1.msra.mxu0 0.0
  %2096 = vmatprep.subr.mxu0 0.0
  %2097 = vmatpush1.msra.mxu0 0.0
  %2098 = vmatprep.mubr.f32.mxu0 0.0
  %2099 = vmatmul.mubr.f32.gmra.mrb[0].mxu0 %v2032
  %v2100 = vpop.f32.mrb[0].mxu0
  %v2101 = vadd.f32 0.0, %v2100
  %v2102 = vpop.f32.mrb[0].mxu0
  %2103 = vdwg.mxu0
  %s2104 = scalar_lea.vmem %s6, 160
  %v2105 = vld [vmem:[%s2104] sm:$0xff]
  %v2106 = vld [vmem:[%s2104 + $0x8] sm:$0xff]
  %v2107 = vld [vmem:[%s2104 + $0x10] sm:$0xff]
  %v2108 = vld [vmem:[%s2104 + $0x18] sm:$0xff]
  %v2109 = vld [vmem:[%s2104 + $0x20] sm:$0xff]
  %v2111 = vsel %vm889, %v2101, 0
  %2113 = vmatprep.subr.mxu0 0.0
  %2114 = vmatpush1.msra.mxu0 %v2105
  %2115 = vmatprep.subr.mxu0 0.0
  %2116 = vmatpush1.msra.mxu0 %v2106
  %2117 = vmatprep.subr.mxu0 0.0
  %2118 = vmatpush1.msra.mxu0 %v2107
  %2119 = vmatprep.subr.mxu0 0.0
  %2120 = vmatpush1.msra.mxu0 %v2108
  %2121 = vmatprep.subr.mxu0 0.0
  %2122 = vmatpush1.msra.mxu0 %v2109
  %2123 = vmatprep.subr.mxu0 0.0
  %2124 = vmatpush1.msra.mxu0 0.0
  %2125 = vmatprep.subr.mxu0 0.0
  %2126 = vmatpush1.msra.mxu0 0.0
  %2127 = vmatprep.subr.mxu0 0.0
  %2128 = vmatpush1.msra.mxu0 0.0
  %2129 = vmatprep.subr.mxu0 0.0
  %2130 = vmatpush1.msra.mxu0 0.0
  %2131 = vmatprep.subr.mxu0 0.0
  %2132 = vmatpush1.msra.mxu0 0.0
  %2133 = vmatprep.subr.mxu0 0.0
  %2134 = vmatpush1.msra.mxu0 0.0
  %2135 = vmatprep.subr.mxu0 0.0
  %2136 = vmatpush1.msra.mxu0 0.0
  %2137 = vmatprep.subr.mxu0 0.0
  %2138 = vmatpush1.msra.mxu0 0.0
  %2139 = vmatprep.subr.mxu0 0.0
  %2140 = vmatpush1.msra.mxu0 0.0
  %2141 = vmatprep.subr.mxu0 0.0
  %2142 = vmatpush1.msra.mxu0 0.0
  %2143 = vmatprep.subr.mxu0 0.0
  %2144 = vmatpush1.msra.mxu0 0.0
  %2145 = vmatprep.subr.mxu0 0.0
  %2146 = vmatpush1.msra.mxu0 0.0
  %2147 = vmatprep.subr.mxu0 0.0
  %2148 = vmatpush1.msra.mxu0 0.0
  %2149 = vmatprep.subr.mxu0 0.0
  %2150 = vmatpush1.msra.mxu0 0.0
  %2151 = vmatprep.subr.mxu0 0.0
  %2152 = vmatpush1.msra.mxu0 0.0
  %2153 = vmatprep.subr.mxu0 0.0
  %2154 = vmatpush1.msra.mxu0 0.0
  %2155 = vmatprep.subr.mxu0 0.0
  %2156 = vmatpush1.msra.mxu0 0.0
  %2157 = vmatprep.subr.mxu0 0.0
  %2158 = vmatpush1.msra.mxu0 0.0
  %2159 = vmatprep.subr.mxu0 0.0
  %2160 = vmatpush1.msra.mxu0 0.0
  %2161 = vmatprep.subr.mxu0 0.0
  %2162 = vmatpush1.msra.mxu0 0.0
  %2163 = vmatprep.subr.mxu0 0.0
  %2164 = vmatpush1.msra.mxu0 0.0
  %2165 = vmatprep.subr.mxu0 0.0
  %2166 = vmatpush1.msra.mxu0 0.0
  %2167 = vmatprep.subr.mxu0 0.0
  %2168 = vmatpush1.msra.mxu0 0.0
  %2169 = vmatprep.subr.mxu0 0.0
  %2170 = vmatpush1.msra.mxu0 0.0
  %2171 = vmatprep.subr.mxu0 0.0
  %2172 = vmatpush1.msra.mxu0 0.0
  %2173 = vmatprep.subr.mxu0 0.0
  %2174 = vmatpush1.msra.mxu0 0.0
  %2175 = vmatprep.subr.mxu0 0.0
  %2176 = vmatpush1.msra.mxu0 0.0
  %2177 = vmatprep.mubr.f32.mxu0 0.0
  %2178 = vmatmul.mubr.f32.gmra.mrb[0].mxu0 %v2111
  %v2179 = vpop.f32.mrb[0].mxu0
  %v2180 = vadd.f32 0.0, %v2179
  %v2181 = vpop.f32.mrb[0].mxu0
  %2182 = vdwg.mxu0
  %v2183 = vadd.f32 %v1345, %v2180
  %v2184 = vld [vmem:[%s808] sm:$0xf]
  %v2186 = vsel %vm729, %v2184, 0
  %2188 = vmatprep.subr.mxu0 0.0
  %2189 = vmatpush1.msra.mxu0 %v2012
  %2190 = vmatprep.subr.mxu0 0.0
  %2191 = vmatpush1.msra.mxu0 %v2017
  %2192 = vmatprep.subr.mxu0 0.0
  %2193 = vmatpush1.msra.mxu0 %v2022
  %2194 = vmatprep.subr.mxu0 0.0
  %2195 = vmatpush1.msra.mxu0 %v2027
  %2196 = vmatprep.subr.mxu0 0.0
  %2197 = vmatpush1.msra.mxu0 0.0
  %2198 = vmatprep.subr.mxu0 0.0
  %2199 = vmatpush1.msra.mxu0 0.0
  %2200 = vmatprep.subr.mxu0 0.0
  %2201 = vmatpush1.msra.mxu0 0.0
  %2202 = vmatprep.subr.mxu0 0.0
  %2203 = vmatpush1.msra.mxu0 0.0
  %2204 = vmatprep.subr.mxu0 0.0
  %2205 = vmatpush1.msra.mxu0 0.0
  %2206 = vmatprep.subr.mxu0 0.0
  %2207 = vmatpush1.msra.mxu0 0.0
  %2208 = vmatprep.subr.mxu0 0.0
  %2209 = vmatpush1.msra.mxu0 0.0
  %2210 = vmatprep.subr.mxu0 0.0
  %2211 = vmatpush1.msra.mxu0 0.0
  %2212 = vmatprep.subr.mxu0 0.0
  %2213 = vmatpush1.msra.mxu0 0.0
  %2214 = vmatprep.subr.mxu0 0.0
  %2215 = vmatpush1.msra.mxu0 0.0
  %2216 = vmatprep.subr.mxu0 0.0
  %2217 = vmatpush1.msra.mxu0 0.0
  %2218 = vmatprep.subr.mxu0 0.0
  %2219 = vmatpush1.msra.mxu0 0.0
  %2220 = vmatprep.subr.mxu0 0.0
  %2221 = vmatpush1.msra.mxu0 0.0
  %2222 = vmatprep.subr.mxu0 0.0
  %2223 = vmatpush1.msra.mxu0 0.0
  %2224 = vmatprep.subr.mxu0 0.0
  %2225 = vmatpush1.msra.mxu0 0.0
  %2226 = vmatprep.subr.mxu0 0.0
  %2227 = vmatpush1.msra.mxu0 0.0
  %2228 = vmatprep.subr.mxu0 0.0
  %2229 = vmatpush1.msra.mxu0 0.0
  %2230 = vmatprep.subr.mxu0 0.0
  %2231 = vmatpush1.msra.mxu0 0.0
  %2232 = vmatprep.subr.mxu0 0.0
  %2233 = vmatpush1.msra.mxu0 0.0
  %2234 = vmatprep.subr.mxu0 0.0
  %2235 = vmatpush1.msra.mxu0 0.0
  %2236 = vmatprep.subr.mxu0 0.0
  %2237 = vmatpush1.msra.mxu0 0.0
  %2238 = vmatprep.subr.mxu0 0.0
  %2239 = vmatpush1.msra.mxu0 0.0
  %2240 = vmatprep.subr.mxu0 0.0
  %2241 = vmatpush1.msra.mxu0 0.0
  %2242 = vmatprep.subr.mxu0 0.0
  %2243 = vmatpush1.msra.mxu0 0.0
  %2244 = vmatprep.subr.mxu0 0.0
  %2245 = vmatpush1.msra.mxu0 0.0
  %2246 = vmatprep.subr.mxu0 0.0
  %2247 = vmatpush1.msra.mxu0 0.0
  %2248 = vmatprep.subr.mxu0 0.0
  %2249 = vmatpush1.msra.mxu0 0.0
  %2250 = vmatprep.subr.mxu0 0.0
  %2251 = vmatpush1.msra.mxu0 0.0
  %2252 = vmatprep.mubr.f32.mxu0 0.0
  %2253 = vmatmul.mubr.f32.gmra.mrb[0].mxu0 %v2186
  %v2254 = vpop.f32.mrb[0].mxu0
  %v2255 = vadd.f32 0.0, %v2254
  %v2256 = vpop.f32.mrb[0].mxu0
  %2257 = vdwg.mxu0
  %s2258 = scalar_lea.vmem %s6, 200
  %v2259 = vld [vmem:[%s2258] sm:$0xff]
  %v2260 = vld [vmem:[%s2258 + $0x8] sm:$0xff]
  %v2261 = vld [vmem:[%s2258 + $0x10] sm:$0xff]
  %v2262 = vld [vmem:[%s2258 + $0x18] sm:$0xff]
  %v2263 = vld [vmem:[%s2258 + $0x20] sm:$0xff]
  %v2265 = vsel %vm889, %v2255, 0
  %2267 = vmatprep.subr.mxu0 0.0
  %2268 = vmatpush1.msra.mxu0 %v2259
  %2269 = vmatprep.subr.mxu0 0.0
  %2270 = vmatpush1.msra.mxu0 %v2260
  %2271 = vmatprep.subr.mxu0 0.0
  %2272 = vmatpush1.msra.mxu0 %v2261
  %2273 = vmatprep.subr.mxu0 0.0
  %2274 = vmatpush1.msra.mxu0 %v2262
  %2275 = vmatprep.subr.mxu0 0.0
  %2276 = vmatpush1.msra.mxu0 %v2263
  %2277 = vmatprep.subr.mxu0 0.0
  %2278 = vmatpush1.msra.mxu0 0.0
  %2279 = vmatprep.subr.mxu0 0.0
  %2280 = vmatpush1.msra.mxu0 0.0
  %2281 = vmatprep.subr.mxu0 0.0
  %2282 = vmatpush1.msra.mxu0 0.0
  %2283 = vmatprep.subr.mxu0 0.0
  %2284 = vmatpush1.msra.mxu0 0.0
  %2285 = vmatprep.subr.mxu0 0.0
  %2286 = vmatpush1.msra.mxu0 0.0
  %2287 = vmatprep.subr.mxu0 0.0
  %2288 = vmatpush1.msra.mxu0 0.0
  %2289 = vmatprep.subr.mxu0 0.0
  %2290 = vmatpush1.msra.mxu0 0.0
  %2291 = vmatprep.subr.mxu0 0.0
  %2292 = vmatpush1.msra.mxu0 0.0
  %2293 = vmatprep.subr.mxu0 0.0
  %2294 = vmatpush1.msra.mxu0 0.0
  %2295 = vmatprep.subr.mxu0 0.0
  %2296 = vmatpush1.msra.mxu0 0.0
  %2297 = vmatprep.subr.mxu0 0.0
  %2298 = vmatpush1.msra.mxu0 0.0
  %2299 = vmatprep.subr.mxu0 0.0
  %2300 = vmatpush1.msra.mxu0 0.0
  %2301 = vmatprep.subr.mxu0 0.0
  %2302 = vmatpush1.msra.mxu0 0.0
  %2303 = vmatprep.subr.mxu0 0.0
  %2304 = vmatpush1.msra.mxu0 0.0
  %2305 = vmatprep.subr.mxu0 0.0
  %2306 = vmatpush1.msra.mxu0 0.0
  %2307 = vmatprep.subr.mxu0 0.0
  %2308 = vmatpush1.msra.mxu0 0.0
  %2309 = vmatprep.subr.mxu0 0.0
  %2310 = vmatpush1.msra.mxu0 0.0
  %2311 = vmatprep.subr.mxu0 0.0
  %2312 = vmatpush1.msra.mxu0 0.0
  %2313 = vmatprep.subr.mxu0 0.0
  %2314 = vmatpush1.msra.mxu0 0.0
  %2315 = vmatprep.subr.mxu0 0.0
  %2316 = vmatpush1.msra.mxu0 0.0
  %2317 = vmatprep.subr.mxu0 0.0
  %2318 = vmatpush1.msra.mxu0 0.0
  %2319 = vmatprep.subr.mxu0 0.0
  %2320 = vmatpush1.msra.mxu0 0.0
  %2321 = vmatprep.subr.mxu0 0.0
  %2322 = vmatpush1.msra.mxu0 0.0
  %2323 = vmatprep.subr.mxu0 0.0
  %2324 = vmatpush1.msra.mxu0 0.0
  %2325 = vmatprep.subr.mxu0 0.0
  %2326 = vmatpush1.msra.mxu0 0.0
  %2327 = vmatprep.subr.mxu0 0.0
  %2328 = vmatpush1.msra.mxu0 0.0
  %2329 = vmatprep.subr.mxu0 0.0
  %2330 = vmatpush1.msra.mxu0 0.0
  %2331 = vmatprep.mubr.f32.mxu0 0.0
  %2332 = vmatmul.mubr.f32.gmra.mrb[0].mxu0 %v2265
  %v2333 = vpop.f32.mrb[0].mxu0
  %v2334 = vadd.f32 0.0, %v2333
  %v2335 = vpop.f32.mrb[0].mxu0
  %2336 = vdwg.mxu0
  %v2337 = vadd.f32 %v2183, %v2334
  %v2338 = vld [vmem:[%s1036] sm:$0xf]
  %v2340 = vsel %vm729, %v2338, 0
  %2342 = vmatprep.subr.mxu0 0.0
  %2343 = vmatpush1.msra.mxu0 %v2012
  %2344 = vmatprep.subr.mxu0 0.0
  %2345 = vmatpush1.msra.mxu0 %v2017
  %2346 = vmatprep.subr.mxu0 0.0
  %2347 = vmatpush1.msra.mxu0 %v2022
  %2348 = vmatprep.subr.mxu0 0.0
  %2349 = vmatpush1.msra.mxu0 %v2027
  %2350 = vmatprep.subr.mxu0 0.0
  %2351 = vmatpush1.msra.mxu0 0.0
  %2352 = vmatprep.subr.mxu0 0.0
  %2353 = vmatpush1.msra.mxu0 0.0
  %2354 = vmatprep.subr.mxu0 0.0
  %2355 = vmatpush1.msra.mxu0 0.0
  %2356 = vmatprep.subr.mxu0 0.0
  %2357 = vmatpush1.msra.mxu0 0.0
  %2358 = vmatprep.subr.mxu0 0.0
  %2359 = vmatpush1.msra.mxu0 0.0
  %2360 = vmatprep.subr.mxu0 0.0
  %2361 = vmatpush1.msra.mxu0 0.0
  %2362 = vmatprep.subr.mxu0 0.0
  %2363 = vmatpush1.msra.mxu0 0.0
  %2364 = vmatprep.subr.mxu0 0.0
  %2365 = vmatpush1.msra.mxu0 0.0
  %2366 = vmatprep.subr.mxu0 0.0
  %2367 = vmatpush1.msra.mxu0 0.0
  %2368 = vmatprep.subr.mxu0 0.0
  %2369 = vmatpush1.msra.mxu0 0.0
  %2370 = vmatprep.subr.mxu0 0.0
  %2371 = vmatpush1.msra.mxu0 0.0
  %2372 = vmatprep.subr.mxu0 0.0
  %2373 = vmatpush1.msra.mxu0 0.0
  %2374 = vmatprep.subr.mxu0 0.0
  %2375 = vmatpush1.msra.mxu0 0.0
  %2376 = vmatprep.subr.mxu0 0.0
  %2377 = vmatpush1.msra.mxu0 0.0
  %2378 = vmatprep.subr.mxu0 0.0
  %2379 = vmatpush1.msra.mxu0 0.0
  %2380 = vmatprep.subr.mxu0 0.0
  %2381 = vmatpush1.msra.mxu0 0.0
  %2382 = vmatprep.subr.mxu0 0.0
  %2383 = vmatpush1.msra.mxu0 0.0
  %2384 = vmatprep.subr.mxu0 0.0
  %2385 = vmatpush1.msra.mxu0 0.0
  %2386 = vmatprep.subr.mxu0 0.0
  %2387 = vmatpush1.msra.mxu0 0.0
  %2388 = vmatprep.subr.mxu0 0.0
  %2389 = vmatpush1.msra.mxu0 0.0
  %2390 = vmatprep.subr.mxu0 0.0
  %2391 = vmatpush1.msra.mxu0 0.0
  %2392 = vmatprep.subr.mxu0 0.0
  %2393 = vmatpush1.msra.mxu0 0.0
  %2394 = vmatprep.subr.mxu0 0.0
  %2395 = vmatpush1.msra.mxu0 0.0
  %2396 = vmatprep.subr.mxu0 0.0
  %2397 = vmatpush1.msra.mxu0 0.0
  %2398 = vmatprep.subr.mxu0 0.0
  %2399 = vmatpush1.msra.mxu0 0.0
  %2400 = vmatprep.subr.mxu0 0.0
  %2401 = vmatpush1.msra.mxu0 0.0
  %2402 = vmatprep.subr.mxu0 0.0
  %2403 = vmatpush1.msra.mxu0 0.0
  %2404 = vmatprep.subr.mxu0 0.0
  %2405 = vmatpush1.msra.mxu0 0.0
  %2406 = vmatprep.mubr.f32.mxu0 0.0
  %2407 = vmatmul.mubr.f32.gmra.mrb[0].mxu0 %v2340
  %v2408 = vpop.f32.mrb[0].mxu0
  %v2409 = vadd.f32 0.0, %v2408
  %v2410 = vpop.f32.mrb[0].mxu0
  %2411 = vdwg.mxu0
  %s2412 = scalar_lea.vmem %s6, 240
  %v2413 = vld [vmem:[%s2412] sm:$0xff]
  %v2414 = vld [vmem:[%s2412 + $0x8] sm:$0xff]
  %v2415 = vld [vmem:[%s2412 + $0x10] sm:$0xff]
  %v2416 = vld [vmem:[%s2412 + $0x18] sm:$0xff]
  %v2417 = vld [vmem:[%s2412 + $0x20] sm:$0xff]
  %v2419 = vsel %vm889, %v2409, 0
  %2421 = vmatprep.subr.mxu0 0.0
  %2422 = vmatpush1.msra.mxu0 %v2413
  %2423 = vmatprep.subr.mxu0 0.0
  %2424 = vmatpush1.msra.mxu0 %v2414
  %2425 = vmatprep.subr.mxu0 0.0
  %2426 = vmatpush1.msra.mxu0 %v2415
  %2427 = vmatprep.subr.mxu0 0.0
  %2428 = vmatpush1.msra.mxu0 %v2416
  %2429 = vmatprep.subr.mxu0 0.0
  %2430 = vmatpush1.msra.mxu0 %v2417
  %2431 = vmatprep.subr.mxu0 0.0
  %2432 = vmatpush1.msra.mxu0 0.0
  %2433 = vmatprep.subr.mxu0 0.0
  %2434 = vmatpush1.msra.mxu0 0.0
  %2435 = vmatprep.subr.mxu0 0.0
  %2436 = vmatpush1.msra.mxu0 0.0
  %2437 = vmatprep.subr.mxu0 0.0
  %2438 = vmatpush1.msra.mxu0 0.0
  %2439 = vmatprep.subr.mxu0 0.0
  %2440 = vmatpush1.msra.mxu0 0.0
  %2441 = vmatprep.subr.mxu0 0.0
  %2442 = vmatpush1.msra.mxu0 0.0
  %2443 = vmatprep.subr.mxu0 0.0
  %2444 = vmatpush1.msra.mxu0 0.0
  %2445 = vmatprep.subr.mxu0 0.0
  %2446 = vmatpush1.msra.mxu0 0.0
  %2447 = vmatprep.subr.mxu0 0.0
  %2448 = vmatpush1.msra.mxu0 0.0
  %2449 = vmatprep.subr.mxu0 0.0
  %2450 = vmatpush1.msra.mxu0 0.0
  %2451 = vmatprep.subr.mxu0 0.0
  %2452 = vmatpush1.msra.mxu0 0.0
  %2453 = vmatprep.subr.mxu0 0.0
  %2454 = vmatpush1.msra.mxu0 0.0
  %2455 = vmatprep.subr.mxu0 0.0
  %2456 = vmatpush1.msra.mxu0 0.0
  %2457 = vmatprep.subr.mxu0 0.0
  %2458 = vmatpush1.msra.mxu0 0.0
  %2459 = vmatprep.subr.mxu0 0.0
  %2460 = vmatpush1.msra.mxu0 0.0
  %2461 = vmatprep.subr.mxu0 0.0
  %2462 = vmatpush1.msra.mxu0 0.0
  %2463 = vmatprep.subr.mxu0 0.0
  %2464 = vmatpush1.msra.mxu0 0.0
  %2465 = vmatprep.subr.mxu0 0.0
  %2466 = vmatpush1.msra.mxu0 0.0
  %2467 = vmatprep.subr.mxu0 0.0
  %2468 = vmatpush1.msra.mxu0 0.0
  %2469 = vmatprep.subr.mxu0 0.0
  %2470 = vmatpush1.msra.mxu0 0.0
  %2471 = vmatprep.subr.mxu0 0.0
  %2472 = vmatpush1.msra.mxu0 0.0
  %2473 = vmatprep.subr.mxu0 0.0
  %2474 = vmatpush1.msra.mxu0 0.0
  %2475 = vmatprep.subr.mxu0 0.0
  %2476 = vmatpush1.msra.mxu0 0.0
  %2477 = vmatprep.subr.mxu0 0.0
  %2478 = vmatpush1.msra.mxu0 0.0
  %2479 = vmatprep.subr.mxu0 0.0
  %2480 = vmatpush1.msra.mxu0 0.0
  %2481 = vmatprep.subr.mxu0 0.0
  %2482 = vmatpush1.msra.mxu0 0.0
  %2483 = vmatprep.subr.mxu0 0.0
  %2484 = vmatpush1.msra.mxu0 0.0
  %2485 = vmatprep.mubr.f32.mxu0 0.0
  %2486 = vmatmul.mubr.f32.gmra.mrb[0].mxu0 %v2419
  %v2487 = vpop.f32.mrb[0].mxu0
  %v2488 = vadd.f32 0.0, %v2487
  %v2489 = vpop.f32.mrb[0].mxu0
  %2490 = vdwg.mxu0
  %v2491 = vadd.f32 %v2337, %v2488
  %v2492 = vld [vmem:[%s1191] sm:$0xf]
  %v2494 = vsel %vm729, %v2492, 0
  %2496 = vmatprep.subr.mxu0 0.0
  %2497 = vmatpush1.msra.mxu0 %v2012
  %2498 = vmatprep.subr.mxu0 0.0
  %2499 = vmatpush1.msra.mxu0 %v2017
  %2500 = vmatprep.subr.mxu0 0.0
  %2501 = vmatpush1.msra.mxu0 %v2022
  %2502 = vmatprep.subr.mxu0 0.0
  %2503 = vmatpush1.msra.mxu0 %v2027
  %2504 = vmatprep.subr.mxu0 0.0
  %2505 = vmatpush1.msra.mxu0 0.0
  %2506 = vmatprep.subr.mxu0 0.0
  %2507 = vmatpush1.msra.mxu0 0.0
  %2508 = vmatprep.subr.mxu0 0.0
  %2509 = vmatpush1.msra.mxu0 0.0
  %2510 = vmatprep.subr.mxu0 0.0
  %2511 = vmatpush1.msra.mxu0 0.0
  %2512 = vmatprep.subr.mxu0 0.0
  %2513 = vmatpush1.msra.mxu0 0.0
  %2514 = vmatprep.subr.mxu0 0.0
  %2515 = vmatpush1.msra.mxu0 0.0
  %2516 = vmatprep.subr.mxu0 0.0
  %2517 = vmatpush1.msra.mxu0 0.0
  %2518 = vmatprep.subr.mxu0 0.0
  %2519 = vmatpush1.msra.mxu0 0.0
  %2520 = vmatprep.subr.mxu0 0.0
  %2521 = vmatpush1.msra.mxu0 0.0
  %2522 = vmatprep.subr.mxu0 0.0
  %2523 = vmatpush1.msra.mxu0 0.0
  %2524 = vmatprep.subr.mxu0 0.0
  %2525 = vmatpush1.msra.mxu0 0.0
  %2526 = vmatprep.subr.mxu0 0.0
  %2527 = vmatpush1.msra.mxu0 0.0
  %2528 = vmatprep.subr.mxu0 0.0
  %2529 = vmatpush1.msra.mxu0 0.0
  %2530 = vmatprep.subr.mxu0 0.0
  %2531 = vmatpush1.msra.mxu0 0.0
  %2532 = vmatprep.subr.mxu0 0.0
  %2533 = vmatpush1.msra.mxu0 0.0
  %2534 = vmatprep.subr.mxu0 0.0
  %2535 = vmatpush1.msra.mxu0 0.0
  %2536 = vmatprep.subr.mxu0 0.0
  %2537 = vmatpush1.msra.mxu0 0.0
  %2538 = vmatprep.subr.mxu0 0.0
  %2539 = vmatpush1.msra.mxu0 0.0
  %2540 = vmatprep.subr.mxu0 0.0
  %2541 = vmatpush1.msra.mxu0 0.0
  %2542 = vmatprep.subr.mxu0 0.0
  %2543 = vmatpush1.msra.mxu0 0.0
  %2544 = vmatprep.subr.mxu0 0.0
  %2545 = vmatpush1.msra.mxu0 0.0
  %2546 = vmatprep.subr.mxu0 0.0
  %2547 = vmatpush1.msra.mxu0 0.0
  %2548 = vmatprep.subr.mxu0 0.0
  %2549 = vmatpush1.msra.mxu0 0.0
  %2550 = vmatprep.subr.mxu0 0.0
  %2551 = vmatpush1.msra.mxu0 0.0
  %2552 = vmatprep.subr.mxu0 0.0
  %2553 = vmatpush1.msra.mxu0 0.0
  %2554 = vmatprep.subr.mxu0 0.0
  %2555 = vmatpush1.msra.mxu0 0.0
  %2556 = vmatprep.subr.mxu0 0.0
  %2557 = vmatpush1.msra.mxu0 0.0
  %2558 = vmatprep.subr.mxu0 0.0
  %2559 = vmatpush1.msra.mxu0 0.0
  %2560 = vmatprep.mubr.f32.mxu0 0.0
  %2561 = vmatmul.mubr.f32.gmra.mrb[0].mxu0 %v2494
  %v2562 = vpop.f32.mrb[0].mxu0
  %v2563 = vadd.f32 0.0, %v2562
  %v2564 = vpop.f32.mrb[0].mxu0
  %2565 = vdwg.mxu0
  %s2566 = scalar_lea.vmem %s6, 280
  %v2567 = vld [vmem:[%s2566] sm:$0xff]
  %v2568 = vld [vmem:[%s2566 + $0x8] sm:$0xff]
  %v2569 = vld [vmem:[%s2566 + $0x10] sm:$0xff]
  %v2570 = vld [vmem:[%s2566 + $0x18] sm:$0xff]
  %v2571 = vld [vmem:[%s2566 + $0x20] sm:$0xff]
  %v2573 = vsel %vm889, %v2563, 0
  %2575 = vmatprep.subr.mxu0 0.0
  %2576 = vmatpush1.msra.mxu0 %v2567
  %2577 = vmatprep.subr.mxu0 0.0
  %2578 = vmatpush1.msra.mxu0 %v2568
  %2579 = vmatprep.subr.mxu0 0.0
  %2580 = vmatpush1.msra.mxu0 %v2569
  %2581 = vmatprep.subr.mxu0 0.0
  %2582 = vmatpush1.msra.mxu0 %v2570
  %2583 = vmatprep.subr.mxu0 0.0
  %2584 = vmatpush1.msra.mxu0 %v2571
  %2585 = vmatprep.subr.mxu0 0.0
  %2586 = vmatpush1.msra.mxu0 0.0
  %2587 = vmatprep.subr.mxu0 0.0
  %2588 = vmatpush1.msra.mxu0 0.0
  %2589 = vmatprep.subr.mxu0 0.0
  %2590 = vmatpush1.msra.mxu0 0.0
  %2591 = vmatprep.subr.mxu0 0.0
  %2592 = vmatpush1.msra.mxu0 0.0
  %2593 = vmatprep.subr.mxu0 0.0
  %2594 = vmatpush1.msra.mxu0 0.0
  %2595 = vmatprep.subr.mxu0 0.0
  %2596 = vmatpush1.msra.mxu0 0.0
  %2597 = vmatprep.subr.mxu0 0.0
  %2598 = vmatpush1.msra.mxu0 0.0
  %2599 = vmatprep.subr.mxu0 0.0
  %2600 = vmatpush1.msra.mxu0 0.0
  %2601 = vmatprep.subr.mxu0 0.0
  %2602 = vmatpush1.msra.mxu0 0.0
  %2603 = vmatprep.subr.mxu0 0.0
  %2604 = vmatpush1.msra.mxu0 0.0
  %2605 = vmatprep.subr.mxu0 0.0
  %2606 = vmatpush1.msra.mxu0 0.0
  %2607 = vmatprep.subr.mxu0 0.0
  %2608 = vmatpush1.msra.mxu0 0.0
  %2609 = vmatprep.subr.mxu0 0.0
  %2610 = vmatpush1.msra.mxu0 0.0
  %2611 = vmatprep.subr.mxu0 0.0
  %2612 = vmatpush1.msra.mxu0 0.0
  %2613 = vmatprep.subr.mxu0 0.0
  %2614 = vmatpush1.msra.mxu0 0.0
  %2615 = vmatprep.subr.mxu0 0.0
  %2616 = vmatpush1.msra.mxu0 0.0
  %2617 = vmatprep.subr.mxu0 0.0
  %2618 = vmatpush1.msra.mxu0 0.0
  %2619 = vmatprep.subr.mxu0 0.0
  %2620 = vmatpush1.msra.mxu0 0.0
  %2621 = vmatprep.subr.mxu0 0.0
  %2622 = vmatpush1.msra.mxu0 0.0
  %2623 = vmatprep.subr.mxu0 0.0
  %2624 = vmatpush1.msra.mxu0 0.0
  %2625 = vmatprep.subr.mxu0 0.0
  %2626 = vmatpush1.msra.mxu0 0.0
  %2627 = vmatprep.subr.mxu0 0.0
  %2628 = vmatpush1.msra.mxu0 0.0
  %2629 = vmatprep.subr.mxu0 0.0
  %2630 = vmatpush1.msra.mxu0 0.0
  %2631 = vmatprep.subr.mxu0 0.0
  %2632 = vmatpush1.msra.mxu0 0.0
  %2633 = vmatprep.subr.mxu0 0.0
  %2634 = vmatpush1.msra.mxu0 0.0
  %2635 = vmatprep.subr.mxu0 0.0
  %2636 = vmatpush1.msra.mxu0 0.0
  %2637 = vmatprep.subr.mxu0 0.0
  %2638 = vmatpush1.msra.mxu0 0.0
  %2639 = vmatprep.mubr.f32.mxu0 0.0
  %2640 = vmatmul.mubr.f32.gmra.mrb[0].mxu0 %v2573
  %v2641 = vpop.f32.mrb[0].mxu0
  %v2642 = vadd.f32 0.0, %v2641
  %v2643 = vpop.f32.mrb[0].mxu0
  %2644 = vdwg.mxu0
  %v2645 = vadd.f32 %v2491, %v2642
  %v2646 = vld [vmem:[%s7] sm:$0x1]
  %v2648 = vlaneseq
  %v2649 = vshrl.u32 %v2648, 7
  %v2650 = vsub.s32 0, %v2649
  %v2651 = vrot.slane %v2646, %v2650
  %v2653 = vadd.f32 %v2645, %v2651
  %vm2654 = vcmp.gt.f32.partialorder %v2653, 0.0
  %v2655 = vmul.f32 %v2653, 1.442695
  %v2656 = vpow.pop %v2655
  %v2657 = vsub.f32 %v2656, 1.0
  %v2658 = vmul.f32 %v2657, 1.6732632
  %v2659 = vsel %vm2654, %v2653, %v2658
  %v2660 = vmul.f32 %v2659, 1.050701
  %v2661 = vld [vmem:[%s8] sm:$0xff]
  %v2662 = vld [vmem:[%s8 + $0x8] sm:$0xff]
  %v2663 = vld [vmem:[%s8 + $0x10] sm:$0xff]
  %v2664 = vld [vmem:[%s8 + $0x18] sm:$0xff]
  %v2665 = vld [vmem:[%s8 + $0x20] sm:$0xff]
  %v2666 = vld [vmem:[%s8 + $0x28] sm:$0xff]
  %v2667 = vld [vmem:[%s8 + $0x30] sm:$0xff]
  %v2668 = vld [vmem:[%s8 + $0x38] sm:$0xff]
  %v2669 = vld [vmem:[%s8 + $0x40] sm:$0xff]
  %v2670 = vld [vmem:[%s8 + $0x48] sm:$0xff]
  %v2671 = vld [vmem:[%s8 + $0x50] sm:$0xff]
  %v2672 = vld [vmem:[%s8 + $0x58] sm:$0xff]
  %v2673 = vld [vmem:[%s8 + $0x60] sm:$0xff]
  %v2674 = vld [vmem:[%s8 + $0x68] sm:$0xff]
  %v2675 = vld [vmem:[%s8 + $0x70] sm:$0xff]
  %v2676 = vld [vmem:[%s8 + $0x78] sm:$0xff]
  %v2677 = vld [vmem:[%s11] sm:$0xf]
  %v2678 = vld [vmem:[#allocation2] sm:$0x1]
  %v2680 = vlaneseq
  %v2681 = vshrl.u32 %v2680, 7
  %v2682 = vsub.s32 0, %v2681
  %v2683 = vrot.slane %v2678, %v2682
  %v2685 = vmul.f32 %v2677, %v2683
  %2686 = vmatprep.subr.mxu0 0.0
  %2687 = vmatpush1.msra.mxu0 %v2661
  %2688 = vmatprep.subr.mxu0 0.0
  %2689 = vmatpush1.msra.mxu0 %v2662
  %2690 = vmatprep.subr.mxu0 0.0
  %2691 = vmatpush1.msra.mxu0 %v2663
  %2692 = vmatprep.subr.mxu0 0.0
  %2693 = vmatpush1.msra.mxu0 %v2664
  %2694 = vmatprep.subr.mxu0 0.0
  %2695 = vmatpush1.msra.mxu0 %v2665
  %2696 = vmatprep.subr.mxu0 0.0
  %2697 = vmatpush1.msra.mxu0 %v2666
  %2698 = vmatprep.subr.mxu0 0.0
  %2699 = vmatpush1.msra.mxu0 %v2667
  %2700 = vmatprep.subr.mxu0 0.0
  %2701 = vmatpush1.msra.mxu0 %v2668
  %2702 = vmatprep.subr.mxu0 0.0
  %2703 = vmatpush1.msra.mxu0 %v2669
  %2704 = vmatprep.subr.mxu0 0.0
  %2705 = vmatpush1.msra.mxu0 %v2670
  %2706 = vmatprep.subr.mxu0 0.0
  %2707 = vmatpush1.msra.mxu0 %v2671
  %2708 = vmatprep.subr.mxu0 0.0
  %2709 = vmatpush1.msra.mxu0 %v2672
  %2710 = vmatprep.subr.mxu0 0.0
  %2711 = vmatpush1.msra.mxu0 %v2673
  %2712 = vmatprep.subr.mxu0 0.0
  %2713 = vmatpush1.msra.mxu0 %v2674
  %2714 = vmatprep.subr.mxu0 0.0
  %2715 = vmatpush1.msra.mxu0 %v2675
  %2716 = vmatprep.subr.mxu0 0.0
  %2717 = vmatpush1.msra.mxu0 %v2676
  %2718 = vmatprep.subr.mxu0 0.0
  %2719 = vmatpush1.msra.mxu0 0.0
  %2720 = vmatprep.subr.mxu0 0.0
  %2721 = vmatpush1.msra.mxu0 0.0
  %2722 = vmatprep.subr.mxu0 0.0
  %2723 = vmatpush1.msra.mxu0 0.0
  %2724 = vmatprep.subr.mxu0 0.0
  %2725 = vmatpush1.msra.mxu0 0.0
  %2726 = vmatprep.subr.mxu0 0.0
  %2727 = vmatpush1.msra.mxu0 0.0
  %2728 = vmatprep.subr.mxu0 0.0
  %2729 = vmatpush1.msra.mxu0 0.0
  %2730 = vmatprep.subr.mxu0 0.0
  %2731 = vmatpush1.msra.mxu0 0.0
  %2732 = vmatprep.subr.mxu0 0.0
  %2733 = vmatpush1.msra.mxu0 0.0
  %2734 = vmatprep.subr.mxu0 0.0
  %2735 = vmatpush1.msra.mxu0 0.0
  %2736 = vmatprep.subr.mxu0 0.0
  %2737 = vmatpush1.msra.mxu0 0.0
  %2738 = vmatprep.subr.mxu0 0.0
  %2739 = vmatpush1.msra.mxu0 0.0
  %2740 = vmatprep.subr.mxu0 0.0
  %2741 = vmatpush1.msra.mxu0 0.0
  %2742 = vmatprep.subr.mxu0 0.0
  %2743 = vmatpush1.msra.mxu0 0.0
  %2744 = vmatprep.subr.mxu0 0.0
  %2745 = vmatpush1.msra.mxu0 0.0
  %2746 = vmatprep.subr.mxu0 0.0
  %2747 = vmatpush1.msra.mxu0 0.0
  %2748 = vmatprep.subr.mxu0 0.0
  %2749 = vmatpush1.msra.mxu0 0.0
  %2750 = vmatprep.mubr.f32.mxu0 0.0
  %2751 = vmatmul.mubr.f32.gmra.mrb[0].mxu0 %v2660
  %v2752 = vpop.f32.mrb[0].mxu0
  %v2753 = vadd.f32 %v2685, %v2752
  %v2754 = vpop.f32.mrb[0].mxu0
  %2755 = vdwg.mxu0
  %v2756 = vld [vmem:[#allocation3] sm:$0x1]
  %v2758 = vlaneseq
  %v2759 = vshrl.u32 %v2758, 7
  %v2760 = vsub.s32 0, %v2759
  %v2761 = vrot.slane %v2756, %v2760
  %v2763 = vadd.f32 %v2753, %v2761
  %v2764 = vsub.f32 0.0, %v2763
  %v2765 = vmul.f32 %v2764, 1.442695
  %v2766 = vpow.pop %v2765
  %v2767 = vadd.f32 %v2766, 1.0
  %v2768 = vrcp.pop %v2767
  %v2769 = vmul.f32 1.0, %v2768
  %vm2770 = vcmask 3072
  %2771 = vst.msk [vmem:[%s12] sm:$0xf] %vm2770, %v2769
  // Predicated region
  $region50: #{gcn_mv_gcn_forward.1} parent=0 // pred_check
    _
  $region51: #{gcn_mv_gcn_forward.1} parent=0 // pred_check_branch
    %2773 = sbr.rel (0) target = $region53
  $region52: #{gcn_mv_gcn_forward.1} parent=0 // pred_region
    _
  $region53: #{gcn_mv_gcn_forward.1} parent=0 // pred_fallthru
    _
  // Predicated region
  $region54: #{gcn_mv_gcn_forward.1} parent=0 // pred_check
    _
  $region55: #{gcn_mv_gcn_forward.1} parent=0 // pred_check_branch
    %2775 = sbr.rel (0) target = $region57
  $region56: #{gcn_mv_gcn_forward.1} parent=0 // pred_region
    _
  $region57: #{gcn_mv_gcn_forward.1} parent=0 // pred_fallthru
    _

</llo_original>
